<compile_context>
chip_gen: v5e
topology: v5e:2x2
jax: 0.10.0
libtpu: 0.0.40
codegen_flags: <defaults>
</compile_context>

<pallas_src>
import math
from functools import partial

import jax
import jax.numpy as jnp
from jax import lax
from jax.experimental import pallas as pl
from jax.experimental.pallas import tpu as pltpu


# ------------------------------ tiling / vmem helpers ------------------------------

def _pick_row_tile(C):
    # The (TV, TC) emission block puts TC on the lane axis, so TC must be a multiple of
    # 128 (or C itself).  Prefer <=256 rows (256-wide MXU on v6e/v7x) and >=2 row blocks
    # so both v7x TensorCores get work on the "parallel" grid axis.
    if C > 256 and C % 256 == 0:
        return 256
    if C >= 256 and C % 128 == 0:
        return 128
    return C


def _pick_vocab_tile(Vp):
    # 2048-column tiles keep double-buffered (TV,H)+(TV,TC) blocks comfortably inside
    # v7x's 64 MiB VMEM while staying lane-dense; Vp is already padded to a 128 multiple.
    for tv in (2048, 1024, 512, 256, 128):
        if Vp % tv == 0:
            return tv
    return Vp


def _pick_batch_block(N):
    if N % 8 != 0:
        return N
    for nb in (256, 128, 64, 32, 16, 8):
        if N % nb == 0 and N // nb >= 2:   # >=2 blocks keeps both v7x TCs busy
            return nb
    return N


def _pick_time_block(T):
    for tt in (16, 8, 4, 2):
        if T % tt == 0:
            return tt
    return 1


def _vmem_limit_bytes(est_bytes):
    # Explicit scoped-VMEM limit derived from actual tile bytes (defaults are only
    # 16/32 MiB).  Generous 2x + 4 MiB margin, floored at the default, capped safely
    # below v7x's 64 MiB physical VMEM.
    return int(min(max(2 * est_bytes + (4 << 20), 32 << 20), 56 << 20))


def _pad_vocab(terminal_emb, word2cluster, lane=128):
    V = terminal_emb.shape[0]
    Vp = ((V + lane - 1) // lane) * lane
    w2c = word2cluster.astype(jnp.int32)
    if Vp != V:
        terminal_emb = jnp.pad(terminal_emb, ((0, Vp - V), (0, 0)))
        # cluster id -1 matches no state -> padded words are fully masked out
        w2c = jnp.pad(w2c, (0, Vp - V), constant_values=-1)
    return terminal_emb, w2c


# -------------------------------- in-kernel helpers --------------------------------

def _res_layer(x, wa, ba, wb, bb):
    # ResLayer(x) = x + relu(relu(x @ Wa + ba) @ Wb + bb)
    # MXU operands may be bf16; activations / residual stay f32 (v5e-safe split).
    h = jnp.maximum(jnp.dot(x.astype(wa.dtype), wa,
                            preferred_element_type=jnp.float32) + ba, 0.0)
    h = jnp.maximum(jnp.dot(h.astype(wb.dtype), wb,
                            preferred_element_type=jnp.float32) + bb, 0.0)
    return x.astype(jnp.float32) + h


# ------------- fused parameter kernel: transition + V-tiled masked emission -------------

def _param_kernel(se_ref, pre_ref, s2c_ref, w2c_ref, ne_ref, te_ref,
                  tw1a, tb1a, tw1b, tb1b, tw2a, tb2a, tw2b, tb2b,
                  trans_ref, emit_ref, lse_ref,
                  ex_ref, m_ref, s_ref):
    j = pl.program_id(1)
    neg_inf = jnp.float32(-jnp.inf)
    neg_big = jnp.float32(-1e30)

    @pl.when(j == 0)
    def _():
        # ---- transition rows: softmax(state_emb @ next_state_emb.T) -- V-independent
        tl = lax.dot_general(se_ref[...], ne_ref[...], (((1,), (1,)), ((), ())),
                             preferred_element_type=jnp.float32)          # (TC, C)
        mt = jnp.max(tl, axis=-1, keepdims=True)
        lse_t = mt + jnp.log(jnp.sum(jnp.exp(tl - mt), axis=-1, keepdims=True))
        trans_ref[...] = jnp.exp(tl - lse_t).astype(trans_ref.dtype)
        # ---- terminal-MLP features for this row tile -- V-independent, stash & reuse
        ex = _res_layer(pre_ref[...], tw1a[...], tb1a[...], tw1b[...], tb1b[...])
        ex = _res_layer(ex, tw2a[...], tb2a[...], tw2b[...], tb2b[...])
        ex_ref[...] = ex.astype(ex_ref.dtype)
        # ---- reset the online log-sum-exp accumulators
        m_ref[...] = jnp.full_like(m_ref, neg_big)
        s_ref[...] = jnp.zeros_like(s_ref)

    # ---- emission logits for this (row tile, vocab tile), already word-major (TV, TC)
    el = lax.dot_general(te_ref[...], ex_ref[...], (((1,), (1,)), ((), ())),
                         preferred_element_type=jnp.float32)              # (TV, TC)
    mask = w2c_ref[...] == s2c_ref[...]                                   # (TV,1)==(1,TC)
    logits = jnp.where(mask, el, neg_inf)
    emit_ref[...] = logits.astype(emit_ref.dtype)

    # ---- online per-state (column) log-sum-exp over the vocab axis
    tile_max = jnp.max(logits, axis=0, keepdims=True)                     # (1, TC)
    m_new = jnp.maximum(m_ref[...], tile_max)                             # >= -1e30
    s_ref[...] = (s_ref[...] * jnp.exp(m_ref[...] - m_new)
                  + jnp.sum(jnp.exp(logits - m_new), axis=0, keepdims=True))
    m_ref[...] = m_new

    @pl.when(j == pl.num_programs(1) - 1)
    def _():
        # clamp keeps empty-cluster states at a finite lse so pe(-inf) - lse stays -inf
        lse_ref[...] = jnp.maximum(m_ref[...] + jnp.log(s_ref[...]), neg_big)


def compute_parameters(params, state2cluster, word2cluster, *,
                       compute_dtype=jnp.bfloat16, row_tile=None, vocab_tile=None):
    """Fused transition-softmax + masked-emission kernel.

    Returns:
      trans    : (C, C)  transition probabilities, compute dtype
      emitT    : (Vp, C) UNNORMALIZED masked emission logits, word-major, -inf off
                 cluster, compute dtype (Vp = V padded to a lane multiple)
      emit_lse : (1, C)  per-state emission log-sum-exp (f32).  Emission log-probs are
                 emitT[v, c] - emit_lse[0, c]; the subtraction is folded into the
                 recurrence kernel so the normalized table is never materialized.
    """
    C, H = params["state_emb"].shape
    te_pad, w2c_pad = _pad_vocab(params["terminal_emb"], word2cluster)
    Vp = te_pad.shape[0]
    TC = row_tile if row_tile is not None else _pick_row_tile(C)
    TV = vocab_tile if vocab_tile is not None else _pick_vocab_tile(Vp)
    assert C % TC == 0 and Vp % TV == 0
    GC, GV = C // TC, Vp // TV

    cdt = compute_dtype
    cast = lambda a: a.astype(cdt)
    se, ne = cast(params["state_emb"]), cast(params["next_state_emb"])
    pre, te = cast(params["preterminal_emb"]), cast(te_pad)
    # weight matrices (even slots) in compute dtype, biases (odd slots) stay f32
    tm = tuple(cast(p) if i % 2 == 0 else p
               for i, p in enumerate(params["terminal_mlp"]))
    s2c = state2cluster.reshape(1, C).astype(jnp.int32)
    w2c = w2c_pad.reshape(Vp, 1)

    in_specs = [
        pl.BlockSpec((TC, H), lambda i, j: (i, 0)),    # state_emb row tile
        pl.BlockSpec((TC, H), lambda i, j: (i, 0)),    # preterminal_emb row tile
        pl.BlockSpec((1, TC), lambda i, j: (0, i)),    # state2cluster row tile
        pl.BlockSpec((TV, 1), lambda i, j: (j, 0)),    # word2cluster vocab tile
        pl.BlockSpec((C, H), lambda i, j: (0, 0)),     # next_state_emb (resident)
        pl.BlockSpec((TV, H), lambda i, j: (j, 0)),    # terminal_emb vocab tile (streamed)
    ]
    in_specs += [pl.BlockSpec(p.shape, lambda i, j: (0, 0)) for p in tm]

    out_specs = (
        pl.BlockSpec((TC, C), lambda i, j: (i, 0)),    # transition rows (written at j==0)
        pl.BlockSpec((TV, TC), lambda i, j: (j, i)),   # emission logits, (V, C) layout
        pl.BlockSpec((1, TC), lambda i, j: (0, i)),    # per-state lse (written at last j)
    )
    out_shape = (jax.ShapeDtypeStruct((C, C), cdt),
                 jax.ShapeDtypeStruct((Vp, C), cdt),
                 jax.ShapeDtypeStruct((1, C), jnp.float32))

    it = jnp.dtype(cdt).itemsize
    est = (2 * (2 * TC * H * it + TC * 4 + TV * 4 + C * H * it + TV * H * it
                + 4 * H * H * it + 4 * H * 4
                + TC * C * it + TV * TC * it + TC * 4)
           + TC * H * it + 2 * TC * 4)
    ce = pl.CostEstimate(
        flops=int(2 * C * C * H + 8 * C * H * H + 2 * C * Vp * H),
        transcendentals=int(C * C + 2 * C * Vp),
        bytes_accessed=int(it * (3 * C * H + Vp * H + 4 * H * H + C * C + Vp * C)
                           + 4 * (4 * H + 2 * C + Vp)))

    trans, emitT, emit_lse = pl.pallas_call(
        _param_kernel,
        out_shape=out_shape,
        grid=(GC, GV),
        in_specs=in_specs,
        out_specs=out_specs,
        scratch_shapes=[pltpu.VMEM((TC, H), cdt),           # terminal-MLP features
                        pltpu.VMEM((1, TC), jnp.float32),   # online lse running max
                        pltpu.VMEM((1, TC), jnp.float32)],  # online lse running sum
        compiler_params=pltpu.CompilerParams(
            dimension_semantics=("parallel", "arbitrary"),
            vmem_limit_bytes=_vmem_limit_bytes(est)),
        cost_estimate=ce,
    )(se, pre, s2c, w2c, ne, te, *tm)
    return trans, emitT, emit_lse


# -------------------- start distribution (tiny -> plain JAX, f32) --------------------

def compute_start(params):
    """log_softmax(start_mlp(start_emb) @ next_state_emb.T) with tie_start=True.

    A handful of (1,H)x(H,H) matvecs -> computed once in plain JAX instead of wasting
    MXU rows recomputing it in every parameter-kernel row tile."""
    w0, b0, w1a, b1a, w1b, b1b, w2a, b2a, w2b, b2b = params["start_mlp"]
    x = params["start_emb"] @ w0 + b0                                    # (1, H)
    x = x + jnp.maximum(jnp.maximum(x @ w1a + b1a, 0.0) @ w1b + b1b, 0.0)
    x = x + jnp.maximum(jnp.maximum(x @ w2a + b2a, 0.0) @ w2b + b2b, 0.0)
    logits = x @ params["next_state_emb"].T                              # (1, C)
    m = jnp.max(logits, axis=-1, keepdims=True)
    return logits - (m + jnp.log(jnp.sum(jnp.exp(logits - m), axis=-1, keepdims=True)))


# ---------------------- time-blocked, batched HMM forward recurrence ----------------------

def _hmm_kernel(start_ref, lse_ref, trans_ref, pe_ref, mask_ref,
                ev_ref, la_ref, alpha_ref):
    tb = pl.program_id(1)
    TT, NB, C = pe_ref.shape
    lse = lse_ref[...]                        # (1, C) f32 per-state emission normalizer
    start = start_ref[...]                    # (1, C) f32 log start probs
    trans = trans_ref[...]                    # (C, C) compute-dtype transition probs

    @pl.when(tb == 0)
    def _():
        alpha_ref[...] = jnp.zeros_like(alpha_ref)   # deterministic first-step filler
        ev_ref[...] = jnp.zeros_like(ev_ref)

    alpha = alpha_ref[...]                    # (NB, C) f32 carry (vreg/VMEM resident)
    ev = jnp.zeros((NB, 1), jnp.float32)
    first_block = tb == 0

    # Static unroll: TT <= 16, keeps every ref index static (no dynamic-lane ops) while
    # amortizing the ~0.35us per-grid-step overhead TT-fold.
    for s in range(TT):
        pe = pe_ref[s].astype(jnp.float32) - lse                   # (NB, C) emission logp
        prop = jnp.dot(alpha.astype(trans.dtype), trans,
                       preferred_element_type=jnp.float32)         # (NB,C)x(C,C) on MXU
        alpha_un = jnp.log(prop) + pe                              # log(0) -> -inf, as torch
        if s == 0:
            # the very first step of the sequence uses the start distribution instead
            alpha_un = jnp.where(first_block, start + pe, alpha_un)
        m = jnp.max(alpha_un, axis=-1, keepdims=True)
        ot = m + jnp.log(jnp.sum(jnp.exp(alpha_un - m), axis=-1, keepdims=True))
        alpha = jnp.exp(alpha_un - ot)                             # renormalized alpha
        ev = ev + ot * mask_ref[s]                                 # masked evidence (NB,1)

    alpha_ref[...] = alpha
    ev_ref[...] += ev
    la_ref[...] = jnp.log(alpha)              # only the last time block's value hits HBM


def hmm_forward(log_start, emit_lse, trans, p_emit_tnc, seq_mask):
    """Dense-embedded sparse forward recurrence, time-blocked and batched.

    p_emit_tnc is (T, N, C) unnormalized masked emission logits (-inf outside each
    token's brown-cluster state block); subtracting emit_lse in-kernel makes the dense
    C-state recurrence identical to the module's sparse states-per-word recurrence.
    Padded timesteps still advance alpha (like the torch module) and are only excluded
    from the evidence via seq_mask.
    Returns (per-sequence masked evidence (N,), final dense log-alpha (N, C)).
    """
    T, N, C = p_emit_tnc.shape
    NB = _pick_batch_block(N)
    TT = _pick_time_block(T)
    it = jnp.dtype(trans.dtype).itemsize

    mask_tn1 = seq_mask.T.astype(jnp.float32).reshape(T, N, 1)

    est = (2 * (2 * C * 4 + C * C * it + TT * NB * C * it + TT * NB * 4
                + NB * 4 + NB * C * 4) + NB * C * 4)
    ce = pl.CostEstimate(
        flops=int(2 * T * N * C * C),
        transcendentals=int(2 * T * N * C),
        bytes_accessed=int(it * (C * C + T * N * C) + 4 * (T * N + N * C + N + 2 * C)))

    ev, la = pl.pallas_call(
        _hmm_kernel,
        out_shape=(jax.ShapeDtypeStruct((N, 1), jnp.float32),
                   jax.ShapeDtypeStruct((N, C), jnp.float32)),
        grid=(N // NB, T // TT),
        in_specs=[pl.BlockSpec((1, C), lambda b, t: (0, 0)),           # start (resident)
                  pl.BlockSpec((1, C), lambda b, t: (0, 0)),           # emission lse
                  pl.BlockSpec((C, C), lambda b, t: (0, 0)),           # transition (resident)
                  pl.BlockSpec((TT, NB, C), lambda b, t: (t, b, 0)),   # emission logits block
                  pl.BlockSpec((TT, NB, 1), lambda b, t: (t, b, 0))],  # seq mask block
        out_specs=(pl.BlockSpec((NB, 1), lambda b, t: (b, 0)),         # per-seq evidence
                   pl.BlockSpec((NB, C), lambda b, t: (b, 0))),        # final log alpha
        scratch_shapes=[pltpu.VMEM((NB, C), jnp.float32)],             # alpha carry
        compiler_params=pltpu.CompilerParams(
            dimension_semantics=("parallel", "arbitrary"),
            vmem_limit_bytes=_vmem_limit_bytes(est)),
        cost_estimate=ce,
    )(log_start, emit_lse, trans, p_emit_tnc, mask_tn1)
    return ev[:, 0], la


# --------------------------------------- score ---------------------------------------

def score_sbl_hmm(text, params, word2cluster, state2cluster, seq_mask, *,
                  spw, compute_dtype=jnp.bfloat16):
    """Replicates SblHmmLm.score (eval mode, softmax parameterization, tie_start).

    Set compute_dtype=jnp.float32 for bit-closer parity with the torch reference."""
    trans, emitT, emit_lse = compute_parameters(
        params, state2cluster, word2cluster, compute_dtype=compute_dtype)
    log_start = compute_start(params)                                   # (1, C) f32

    # Per-token emission rows.  emitT is already word-major (V, C) so this is a plain
    # row gather (no transpose materializes) and stays in the compute dtype (half the
    # HBM bytes of an f32 table); normalization by emit_lse happens inside the kernel.
    # TODO(synk): fully fuse this gather into the recurrence (scalar-prefetch text +
    # emission kept in HBM via memory_space=pl.ANY with per-row DMA) to drop the
    # (T, N, C) intermediate entirely.
    p_emit = jnp.take(emitT, text.T, axis=0)                            # (T, N, C)

    ev_per_seq, log_alpha_full = hmm_forward(
        log_start, emit_lse, trans, p_emit, seq_mask)
    evidence = jnp.sum(ev_per_seq)

    # final alpha restricted to the last token's contiguous brown-cluster state block
    # (== the module's sparse alpha.log() of shape (N, states_per_word))
    last_states = (word2cluster[text[:, -1]].astype(jnp.int32)[:, None] * spw
                   + jnp.arange(spw, dtype=jnp.int32)[None, :])         # (N, spw)
    log_alpha = jnp.take_along_axis(log_alpha_full, last_states, axis=1)
    return evidence, log_alpha


# ------------------------------- parameter initialisation -------------------------------

def xavier_uniform(key, shape):
    fan_out, fan_in = shape
    bound = math.sqrt(6.0 / (fan_in + fan_out))
    return jax.random.uniform(key, shape, jnp.float32, -bound, bound)


def linear_params(key, in_dim, out_dim):
    kw, kb = jax.random.split(key)
    w = xavier_uniform(kw, (out_dim, in_dim))                           # torch (out, in)
    bb = 1.0 / math.sqrt(in_dim)
    b = jax.random.uniform(kb, (1, out_dim), jnp.float32, -bb, bb)
    return w.T, b                                                       # kernels use x @ W(in,out)


# ------------------------------------------ main ------------------------------------------

if __name__ == "__main__":
    C, H, V, N, T = 128, 128, 256, 8, 8          # num_classes, hidden, |V|, batch, seq
    num_clusters, spw = 16, 8                    # states_per_word * num_clusters == C
    assert num_clusters * spw == C

    key = jax.random.PRNGKey(0)
    ks = jax.random.split(key, 20)

    params = {
        "start_emb": jax.random.normal(ks[0], (1, H), jnp.float32),
        "state_emb": xavier_uniform(ks[1], (C, H)),
        "next_state_emb": xavier_uniform(ks[2], (C, H)),   # tie_start -> also the start fy
        "preterminal_emb": xavier_uniform(ks[3], (C, H)),
        "terminal_emb": xavier_uniform(ks[4], (V, H)),
    }
    sm = []                                      # start_mlp = Linear + ResLayer + ResLayer
    for i in range(5):
        sm.extend(linear_params(ks[5 + i], H, H))
    params["start_mlp"] = tuple(sm)
    tm = []                                      # terminal_mlp = ResLayer + ResLayer
    for i in range(4):
        tm.extend(linear_params(ks[10 + i], H, H))
    params["terminal_mlp"] = tuple(tm)

    # synthetic brown-cluster style partition (deterministic; no file reads);
    # cluster k owns the contiguous state block [k*spw, (k+1)*spw)
    word2cluster = jnp.arange(V, dtype=jnp.int32) % num_clusters                  # (V,)
    state2cluster = jnp.repeat(jnp.arange(num_clusters, dtype=jnp.int32), spw)    # (C,)

    text = jax.random.randint(ks[14], (N, T), 0, V, dtype=jnp.int32)
    seq_mask = jnp.ones((N, T), dtype=jnp.bool_)

    fn = jax.jit(partial(score_sbl_hmm, spw=spw))
    evidence, log_alpha = fn(text, params, word2cluster, state2cluster, seq_mask)
    jax.block_until_ready((evidence, log_alpha))

    # TODO(synk): training-time Gumbel state-dropout / feature-dropout and the 'smp'
    # random-feature (RFF) parameterization branch are not exercised (eval softmax path).
    print("KERNEL_OK")
</pallas_src>

<mosaic_0001>
module attributes {stable_mosaic.version = 11 : i64} {
  func.func @_param_kernel(%arg0: i32, %arg1: i32, %arg2: memref<128x128xbf16, #tpu.memory_space<vmem>>, %arg3: memref<128x128xbf16, #tpu.memory_space<vmem>>, %arg4: memref<1x128xi32, #tpu.memory_space<vmem>>, %arg5: memref<256x1xi32, #tpu.memory_space<vmem>>, %arg6: memref<128x128xbf16, #tpu.memory_space<vmem>>, %arg7: memref<256x128xbf16, #tpu.memory_space<vmem>>, %arg8: memref<128x128xbf16, #tpu.memory_space<vmem>>, %arg9: memref<1x128xf32, #tpu.memory_space<vmem>>, %arg10: memref<128x128xbf16, #tpu.memory_space<vmem>>, %arg11: memref<1x128xf32, #tpu.memory_space<vmem>>, %arg12: memref<128x128xbf16, #tpu.memory_space<vmem>>, %arg13: memref<1x128xf32, #tpu.memory_space<vmem>>, %arg14: memref<128x128xbf16, #tpu.memory_space<vmem>>, %arg15: memref<1x128xf32, #tpu.memory_space<vmem>>, %arg16: memref<128x128xbf16, #tpu.memory_space<vmem>>, %arg17: memref<256x128xbf16, #tpu.memory_space<vmem>>, %arg18: memref<1x128xf32, #tpu.memory_space<vmem>>, %arg19: memref<128x128xbf16, #tpu.memory_space<vmem>>, %arg20: memref<1x128xf32, #tpu.memory_space<vmem>>, %arg21: memref<1x128xf32, #tpu.memory_space<vmem>>) attributes {dimension_semantics = [#tpu.dimension_semantics<parallel>, #tpu.dimension_semantics<arbitrary>], iteration_bounds = array<i64: 1, 1>, scalar_prefetch = 0 : i64, scratch_operands = 3 : i64, tpu.core_type = #tpu.core_type<tc>, window_params = [{transform_indices = @transform_0, window_bounds = array<i64: 128, 128>}, {transform_indices = @transform_1, window_bounds = array<i64: 128, 128>}, {transform_indices = @transform_2, window_bounds = array<i64: 1, 128>}, {transform_indices = @transform_3, window_bounds = array<i64: 256, 1>}, {pipeline_mode = #tpu.pipeline_mode<synchronous>, transform_indices = @transform_4, window_bounds = array<i64: 128, 128>}, {transform_indices = @transform_5, window_bounds = array<i64: 256, 128>}, {pipeline_mode = #tpu.pipeline_mode<synchronous>, transform_indices = @transform_6, window_bounds = array<i64: 128, 128>}, {pipeline_mode = #tpu.pipeline_mode<synchronous>, transform_indices = @transform_7, window_bounds = array<i64: 1, 128>}, {pipeline_mode = #tpu.pipeline_mode<synchronous>, transform_indices = @transform_8, window_bounds = array<i64: 128, 128>}, {pipeline_mode = #tpu.pipeline_mode<synchronous>, transform_indices = @transform_9, window_bounds = array<i64: 1, 128>}, {pipeline_mode = #tpu.pipeline_mode<synchronous>, transform_indices = @transform_10, window_bounds = array<i64: 128, 128>}, {pipeline_mode = #tpu.pipeline_mode<synchronous>, transform_indices = @transform_11, window_bounds = array<i64: 1, 128>}, {pipeline_mode = #tpu.pipeline_mode<synchronous>, transform_indices = @transform_12, window_bounds = array<i64: 128, 128>}, {pipeline_mode = #tpu.pipeline_mode<synchronous>, transform_indices = @transform_13, window_bounds = array<i64: 1, 128>}, {transform_indices = @transform_14, window_bounds = array<i64: 128, 128>}, {transform_indices = @transform_15, window_bounds = array<i64: 256, 128>}, {transform_indices = @transform_16, window_bounds = array<i64: 1, 128>}]} {
    %c0_i32 = arith.constant 0 : i32
    %0 = arith.cmpi eq, %arg1, %c0_i32 : i32
    %1 = arith.extui %0 : i1 to i32
    %cst = arith.constant -1.000000e+30 : f32
    %c0_i32_0 = arith.constant 0 : i32
    %2 = arith.cmpi ne, %1, %c0_i32_0 : i32
    scf.if %2 {
      %c0_27 = arith.constant 0 : index
      %c0_28 = arith.constant 0 : index
      %35 = vector.load %arg2[%c0_27, %c0_28] : memref<128x128xbf16, #tpu.memory_space<vmem>>, vector<128x128xbf16>
      %c0_29 = arith.constant 0 : index
      %c0_30 = arith.constant 0 : index
      %36 = vector.load %arg6[%c0_29, %c0_30] : memref<128x128xbf16, #tpu.memory_space<vmem>>, vector<128x128xbf16>
      %cst_31 = arith.constant dense<0.000000e+00> : vector<128x128xf32>
      %37 = tpu.matmul %35, %36, %cst_31 {dimension_numbers = #tpu.dot_dimension_numbers<[1], [1], [0], [0], [0, 0, 1, 0], [], []>} : vector<128x128xbf16>, vector<128x128xbf16>, vector<128x128xf32> -> vector<128x128xf32>
      %cst_32 = arith.constant dense<0xFF800000> : vector<128xf32>
      %38 = vector.multi_reduction <maximumf>, %37, %cst_32 [1] : vector<128x128xf32> to vector<128xf32>
      %39 = vector.shape_cast %38 : vector<128xf32> to vector<128x1xf32>
      %40 = vector.broadcast %39 : vector<128x1xf32> to vector<128x128xf32>
      %41 = arith.subf %37, %40 : vector<128x128xf32>
      %42 = math.exp %41 : vector<128x128xf32>
      %cst_33 = arith.constant dense<0.000000e+00> : vector<128xf32>
      %43 = vector.multi_reduction <add>, %42, %cst_33 [1] : vector<128x128xf32> to vector<128xf32>
      %44 = vector.shape_cast %43 : vector<128xf32> to vector<128x1xf32>
      %45 = math.log %44 : vector<128x1xf32>
      %46 = arith.addf %39, %45 : vector<128x1xf32>
      %47 = vector.broadcast %46 : vector<128x1xf32> to vector<128x128xf32>
      %48 = arith.subf %37, %47 : vector<128x128xf32>
      %49 = math.exp %48 : vector<128x128xf32>
      %50 = arith.truncf %49 : vector<128x128xf32> to vector<128x128xbf16>
      %c0_34 = arith.constant 0 : index
      %c0_35 = arith.constant 0 : index
      %51 = vector.load %arg16[%c0_34, %c0_35] : memref<128x128xbf16, #tpu.memory_space<vmem>>, vector<128x128xbf16>
      tpu.vector_store %arg16[%c0_34, %c0_35], %50 {strides = array<i32>} : memref<128x128xbf16, #tpu.memory_space<vmem>>, vector<128x128xbf16>,
      %c0_36 = arith.constant 0 : index
      %c0_37 = arith.constant 0 : index
      %52 = vector.load %arg3[%c0_36, %c0_37] : memref<128x128xbf16, #tpu.memory_space<vmem>>, vector<128x128xbf16>
      %c0_38 = arith.constant 0 : index
      %c0_39 = arith.constant 0 : index
      %53 = vector.load %arg8[%c0_38, %c0_39] : memref<128x128xbf16, #tpu.memory_space<vmem>>, vector<128x128xbf16>
      %c0_40 = arith.constant 0 : index
      %c0_41 = arith.constant 0 : index
      %54 = vector.load %arg9[%c0_40, %c0_41] : memref<1x128xf32, #tpu.memory_space<vmem>>, vector<1x128xf32>
      %c0_42 = arith.constant 0 : index
      %c0_43 = arith.constant 0 : index
      %55 = vector.load %arg10[%c0_42, %c0_43] : memref<128x128xbf16, #tpu.memory_space<vmem>>, vector<128x128xbf16>
      %c0_44 = arith.constant 0 : index
      %c0_45 = arith.constant 0 : index
      %56 = vector.load %arg11[%c0_44, %c0_45] : memref<1x128xf32, #tpu.memory_space<vmem>>, vector<1x128xf32>
      %cst_46 = arith.constant dense<0.000000e+00> : vector<128x128xf32>
      %57 = tpu.matmul %52, %53, %cst_46 {dimension_numbers = #tpu.dot_dimension_numbers<[1], [0], [0], [1], [0, 0, 1, 1], [], []>} : vector<128x128xbf16>, vector<128x128xbf16>, vector<128x128xf32> -> vector<128x128xf32>
      %58 = vector.broadcast %54 : vector<1x128xf32> to vector<128x128xf32>
      %59 = arith.addf %57, %58 : vector<128x128xf32>
      %cst_47 = arith.constant 0.000000e+00 : f32
      %60 = vector.broadcast %cst_47 : f32 to vector<128x128xf32>
      %61 = arith.maximumf %59, %60 : vector<128x128xf32>
      %62 = arith.truncf %61 : vector<128x128xf32> to vector<128x128xbf16>
      %cst_48 = arith.constant dense<0.000000e+00> : vector<128x128xf32>
      %63 = tpu.matmul %62, %55, %cst_48 {dimension_numbers = #tpu.dot_dimension_numbers<[1], [0], [0], [1], [0, 0, 1, 1], [], []>} : vector<128x128xbf16>, vector<128x128xbf16>, vector<128x128xf32> -> vector<128x128xf32>
      %64 = vector.broadcast %56 : vector<1x128xf32> to vector<128x128xf32>
      %65 = arith.addf %63, %64 : vector<128x128xf32>
      %cst_49 = arith.constant 0.000000e+00 : f32
      %66 = vector.broadcast %cst_49 : f32 to vector<128x128xf32>
      %67 = arith.maximumf %65, %66 : vector<128x128xf32>
      %68 = arith.extf %52 : vector<128x128xbf16> to vector<128x128xf32>
      %69 = arith.addf %68, %67 : vector<128x128xf32>
      %c0_50 = arith.constant 0 : index
      %c0_51 = arith.constant 0 : index
      %70 = vector.load %arg12[%c0_50, %c0_51] : memref<128x128xbf16, #tpu.memory_space<vmem>>, vector<128x128xbf16>
      %c0_52 = arith.constant 0 : index
      %c0_53 = arith.constant 0 : index
      %71 = vector.load %arg13[%c0_52, %c0_53] : memref<1x128xf32, #tpu.memory_space<vmem>>, vector<1x128xf32>
      %c0_54 = arith.constant 0 : index
      %c0_55 = arith.constant 0 : index
      %72 = vector.load %arg14[%c0_54, %c0_55] : memref<128x128xbf16, #tpu.memory_space<vmem>>, vector<128x128xbf16>
      %c0_56 = arith.constant 0 : index
      %c0_57 = arith.constant 0 : index
      %73 = vector.load %arg15[%c0_56, %c0_57] : memref<1x128xf32, #tpu.memory_space<vmem>>, vector<1x128xf32>
      %74 = arith.truncf %69 : vector<128x128xf32> to vector<128x128xbf16>
      %cst_58 = arith.constant dense<0.000000e+00> : vector<128x128xf32>
      %75 = tpu.matmul %74, %70, %cst_58 {dimension_numbers = #tpu.dot_dimension_numbers<[1], [0], [0], [1], [0, 0, 1, 1], [], []>} : vector<128x128xbf16>, vector<128x128xbf16>, vector<128x128xf32> -> vector<128x128xf32>
      %76 = vector.broadcast %71 : vector<1x128xf32> to vector<128x128xf32>
      %77 = arith.addf %75, %76 : vector<128x128xf32>
      %cst_59 = arith.constant 0.000000e+00 : f32
      %78 = vector.broadcast %cst_59 : f32 to vector<128x128xf32>
      %79 = arith.maximumf %77, %78 : vector<128x128xf32>
      %80 = arith.truncf %79 : vector<128x128xf32> to vector<128x128xbf16>
      %cst_60 = arith.constant dense<0.000000e+00> : vector<128x128xf32>
      %81 = tpu.matmul %80, %72, %cst_60 {dimension_numbers = #tpu.dot_dimension_numbers<[1], [0], [0], [1], [0, 0, 1, 1], [], []>} : vector<128x128xbf16>, vector<128x128xbf16>, vector<128x128xf32> -> vector<128x128xf32>
      %82 = vector.broadcast %73 : vector<1x128xf32> to vector<128x128xf32>
      %83 = arith.addf %81, %82 : vector<128x128xf32>
      %cst_61 = arith.constant 0.000000e+00 : f32
      %84 = vector.broadcast %cst_61 : f32 to vector<128x128xf32>
      %85 = arith.maximumf %83, %84 : vector<128x128xf32>
      %86 = arith.addf %69, %85 : vector<128x128xf32>
      %87 = arith.truncf %86 : vector<128x128xf32> to vector<128x128xbf16>
      %c0_62 = arith.constant 0 : index
      %c0_63 = arith.constant 0 : index
      %88 = vector.load %arg19[%c0_62, %c0_63] : memref<128x128xbf16, #tpu.memory_space<vmem>>, vector<128x128xbf16>
      tpu.vector_store %arg19[%c0_62, %c0_63], %87 {strides = array<i32>} : memref<128x128xbf16, #tpu.memory_space<vmem>>, vector<128x128xbf16>,
      %89 = vector.broadcast %cst : f32 to vector<1x128xf32>
      %c0_64 = arith.constant 0 : index
      %c0_65 = arith.constant 0 : index
      %90 = vector.load %arg20[%c0_64, %c0_65] : memref<1x128xf32, #tpu.memory_space<vmem>>, vector<1x128xf32>
      tpu.vector_store %arg20[%c0_64, %c0_65], %89 {strides = array<i32>} : memref<1x128xf32, #tpu.memory_space<vmem>>, vector<1x128xf32>,
      %cst_66 = arith.constant 0.000000e+00 : f32
      %91 = vector.broadcast %cst_66 : f32 to vector<1x128xf32>
      %c0_67 = arith.constant 0 : index
      %c0_68 = arith.constant 0 : index
      %92 = vector.load %arg21[%c0_67, %c0_68] : memref<1x128xf32, #tpu.memory_space<vmem>>, vector<1x128xf32>
      tpu.vector_store %arg21[%c0_67, %c0_68], %91 {strides = array<i32>} : memref<1x128xf32, #tpu.memory_space<vmem>>, vector<1x128xf32>,
    } else {
    }
    %c0 = arith.constant 0 : index
    %c0_1 = arith.constant 0 : index
    %3 = vector.load %arg7[%c0, %c0_1] : memref<256x128xbf16, #tpu.memory_space<vmem>>, vector<256x128xbf16>
    %c0_2 = arith.constant 0 : index
    %c0_3 = arith.constant 0 : index
    %4 = vector.load %arg19[%c0_2, %c0_3] : memref<128x128xbf16, #tpu.memory_space<vmem>>, vector<128x128xbf16>
    %cst_4 = arith.constant dense<0.000000e+00> : vector<256x128xf32>
    %5 = tpu.matmul %3, %4, %cst_4 {dimension_numbers = #tpu.dot_dimension_numbers<[1], [1], [0], [0], [0, 0, 1, 0], [], []>} : vector<256x128xbf16>, vector<128x128xbf16>, vector<256x128xf32> -> vector<256x128xf32>
    %c0_5 = arith.constant 0 : index
    %c0_6 = arith.constant 0 : index
    %6 = vector.load %arg5[%c0_5, %c0_6] : memref<256x1xi32, #tpu.memory_space<vmem>>, vector<256x1xi32>
    %c0_7 = arith.constant 0 : index
    %c0_8 = arith.constant 0 : index
    %7 = vector.load %arg4[%c0_7, %c0_8] : memref<1x128xi32, #tpu.memory_space<vmem>>, vector<1x128xi32>
    %8 = vector.broadcast %6 : vector<256x1xi32> to vector<256x128xi32>
    %9 = vector.broadcast %7 : vector<1x128xi32> to vector<256x128xi32>
    %10 = arith.cmpi eq, %8, %9 : vector<256x128xi32>
    %cst_9 = arith.constant 0xFF800000 : f32
    %11 = vector.broadcast %cst_9 : f32 to vector<256x128xf32>
    %12 = arith.select %10, %5, %11 : vector<256x128xi1>, vector<256x128xf32>
    %13 = arith.truncf %12 : vector<256x128xf32> to vector<256x128xbf16>
    %c0_10 = arith.constant 0 : index
    %c0_11 = arith.constant 0 : index
    %14 = vector.load %arg17[%c0_10, %c0_11] : memref<256x128xbf16, #tpu.memory_space<vmem>>, vector<256x128xbf16>
    tpu.vector_store %arg17[%c0_10, %c0_11], %13 {strides = array<i32>} : memref<256x128xbf16, #tpu.memory_space<vmem>>, vector<256x128xbf16>,
    %cst_12 = arith.constant dense<0xFF800000> : vector<128xf32>
    %15 = vector.multi_reduction <maximumf>, %12, %cst_12 [0] : vector<256x128xf32> to vector<128xf32>
    %16 = vector.shape_cast %15 : vector<128xf32> to vector<1x128xf32>
    %c0_13 = arith.constant 0 : index
    %c0_14 = arith.constant 0 : index
    %17 = vector.load %arg20[%c0_13, %c0_14] : memref<1x128xf32, #tpu.memory_space<vmem>>, vector<1x128xf32>
    %18 = arith.maximumf %17, %16 : vector<1x128xf32>
    %c0_15 = arith.constant 0 : index
    %c0_16 = arith.constant 0 : index
    %19 = vector.load %arg21[%c0_15, %c0_16] : memref<1x128xf32, #tpu.memory_space<vmem>>, vector<1x128xf32>
    %c0_17 = arith.constant 0 : index
    %c0_18 = arith.constant 0 : index
    %20 = vector.load %arg20[%c0_17, %c0_18] : memref<1x128xf32, #tpu.memory_space<vmem>>, vector<1x128xf32>
    %21 = arith.subf %20, %18 : vector<1x128xf32>
    %22 = math.exp %21 : vector<1x128xf32>
    %23 = arith.mulf %19, %22 : vector<1x128xf32>
    %24 = vector.broadcast %18 : vector<1x128xf32> to vector<256x128xf32>
    %25 = arith.subf %12, %24 : vector<256x128xf32>
    %26 = math.exp %25 : vector<256x128xf32>
    %cst_19 = arith.constant dense<0.000000e+00> : vector<128xf32>
    %27 = vector.multi_reduction <add>, %26, %cst_19 [0] : vector<256x128xf32> to vector<128xf32>
    %28 = vector.shape_cast %27 : vector<128xf32> to vector<1x128xf32>
    %29 = arith.addf %23, %28 : vector<1x128xf32>
    %c0_20 = arith.constant 0 : index
    %c0_21 = arith.constant 0 : index
    %30 = vector.load %arg21[%c0_20, %c0_21] : memref<1x128xf32, #tpu.memory_space<vmem>>, vector<1x128xf32>
    tpu.vector_store %arg21[%c0_20, %c0_21], %29 {strides = array<i32>} : memref<1x128xf32, #tpu.memory_space<vmem>>, vector<1x128xf32>,
    %c0_22 = arith.constant 0 : index
    %c0_23 = arith.constant 0 : index
    %31 = vector.load %arg20[%c0_22, %c0_23] : memref<1x128xf32, #tpu.memory_space<vmem>>, vector<1x128xf32>
    tpu.vector_store %arg20[%c0_22, %c0_23], %18 {strides = array<i32>} : memref<1x128xf32, #tpu.memory_space<vmem>>, vector<1x128xf32>,
    %c0_i32_24 = arith.constant 0 : i32
    %32 = arith.cmpi eq, %arg1, %c0_i32_24 : i32
    %33 = arith.extui %32 : i1 to i32
    %cst_25 = arith.constant -1.000000e+30 : f32
    %c0_i32_26 = arith.constant 0 : i32
    %34 = arith.cmpi ne, %33, %c0_i32_26 : i32
    scf.if %34 {
      %c0_27 = arith.constant 0 : index
      %c0_28 = arith.constant 0 : index
      %35 = vector.load %arg20[%c0_27, %c0_28] : memref<1x128xf32, #tpu.memory_space<vmem>>, vector<1x128xf32>
      %c0_29 = arith.constant 0 : index
      %c0_30 = arith.constant 0 : index
      %36 = vector.load %arg21[%c0_29, %c0_30] : memref<1x128xf32, #tpu.memory_space<vmem>>, vector<1x128xf32>
      %37 = math.log %36 : vector<1x128xf32>
      %38 = arith.addf %35, %37 : vector<1x128xf32>
      %39 = vector.broadcast %cst_25 : f32 to vector<1x128xf32>
      %40 = arith.maximumf %38, %39 : vector<1x128xf32>
      %c0_31 = arith.constant 0 : index
      %c0_32 = arith.constant 0 : index
      %41 = vector.load %arg18[%c0_31, %c0_32] : memref<1x128xf32, #tpu.memory_space<vmem>>, vector<1x128xf32>
      tpu.vector_store %arg18[%c0_31, %c0_32], %40 {strides = array<i32>} : memref<1x128xf32, #tpu.memory_space<vmem>>, vector<1x128xf32>,
    } else {
    }
    return
  }
  func.func @transform_0(%arg0: i32, %arg1: i32) -> (i32, i32) {
    %c0_i32 = arith.constant 0 : i32
    %c0_i32_0 = arith.constant 0 : i32
    return %arg0, %c0_i32 : i32, i32
  }
  func.func @transform_1(%arg0: i32, %arg1: i32) -> (i32, i32) {
    %c0_i32 = arith.constant 0 : i32
    %c0_i32_0 = arith.constant 0 : i32
    return %arg0, %c0_i32 : i32, i32
  }
  func.func @transform_2(%arg0: i32, %arg1: i32) -> (i32, i32) {
    %c0_i32 = arith.constant 0 : i32
    %c0_i32_0 = arith.constant 0 : i32
    return %c0_i32, %arg0 : i32, i32
  }
  func.func @transform_3(%arg0: i32, %arg1: i32) -> (i32, i32) {
    %c0_i32 = arith.constant 0 : i32
    %c0_i32_0 = arith.constant 0 : i32
    return %arg1, %c0_i32 : i32, i32
  }
  func.func @transform_4(%arg0: i32, %arg1: i32) -> (i32, i32) {
    %c0_i32 = arith.constant 0 : i32
    %c0_i32_0 = arith.constant 0 : i32
    %c0_i32_1 = arith.constant 0 : i32
    return %c0_i32, %c0_i32_0 : i32, i32
  }
  func.func @transform_5(%arg0: i32, %arg1: i32) -> (i32, i32) {
    %c0_i32 = arith.constant 0 : i32
    %c0_i32_0 = arith.constant 0 : i32
    return %arg1, %c0_i32 : i32, i32
  }
  func.func @transform_6(%arg0: i32, %arg1: i32) -> (i32, i32) {
    %c0_i32 = arith.constant 0 : i32
    %c0_i32_0 = arith.constant 0 : i32
    %c0_i32_1 = arith.constant 0 : i32
    return %c0_i32, %c0_i32_0 : i32, i32
  }
  func.func @transform_7(%arg0: i32, %arg1: i32) -> (i32, i32) {
    %c0_i32 = arith.constant 0 : i32
    %c0_i32_0 = arith.constant 0 : i32
    %c0_i32_1 = arith.constant 0 : i32
    return %c0_i32, %c0_i32_0 : i32, i32
  }
  func.func @transform_8(%arg0: i32, %arg1: i32) -> (i32, i32) {
    %c0_i32 = arith.constant 0 : i32
    %c0_i32_0 = arith.constant 0 : i32
    %c0_i32_1 = arith.constant 0 : i32
    return %c0_i32, %c0_i32_0 : i32, i32
  }
  func.func @transform_9(%arg0: i32, %arg1: i32) -> (i32, i32) {
    %c0_i32 = arith.constant 0 : i32
    %c0_i32_0 = arith.constant 0 : i32
    %c0_i32_1 = arith.constant 0 : i32
    return %c0_i32, %c0_i32_0 : i32, i32
  }
  func.func @transform_10(%arg0: i32, %arg1: i32) -> (i32, i32) {
    %c0_i32 = arith.constant 0 : i32
    %c0_i32_0 = arith.constant 0 : i32
    %c0_i32_1 = arith.constant 0 : i32
    return %c0_i32, %c0_i32_0 : i32, i32
  }
  func.func @transform_11(%arg0: i32, %arg1: i32) -> (i32, i32) {
    %c0_i32 = arith.constant 0 : i32
    %c0_i32_0 = arith.constant 0 : i32
    %c0_i32_1 = arith.constant 0 : i32
    return %c0_i32, %c0_i32_0 : i32, i32
  }
  func.func @transform_12(%arg0: i32, %arg1: i32) -> (i32, i32) {
    %c0_i32 = arith.constant 0 : i32
    %c0_i32_0 = arith.constant 0 : i32
    %c0_i32_1 = arith.constant 0 : i32
    return %c0_i32, %c0_i32_0 : i32, i32
  }
  func.func @transform_13(%arg0: i32, %arg1: i32) -> (i32, i32) {
    %c0_i32 = arith.constant 0 : i32
    %c0_i32_0 = arith.constant 0 : i32
    %c0_i32_1 = arith.constant 0 : i32
    return %c0_i32, %c0_i32_0 : i32, i32
  }
  func.func @transform_14(%arg0: i32, %arg1: i32) -> (i32, i32) {
    %c0_i32 = arith.constant 0 : i32
    %c0_i32_0 = arith.constant 0 : i32
    return %arg0, %c0_i32 : i32, i32
  }
  func.func @transform_15(%arg0: i32, %arg1: i32) -> (i32, i32) {
    %c0_i32 = arith.constant 0 : i32
    return %arg1, %arg0 : i32, i32
  }
  func.func @transform_16(%arg0: i32, %arg1: i32) -> (i32, i32) {
    %c0_i32 = arith.constant 0 : i32
    %c0_i32_0 = arith.constant 0 : i32
    return %c0_i32, %arg0 : i32, i32
  }
}

module attributes {stable_mosaic.version = 11 : i64} {
  func.func @_hmm_kernel(%arg0: i32, %arg1: i32, %arg2: memref<1x128xf32, #tpu.memory_space<vmem>>, %arg3: memref<1x128xf32, #tpu.memory_space<vmem>>, %arg4: memref<128x128xbf16, #tpu.memory_space<vmem>>, %arg5: memref<8x8x128xbf16, #tpu.memory_space<vmem>>, %arg6: memref<8x8x1xf32, #tpu.memory_space<vmem>>, %arg7: memref<8x1xf32, #tpu.memory_space<vmem>>, %arg8: memref<8x128xf32, #tpu.memory_space<vmem>>, %arg9: memref<8x128xf32, #tpu.memory_space<vmem>>) attributes {dimension_semantics = [#tpu.dimension_semantics<parallel>, #tpu.dimension_semantics<arbitrary>], iteration_bounds = array<i64: 1, 1>, scalar_prefetch = 0 : i64, scratch_operands = 1 : i64, tpu.core_type = #tpu.core_type<tc>, window_params = [{pipeline_mode = #tpu.pipeline_mode<synchronous>, transform_indices = @transform_0, window_bounds = array<i64: 1, 128>}, {pipeline_mode = #tpu.pipeline_mode<synchronous>, transform_indices = @transform_1, window_bounds = array<i64: 1, 128>}, {pipeline_mode = #tpu.pipeline_mode<synchronous>, transform_indices = @transform_2, window_bounds = array<i64: 128, 128>}, {transform_indices = @transform_3, window_bounds = array<i64: 8, 8, 128>}, {transform_indices = @transform_4, window_bounds = array<i64: 8, 8, 1>}, {transform_indices = @transform_5, window_bounds = array<i64: 8, 1>}, {transform_indices = @transform_6, window_bounds = array<i64: 8, 128>}]} {
    %c0 = arith.constant 0 : index
    %c0_0 = arith.constant 0 : index
    %0 = vector.load %arg3[%c0, %c0_0] : memref<1x128xf32, #tpu.memory_space<vmem>>, vector<1x128xf32>
    %c0_1 = arith.constant 0 : index
    %c0_2 = arith.constant 0 : index
    %1 = vector.load %arg2[%c0_1, %c0_2] : memref<1x128xf32, #tpu.memory_space<vmem>>, vector<1x128xf32>
    %c0_3 = arith.constant 0 : index
    %c0_4 = arith.constant 0 : index
    %2 = vector.load %arg4[%c0_3, %c0_4] : memref<128x128xbf16, #tpu.memory_space<vmem>>, vector<128x128xbf16>
    %c0_i32 = arith.constant 0 : i32
    %3 = arith.cmpi eq, %arg1, %c0_i32 : i32
    %4 = arith.extui %3 : i1 to i32
    %c0_i32_5 = arith.constant 0 : i32
    %5 = arith.cmpi ne, %4, %c0_i32_5 : i32
    scf.if %5 {
      %cst_82 = arith.constant 0.000000e+00 : f32
      %218 = vector.broadcast %cst_82 : f32 to vector<8x128xf32>
      %c0_83 = arith.constant 0 : index
      %c0_84 = arith.constant 0 : index
      %219 = vector.load %arg9[%c0_83, %c0_84] : memref<8x128xf32, #tpu.memory_space<vmem>>, vector<8x128xf32>
      tpu.vector_store %arg9[%c0_83, %c0_84], %218 {strides = array<i32>} : memref<8x128xf32, #tpu.memory_space<vmem>>, vector<8x128xf32>,
      %cst_85 = arith.constant 0.000000e+00 : f32
      %220 = vector.broadcast %cst_85 : f32 to vector<8x1xf32>
      %c0_86 = arith.constant 0 : index
      %c0_87 = arith.constant 0 : index
      %221 = vector.load %arg7[%c0_86, %c0_87] : memref<8x1xf32, #tpu.memory_space<vmem>>, vector<8x1xf32>
      tpu.vector_store %arg7[%c0_86, %c0_87], %220 {strides = array<i32>} : memref<8x1xf32, #tpu.memory_space<vmem>>, vector<8x1xf32>,
    } else {
    }
    %c0_6 = arith.constant 0 : index
    %c0_7 = arith.constant 0 : index
    %6 = vector.load %arg9[%c0_6, %c0_7] : memref<8x128xf32, #tpu.memory_space<vmem>>, vector<8x128xf32>
    %cst = arith.constant 0.000000e+00 : f32
    %7 = vector.broadcast %cst : f32 to vector<8x1xf32>
    %c0_i32_8 = arith.constant 0 : i32
    %8 = arith.cmpi eq, %arg1, %c0_i32_8 : i32
    %c0_9 = arith.constant 0 : index
    %c0_10 = arith.constant 0 : index
    %c0_11 = arith.constant 0 : index
    %9 = vector.load %arg5[%c0_9, %c0_10, %c0_11] : memref<8x8x128xbf16, #tpu.memory_space<vmem>>, vector<1x8x128xbf16>
    %10 = vector.shape_cast %9 : vector<1x8x128xbf16> to vector<8x128xbf16>
    %11 = arith.extf %10 : vector<8x128xbf16> to vector<8x128xf32>
    %12 = vector.broadcast %0 : vector<1x128xf32> to vector<8x128xf32>
    %13 = arith.subf %11, %12 : vector<8x128xf32>
    %14 = arith.truncf %6 : vector<8x128xf32> to vector<8x128xbf16>
    %cst_12 = arith.constant dense<0.000000e+00> : vector<8x128xf32>
    %15 = tpu.matmul %14, %2, %cst_12 {dimension_numbers = #tpu.dot_dimension_numbers<[1], [0], [0], [1], [0, 0, 1, 1], [], []>} : vector<8x128xbf16>, vector<128x128xbf16>, vector<8x128xf32> -> vector<8x128xf32>
    %16 = math.log %15 : vector<8x128xf32>
    %17 = arith.addf %16, %13 : vector<8x128xf32>
    %18 = vector.broadcast %1 : vector<1x128xf32> to vector<8x128xf32>
    %19 = arith.addf %18, %13 : vector<8x128xf32>
    %20 = arith.select %8, %19, %17 : vector<8x128xf32>
    %cst_13 = arith.constant dense<0xFF800000> : vector<8xf32>
    %21 = vector.multi_reduction <maximumf>, %20, %cst_13 [1] : vector<8x128xf32> to vector<8xf32>
    %22 = vector.shape_cast %21 : vector<8xf32> to vector<8x1xf32>
    %23 = vector.broadcast %22 : vector<8x1xf32> to vector<8x128xf32>
    %24 = arith.subf %20, %23 : vector<8x128xf32>
    %25 = math.exp %24 : vector<8x128xf32>
    %cst_14 = arith.constant dense<0.000000e+00> : vector<8xf32>
    %26 = vector.multi_reduction <add>, %25, %cst_14 [1] : vector<8x128xf32> to vector<8xf32>
    %27 = vector.shape_cast %26 : vector<8xf32> to vector<8x1xf32>
    %28 = math.log %27 : vector<8x1xf32>
    %29 = arith.addf %22, %28 : vector<8x1xf32>
    %30 = vector.broadcast %29 : vector<8x1xf32> to vector<8x128xf32>
    %31 = arith.subf %20, %30 : vector<8x128xf32>
    %32 = math.exp %31 : vector<8x128xf32>
    %c0_15 = arith.constant 0 : index
    %c0_16 = arith.constant 0 : index
    %c0_17 = arith.constant 0 : index
    %33 = vector.load %arg6[%c0_15, %c0_16, %c0_17] : memref<8x8x1xf32, #tpu.memory_space<vmem>>, vector<1x8x1xf32>
    %34 = vector.shape_cast %33 : vector<1x8x1xf32> to vector<8x1xf32>
    %35 = arith.mulf %29, %34 : vector<8x1xf32>
    %36 = arith.addf %7, %35 : vector<8x1xf32>
    %c1 = arith.constant 1 : index
    %c0_18 = arith.constant 0 : index
    %c0_19 = arith.constant 0 : index
    %37 = vector.load %arg5[%c1, %c0_18, %c0_19] : memref<8x8x128xbf16, #tpu.memory_space<vmem>>, vector<1x8x128xbf16>
    %38 = vector.shape_cast %37 : vector<1x8x128xbf16> to vector<8x128xbf16>
    %39 = arith.extf %38 : vector<8x128xbf16> to vector<8x128xf32>
    %40 = vector.broadcast %0 : vector<1x128xf32> to vector<8x128xf32>
    %41 = arith.subf %39, %40 : vector<8x128xf32>
    %42 = arith.truncf %32 : vector<8x128xf32> to vector<8x128xbf16>
    %cst_20 = arith.constant dense<0.000000e+00> : vector<8x128xf32>
    %43 = tpu.matmul %42, %2, %cst_20 {dimension_numbers = #tpu.dot_dimension_numbers<[1], [0], [0], [1], [0, 0, 1, 1], [], []>} : vector<8x128xbf16>, vector<128x128xbf16>, vector<8x128xf32> -> vector<8x128xf32>
    %44 = math.log %43 : vector<8x128xf32>
    %45 = arith.addf %44, %41 : vector<8x128xf32>
    %cst_21 = arith.constant dense<0xFF800000> : vector<8xf32>
    %46 = vector.multi_reduction <maximumf>, %45, %cst_21 [1] : vector<8x128xf32> to vector<8xf32>
    %47 = vector.shape_cast %46 : vector<8xf32> to vector<8x1xf32>
    %48 = vector.broadcast %47 : vector<8x1xf32> to vector<8x128xf32>
    %49 = arith.subf %45, %48 : vector<8x128xf32>
    %50 = math.exp %49 : vector<8x128xf32>
    %cst_22 = arith.constant dense<0.000000e+00> : vector<8xf32>
    %51 = vector.multi_reduction <add>, %50, %cst_22 [1] : vector<8x128xf32> to vector<8xf32>
    %52 = vector.shape_cast %51 : vector<8xf32> to vector<8x1xf32>
    %53 = math.log %52 : vector<8x1xf32>
    %54 = arith.addf %47, %53 : vector<8x1xf32>
    %55 = vector.broadcast %54 : vector<8x1xf32> to vector<8x128xf32>
    %56 = arith.subf %45, %55 : vector<8x128xf32>
    %57 = math.exp %56 : vector<8x128xf32>
    %c1_23 = arith.constant 1 : index
    %c0_24 = arith.constant 0 : index
    %c0_25 = arith.constant 0 : index
    %58 = vector.load %arg6[%c1_23, %c0_24, %c0_25] : memref<8x8x1xf32, #tpu.memory_space<vmem>>, vector<1x8x1xf32>
    %59 = vector.shape_cast %58 : vector<1x8x1xf32> to vector<8x1xf32>
    %60 = arith.mulf %54, %59 : vector<8x1xf32>
    %61 = arith.addf %36, %60 : vector<8x1xf32>
    %c2 = arith.constant 2 : index
    %c0_26 = arith.constant 0 : index
    %c0_27 = arith.constant 0 : index
    %62 = vector.load %arg5[%c2, %c0_26, %c0_27] : memref<8x8x128xbf16, #tpu.memory_space<vmem>>, vector<1x8x128xbf16>
    %63 = vector.shape_cast %62 : vector<1x8x128xbf16> to vector<8x128xbf16>
    %64 = arith.extf %63 : vector<8x128xbf16> to vector<8x128xf32>
    %65 = vector.broadcast %0 : vector<1x128xf32> to vector<8x128xf32>
    %66 = arith.subf %64, %65 : vector<8x128xf32>
    %67 = arith.truncf %57 : vector<8x128xf32> to vector<8x128xbf16>
    %cst_28 = arith.constant dense<0.000000e+00> : vector<8x128xf32>
    %68 = tpu.matmul %67, %2, %cst_28 {dimension_numbers = #tpu.dot_dimension_numbers<[1], [0], [0], [1], [0, 0, 1, 1], [], []>} : vector<8x128xbf16>, vector<128x128xbf16>, vector<8x128xf32> -> vector<8x128xf32>
    %69 = math.log %68 : vector<8x128xf32>
    %70 = arith.addf %69, %66 : vector<8x128xf32>
    %cst_29 = arith.constant dense<0xFF800000> : vector<8xf32>
    %71 = vector.multi_reduction <maximumf>, %70, %cst_29 [1] : vector<8x128xf32> to vector<8xf32>
    %72 = vector.shape_cast %71 : vector<8xf32> to vector<8x1xf32>
    %73 = vector.broadcast %72 : vector<8x1xf32> to vector<8x128xf32>
    %74 = arith.subf %70, %73 : vector<8x128xf32>
    %75 = math.exp %74 : vector<8x128xf32>
    %cst_30 = arith.constant dense<0.000000e+00> : vector<8xf32>
    %76 = vector.multi_reduction <add>, %75, %cst_30 [1] : vector<8x128xf32> to vector<8xf32>
    %77 = vector.shape_cast %76 : vector<8xf32> to vector<8x1xf32>
    %78 = math.log %77 : vector<8x1xf32>
    %79 = arith.addf %72, %78 : vector<8x1xf32>
    %80 = vector.broadcast %79 : vector<8x1xf32> to vector<8x128xf32>
    %81 = arith.subf %70, %80 : vector<8x128xf32>
    %82 = math.exp %81 : vector<8x128xf32>
    %c2_31 = arith.constant 2 : index
    %c0_32 = arith.constant 0 : index
    %c0_33 = arith.constant 0 : index
    %83 = vector.load %arg6[%c2_31, %c0_32, %c0_33] : memref<8x8x1xf32, #tpu.memory_space<vmem>>, vector<1x8x1xf32>
    %84 = vector.shape_cast %83 : vector<1x8x1xf32> to vector<8x1xf32>
    %85 = arith.mulf %79, %84 : vector<8x1xf32>
    %86 = arith.addf %61, %85 : vector<8x1xf32>
    %c3 = arith.constant 3 : index
    %c0_34 = arith.constant 0 : index
    %c0_35 = arith.constant 0 : index
    %87 = vector.load %arg5[%c3, %c0_34, %c0_35] : memref<8x8x128xbf16, #tpu.memory_space<vmem>>, vector<1x8x128xbf16>
    %88 = vector.shape_cast %87 : vector<1x8x128xbf16> to vector<8x128xbf16>
    %89 = arith.extf %88 : vector<8x128xbf16> to vector<8x128xf32>
    %90 = vector.broadcast %0 : vector<1x128xf32> to vector<8x128xf32>
    %91 = arith.subf %89, %90 : vector<8x128xf32>
    %92 = arith.truncf %82 : vector<8x128xf32> to vector<8x128xbf16>
    %cst_36 = arith.constant dense<0.000000e+00> : vector<8x128xf32>
    %93 = tpu.matmul %92, %2, %cst_36 {dimension_numbers = #tpu.dot_dimension_numbers<[1], [0], [0], [1], [0, 0, 1, 1], [], []>} : vector<8x128xbf16>, vector<128x128xbf16>, vector<8x128xf32> -> vector<8x128xf32>
    %94 = math.log %93 : vector<8x128xf32>
    %95 = arith.addf %94, %91 : vector<8x128xf32>
    %cst_37 = arith.constant dense<0xFF800000> : vector<8xf32>
    %96 = vector.multi_reduction <maximumf>, %95, %cst_37 [1] : vector<8x128xf32> to vector<8xf32>
    %97 = vector.shape_cast %96 : vector<8xf32> to vector<8x1xf32>
    %98 = vector.broadcast %97 : vector<8x1xf32> to vector<8x128xf32>
    %99 = arith.subf %95, %98 : vector<8x128xf32>
    %100 = math.exp %99 : vector<8x128xf32>
    %cst_38 = arith.constant dense<0.000000e+00> : vector<8xf32>
    %101 = vector.multi_reduction <add>, %100, %cst_38 [1] : vector<8x128xf32> to vector<8xf32>
    %102 = vector.shape_cast %101 : vector<8xf32> to vector<8x1xf32>
    %103 = math.log %102 : vector<8x1xf32>
    %104 = arith.addf %97, %103 : vector<8x1xf32>
    %105 = vector.broadcast %104 : vector<8x1xf32> to vector<8x128xf32>
    %106 = arith.subf %95, %105 : vector<8x128xf32>
    %107 = math.exp %106 : vector<8x128xf32>
    %c3_39 = arith.constant 3 : index
    %c0_40 = arith.constant 0 : index
    %c0_41 = arith.constant 0 : index
    %108 = vector.load %arg6[%c3_39, %c0_40, %c0_41] : memref<8x8x1xf32, #tpu.memory_space<vmem>>, vector<1x8x1xf32>
    %109 = vector.shape_cast %108 : vector<1x8x1xf32> to vector<8x1xf32>
    %110 = arith.mulf %104, %109 : vector<8x1xf32>
    %111 = arith.addf %86, %110 : vector<8x1xf32>
    %c4 = arith.constant 4 : index
    %c0_42 = arith.constant 0 : index
    %c0_43 = arith.constant 0 : index
    %112 = vector.load %arg5[%c4, %c0_42, %c0_43] : memref<8x8x128xbf16, #tpu.memory_space<vmem>>, vector<1x8x128xbf16>
    %113 = vector.shape_cast %112 : vector<1x8x128xbf16> to vector<8x128xbf16>
    %114 = arith.extf %113 : vector<8x128xbf16> to vector<8x128xf32>
    %115 = vector.broadcast %0 : vector<1x128xf32> to vector<8x128xf32>
    %116 = arith.subf %114, %115 : vector<8x128xf32>
    %117 = arith.truncf %107 : vector<8x128xf32> to vector<8x128xbf16>
    %cst_44 = arith.constant dense<0.000000e+00> : vector<8x128xf32>
    %118 = tpu.matmul %117, %2, %cst_44 {dimension_numbers = #tpu.dot_dimension_numbers<[1], [0], [0], [1], [0, 0, 1, 1], [], []>} : vector<8x128xbf16>, vector<128x128xbf16>, vector<8x128xf32> -> vector<8x128xf32>
    %119 = math.log %118 : vector<8x128xf32>
    %120 = arith.addf %119, %116 : vector<8x128xf32>
    %cst_45 = arith.constant dense<0xFF800000> : vector<8xf32>
    %121 = vector.multi_reduction <maximumf>, %120, %cst_45 [1] : vector<8x128xf32> to vector<8xf32>
    %122 = vector.shape_cast %121 : vector<8xf32> to vector<8x1xf32>
    %123 = vector.broadcast %122 : vector<8x1xf32> to vector<8x128xf32>
    %124 = arith.subf %120, %123 : vector<8x128xf32>
    %125 = math.exp %124 : vector<8x128xf32>
    %cst_46 = arith.constant dense<0.000000e+00> : vector<8xf32>
    %126 = vector.multi_reduction <add>, %125, %cst_46 [1] : vector<8x128xf32> to vector<8xf32>
    %127 = vector.shape_cast %126 : vector<8xf32> to vector<8x1xf32>
    %128 = math.log %127 : vector<8x1xf32>
    %129 = arith.addf %122, %128 : vector<8x1xf32>
    %130 = vector.broadcast %129 : vector<8x1xf32> to vector<8x128xf32>
    %131 = arith.subf %120, %130 : vector<8x128xf32>
    %132 = math.exp %131 : vector<8x128xf32>
    %c4_47 = arith.constant 4 : index
    %c0_48 = arith.constant 0 : index
    %c0_49 = arith.constant 0 : index
    %133 = vector.load %arg6[%c4_47, %c0_48, %c0_49] : memref<8x8x1xf32, #tpu.memory_space<vmem>>, vector<1x8x1xf32>
    %134 = vector.shape_cast %133 : vector<1x8x1xf32> to vector<8x1xf32>
    %135 = arith.mulf %129, %134 : vector<8x1xf32>
    %136 = arith.addf %111, %135 : vector<8x1xf32>
    %c5 = arith.constant 5 : index
    %c0_50 = arith.constant 0 : index
    %c0_51 = arith.constant 0 : index
    %137 = vector.load %arg5[%c5, %c0_50, %c0_51] : memref<8x8x128xbf16, #tpu.memory_space<vmem>>, vector<1x8x128xbf16>
    %138 = vector.shape_cast %137 : vector<1x8x128xbf16> to vector<8x128xbf16>
    %139 = arith.extf %138 : vector<8x128xbf16> to vector<8x128xf32>
    %140 = vector.broadcast %0 : vector<1x128xf32> to vector<8x128xf32>
    %141 = arith.subf %139, %140 : vector<8x128xf32>
    %142 = arith.truncf %132 : vector<8x128xf32> to vector<8x128xbf16>
    %cst_52 = arith.constant dense<0.000000e+00> : vector<8x128xf32>
    %143 = tpu.matmul %142, %2, %cst_52 {dimension_numbers = #tpu.dot_dimension_numbers<[1], [0], [0], [1], [0, 0, 1, 1], [], []>} : vector<8x128xbf16>, vector<128x128xbf16>, vector<8x128xf32> -> vector<8x128xf32>
    %144 = math.log %143 : vector<8x128xf32>
    %145 = arith.addf %144, %141 : vector<8x128xf32>
    %cst_53 = arith.constant dense<0xFF800000> : vector<8xf32>
    %146 = vector.multi_reduction <maximumf>, %145, %cst_53 [1] : vector<8x128xf32> to vector<8xf32>
    %147 = vector.shape_cast %146 : vector<8xf32> to vector<8x1xf32>
    %148 = vector.broadcast %147 : vector<8x1xf32> to vector<8x128xf32>
    %149 = arith.subf %145, %148 : vector<8x128xf32>
    %150 = math.exp %149 : vector<8x128xf32>
    %cst_54 = arith.constant dense<0.000000e+00> : vector<8xf32>
    %151 = vector.multi_reduction <add>, %150, %cst_54 [1] : vector<8x128xf32> to vector<8xf32>
    %152 = vector.shape_cast %151 : vector<8xf32> to vector<8x1xf32>
    %153 = math.log %152 : vector<8x1xf32>
    %154 = arith.addf %147, %153 : vector<8x1xf32>
    %155 = vector.broadcast %154 : vector<8x1xf32> to vector<8x128xf32>
    %156 = arith.subf %145, %155 : vector<8x128xf32>
    %157 = math.exp %156 : vector<8x128xf32>
    %c5_55 = arith.constant 5 : index
    %c0_56 = arith.constant 0 : index
    %c0_57 = arith.constant 0 : index
    %158 = vector.load %arg6[%c5_55, %c0_56, %c0_57] : memref<8x8x1xf32, #tpu.memory_space<vmem>>, vector<1x8x1xf32>
    %159 = vector.shape_cast %158 : vector<1x8x1xf32> to vector<8x1xf32>
    %160 = arith.mulf %154, %159 : vector<8x1xf32>
    %161 = arith.addf %136, %160 : vector<8x1xf32>
    %c6 = arith.constant 6 : index
    %c0_58 = arith.constant 0 : index
    %c0_59 = arith.constant 0 : index
    %162 = vector.load %arg5[%c6, %c0_58, %c0_59] : memref<8x8x128xbf16, #tpu.memory_space<vmem>>, vector<1x8x128xbf16>
    %163 = vector.shape_cast %162 : vector<1x8x128xbf16> to vector<8x128xbf16>
    %164 = arith.extf %163 : vector<8x128xbf16> to vector<8x128xf32>
    %165 = vector.broadcast %0 : vector<1x128xf32> to vector<8x128xf32>
    %166 = arith.subf %164, %165 : vector<8x128xf32>
    %167 = arith.truncf %157 : vector<8x128xf32> to vector<8x128xbf16>
    %cst_60 = arith.constant dense<0.000000e+00> : vector<8x128xf32>
    %168 = tpu.matmul %167, %2, %cst_60 {dimension_numbers = #tpu.dot_dimension_numbers<[1], [0], [0], [1], [0, 0, 1, 1], [], []>} : vector<8x128xbf16>, vector<128x128xbf16>, vector<8x128xf32> -> vector<8x128xf32>
    %169 = math.log %168 : vector<8x128xf32>
    %170 = arith.addf %169, %166 : vector<8x128xf32>
    %cst_61 = arith.constant dense<0xFF800000> : vector<8xf32>
    %171 = vector.multi_reduction <maximumf>, %170, %cst_61 [1] : vector<8x128xf32> to vector<8xf32>
    %172 = vector.shape_cast %171 : vector<8xf32> to vector<8x1xf32>
    %173 = vector.broadcast %172 : vector<8x1xf32> to vector<8x128xf32>
    %174 = arith.subf %170, %173 : vector<8x128xf32>
    %175 = math.exp %174 : vector<8x128xf32>
    %cst_62 = arith.constant dense<0.000000e+00> : vector<8xf32>
    %176 = vector.multi_reduction <add>, %175, %cst_62 [1] : vector<8x128xf32> to vector<8xf32>
    %177 = vector.shape_cast %176 : vector<8xf32> to vector<8x1xf32>
    %178 = math.log %177 : vector<8x1xf32>
    %179 = arith.addf %172, %178 : vector<8x1xf32>
    %180 = vector.broadcast %179 : vector<8x1xf32> to vector<8x128xf32>
    %181 = arith.subf %170, %180 : vector<8x128xf32>
    %182 = math.exp %181 : vector<8x128xf32>
    %c6_63 = arith.constant 6 : index
    %c0_64 = arith.constant 0 : index
    %c0_65 = arith.constant 0 : index
    %183 = vector.load %arg6[%c6_63, %c0_64, %c0_65] : memref<8x8x1xf32, #tpu.memory_space<vmem>>, vector<1x8x1xf32>
    %184 = vector.shape_cast %183 : vector<1x8x1xf32> to vector<8x1xf32>
    %185 = arith.mulf %179, %184 : vector<8x1xf32>
    %186 = arith.addf %161, %185 : vector<8x1xf32>
    %c7 = arith.constant 7 : index
    %c0_66 = arith.constant 0 : index
    %c0_67 = arith.constant 0 : index
    %187 = vector.load %arg5[%c7, %c0_66, %c0_67] : memref<8x8x128xbf16, #tpu.memory_space<vmem>>, vector<1x8x128xbf16>
    %188 = vector.shape_cast %187 : vector<1x8x128xbf16> to vector<8x128xbf16>
    %189 = arith.extf %188 : vector<8x128xbf16> to vector<8x128xf32>
    %190 = vector.broadcast %0 : vector<1x128xf32> to vector<8x128xf32>
    %191 = arith.subf %189, %190 : vector<8x128xf32>
    %192 = arith.truncf %182 : vector<8x128xf32> to vector<8x128xbf16>
    %cst_68 = arith.constant dense<0.000000e+00> : vector<8x128xf32>
    %193 = tpu.matmul %192, %2, %cst_68 {dimension_numbers = #tpu.dot_dimension_numbers<[1], [0], [0], [1], [0, 0, 1, 1], [], []>} : vector<8x128xbf16>, vector<128x128xbf16>, vector<8x128xf32> -> vector<8x128xf32>
    %194 = math.log %193 : vector<8x128xf32>
    %195 = arith.addf %194, %191 : vector<8x128xf32>
    %cst_69 = arith.constant dense<0xFF800000> : vector<8xf32>
    %196 = vector.multi_reduction <maximumf>, %195, %cst_69 [1] : vector<8x128xf32> to vector<8xf32>
    %197 = vector.shape_cast %196 : vector<8xf32> to vector<8x1xf32>
    %198 = vector.broadcast %197 : vector<8x1xf32> to vector<8x128xf32>
    %199 = arith.subf %195, %198 : vector<8x128xf32>
    %200 = math.exp %199 : vector<8x128xf32>
    %cst_70 = arith.constant dense<0.000000e+00> : vector<8xf32>
    %201 = vector.multi_reduction <add>, %200, %cst_70 [1] : vector<8x128xf32> to vector<8xf32>
    %202 = vector.shape_cast %201 : vector<8xf32> to vector<8x1xf32>
    %203 = math.log %202 : vector<8x1xf32>
    %204 = arith.addf %197, %203 : vector<8x1xf32>
    %205 = vector.broadcast %204 : vector<8x1xf32> to vector<8x128xf32>
    %206 = arith.subf %195, %205 : vector<8x128xf32>
    %207 = math.exp %206 : vector<8x128xf32>
    %c7_71 = arith.constant 7 : index
    %c0_72 = arith.constant 0 : index
    %c0_73 = arith.constant 0 : index
    %208 = vector.load %arg6[%c7_71, %c0_72, %c0_73] : memref<8x8x1xf32, #tpu.memory_space<vmem>>, vector<1x8x1xf32>
    %209 = vector.shape_cast %208 : vector<1x8x1xf32> to vector<8x1xf32>
    %210 = arith.mulf %204, %209 : vector<8x1xf32>
    %211 = arith.addf %186, %210 : vector<8x1xf32>
    %c0_74 = arith.constant 0 : index
    %c0_75 = arith.constant 0 : index
    %212 = vector.load %arg9[%c0_74, %c0_75] : memref<8x128xf32, #tpu.memory_space<vmem>>, vector<8x128xf32>
    tpu.vector_store %arg9[%c0_74, %c0_75], %207 {strides = array<i32>} : memref<8x128xf32, #tpu.memory_space<vmem>>, vector<8x128xf32>,
    %c0_76 = arith.constant 0 : index
    %c0_77 = arith.constant 0 : index
    %213 = vector.load %arg7[%c0_76, %c0_77] : memref<8x1xf32, #tpu.memory_space<vmem>>, vector<8x1xf32>
    %214 = arith.addf %213, %211 : vector<8x1xf32>
    %c0_78 = arith.constant 0 : index
    %c0_79 = arith.constant 0 : index
    %215 = vector.load %arg7[%c0_78, %c0_79] : memref<8x1xf32, #tpu.memory_space<vmem>>, vector<8x1xf32>
    tpu.vector_store %arg7[%c0_78, %c0_79], %214 {strides = array<i32>} : memref<8x1xf32, #tpu.memory_space<vmem>>, vector<8x1xf32>,
    %216 = math.log %207 : vector<8x128xf32>
    %c0_80 = arith.constant 0 : index
    %c0_81 = arith.constant 0 : index
    %217 = vector.load %arg8[%c0_80, %c0_81] : memref<8x128xf32, #tpu.memory_space<vmem>>, vector<8x128xf32>
    tpu.vector_store %arg8[%c0_80, %c0_81], %216 {strides = array<i32>} : memref<8x128xf32, #tpu.memory_space<vmem>>, vector<8x128xf32>,
    return
  }
  func.func @transform_0(%arg0: i32, %arg1: i32) -> (i32, i32) {
    %c0_i32 = arith.constant 0 : i32
    %c0_i32_0 = arith.constant 0 : i32
    %c0_i32_1 = arith.constant 0 : i32
    return %c0_i32, %c0_i32_0 : i32, i32
  }
  func.func @transform_1(%arg0: i32, %arg1: i32) -> (i32, i32) {
    %c0_i32 = arith.constant 0 : i32
    %c0_i32_0 = arith.constant 0 : i32
    %c0_i32_1 = arith.constant 0 : i32
    return %c0_i32, %c0_i32_0 : i32, i32
  }
  func.func @transform_2(%arg0: i32, %arg1: i32) -> (i32, i32) {
    %c0_i32 = arith.constant 0 : i32
    %c0_i32_0 = arith.constant 0 : i32
    %c0_i32_1 = arith.constant 0 : i32
    return %c0_i32, %c0_i32_0 : i32, i32
  }
  func.func @transform_3(%arg0: i32, %arg1: i32) -> (i32, i32, i32) {
    %c0_i32 = arith.constant 0 : i32
    %c0_i32_0 = arith.constant 0 : i32
    return %arg1, %arg0, %c0_i32 : i32, i32, i32
  }
  func.func @transform_4(%arg0: i32, %arg1: i32) -> (i32, i32, i32) {
    %c0_i32 = arith.constant 0 : i32
    %c0_i32_0 = arith.constant 0 : i32
    return %arg1, %arg0, %c0_i32 : i32, i32, i32
  }
  func.func @transform_5(%arg0: i32, %arg1: i32) -> (i32, i32) {
    %c0_i32 = arith.constant 0 : i32
    %c0_i32_0 = arith.constant 0 : i32
    return %arg0, %c0_i32 : i32, i32
  }
  func.func @transform_6(%arg0: i32, %arg1: i32) -> (i32, i32) {
    %c0_i32 = arith.constant 0 : i32
    %c0_i32_0 = arith.constant 0 : i32
    return %arg0, %c0_i32 : i32, i32
  }
}

</mosaic_0001>

<llo_original>
// kernel: score_sbl_hmm.3
$region0: #{score_sbl_hmm.3}
  #allocation0 [shape = 'u32[]', space=smem, size = 0x4, offset = 0x4, fixed_abs, tag = 'smem constant byte address 0x4 - core index']
  #allocation1 [shape = 'u32[72,128]{1,0:T(1,128)}', space=vmem, size = 0x9000, scoped, tag = 'internal scratch']
  #allocation2 [shape = 'f32[8,128]{1,0:T(8,128)}', space=vmem, size = 0x1000, scoped, tag = 'scratch operand']
  %s0 = inlined_call_operand.vmem [shape: f32[1,128], index: 0, kind: input, shape index: {}]
  %s1 = inlined_call_operand.vmem [shape: f32[1,128], index: 1, kind: input, shape index: {}]
  %s2 = inlined_call_operand.vmem [shape: bf16[128,128], index: 2, kind: input, shape index: {}]
  %s3 = inlined_call_operand.vmem [shape: bf16[8,8,128], index: 3, kind: input, shape index: {}]
  %s4 = inlined_call_operand.vmem [shape: f32[8,8,1], index: 4, kind: input, shape index: {}]
  %s5 = inlined_call_operand.vmem [shape: f32[8,1], index: 5, kind: output, shape index: {0}]
  %s6 = inlined_call_operand.vmem [shape: f32[8,128], index: 6, kind: output, shape index: {1}]
  %7 = xla_tuple %s5, %s6
  %s8 = sld [smem:[#allocation0]]
  $region42: #{score_sbl_hmm.3} parent=0
    _
  %s10 = ssub.s32 1, %s8
  %s11 = scalar_select 0, %s10, %s8
  // Predicated region
  $region2: #{score_sbl_hmm.3} parent=0 // pred_check
    _
  $region3: #{score_sbl_hmm.3} parent=0 // pred_check_branch
    %13 = sbr.rel (0) target = $region5
  $region4: #{score_sbl_hmm.3} parent=0 // pred_region
    _
  $region5: #{score_sbl_hmm.3} parent=0 // pred_fallthru
    _
  // Predicated region
  $region6: #{score_sbl_hmm.3} parent=0 // pred_check
    _
  $region7: #{score_sbl_hmm.3} parent=0 // pred_check_branch
    %15 = sbr.rel (0) target = $region9
  $region8: #{score_sbl_hmm.3} parent=0 // pred_region
    _
  $region9: #{score_sbl_hmm.3} parent=0 // pred_fallthru
    _
  // Predicated region
  $region10: #{score_sbl_hmm.3} parent=0 // pred_check
    _
  $region11: #{score_sbl_hmm.3} parent=0 // pred_check_branch
    %17 = sbr.rel (0) target = $region13
  $region12: #{score_sbl_hmm.3} parent=0 // pred_region
    _
  $region13: #{score_sbl_hmm.3} parent=0 // pred_fallthru
    _
  // Predicated region
  $region14: #{score_sbl_hmm.3} parent=0 // pred_check
    _
  $region15: #{score_sbl_hmm.3} parent=0 // pred_check_branch
    %19 = sbr.rel (0) target = $region17
  $region16: #{score_sbl_hmm.3} parent=0 // pred_region
    _
  $region17: #{score_sbl_hmm.3} parent=0 // pred_fallthru
    _
  // Predicated region
  $region18: #{score_sbl_hmm.3} parent=0 // pred_check
    _
  $region19: #{score_sbl_hmm.3} parent=0 // pred_check_branch
    %21 = sbr.rel (0) target = $region21
  $region20: #{score_sbl_hmm.3} parent=0 // pred_region
    _
  $region21: #{score_sbl_hmm.3} parent=0 // pred_fallthru
    _
  %v22 = vld [vmem:[%s1] sm:$0x1]
  %v23 = vld [vmem:[%s0] sm:$0x1]
  %v24 = vld [vmem:[%s2] sm:$0xf]
  %v25 = vld [vmem:[%s2 + $0x4] sm:$0xf]
  %v26 = vld [vmem:[%s2 + $0x8] sm:$0xf]
  %v27 = vld [vmem:[%s2 + $0xc] sm:$0xf]
  %v28 = vld [vmem:[%s2 + $0x10] sm:$0xf]
  %v29 = vld [vmem:[%s2 + $0x14] sm:$0xf]
  %v30 = vld [vmem:[%s2 + $0x18] sm:$0xf]
  %v31 = vld [vmem:[%s2 + $0x1c] sm:$0xf]
  %v32 = vld [vmem:[%s2 + $0x20] sm:$0xf]
  %v33 = vld [vmem:[%s2 + $0x24] sm:$0xf]
  %v34 = vld [vmem:[%s2 + $0x28] sm:$0xf]
  %v35 = vld [vmem:[%s2 + $0x2c] sm:$0xf]
  %v36 = vld [vmem:[%s2 + $0x30] sm:$0xf]
  %v37 = vld [vmem:[%s2 + $0x34] sm:$0xf]
  %v38 = vld [vmem:[%s2 + $0x38] sm:$0xf]
  %v39 = vld [vmem:[%s2 + $0x3c] sm:$0xf]
  %p40 = scmp.eq.s32.totalorder 0, 0
  // Predicated region
  $region22: #{score_sbl_hmm.3} parent=0 // pred_check
    %p41 = pneg %p40
  $region23: #{score_sbl_hmm.3} parent=0 // pred_check_branch
    %43 = sbr.rel (%p41) target = $region25
  $region24: #{score_sbl_hmm.3} parent=0 // pred_region
    %44 = vst [vmem:[#allocation2] sm:$0xff] 0.0
    %vm45 = vcmask 7168
    %46 = vst.msk [vmem:[%s5] sm:$0xff] %vm45, 0.0
  $region25: #{score_sbl_hmm.3} parent=0 // pred_fallthru
    _
  %v47 = vld [vmem:[#allocation2] sm:$0xff]
  %v48 = vld [vmem:[%s3] sm:$0xf]
  %v49 = vunpack.c.l.bf16 %v48
  %v51 = vperm.slane %v22, 0
  %v53 = vsub.f32 %v49, %v51
  %v54 = vpack.c.bf16 %v47, %v47
  %v71 = vunpack.c.l.b16 %v24
  %v72 = vunpack.c.l.b16 %v25
  %v73 = vunpack.c.l.b16 %v26
  %v74 = vunpack.c.l.b16 %v27
  %v75 = vunpack.c.l.b16 %v28
  %v76 = vunpack.c.l.b16 %v29
  %v77 = vunpack.c.l.b16 %v30
  %v78 = vunpack.c.l.b16 %v31
  %v79 = vunpack.c.l.b16 %v32
  %v80 = vunpack.c.l.b16 %v33
  %v81 = vunpack.c.l.b16 %v34
  %v82 = vunpack.c.l.b16 %v35
  %v83 = vunpack.c.l.b16 %v36
  %v84 = vunpack.c.l.b16 %v37
  %v85 = vunpack.c.l.b16 %v38
  %v86 = vunpack.c.l.b16 %v39
  %v87 = vpack.c.b16 %v72, %v71
  %v88 = vpack.c.b16 %v74, %v73
  %v89 = vpack.c.b16 %v76, %v75
  %v90 = vpack.c.b16 %v78, %v77
  %v91 = vpack.c.b16 %v80, %v79
  %v92 = vpack.c.b16 %v82, %v81
  %v93 = vpack.c.b16 %v84, %v83
  %v94 = vpack.c.b16 %v86, %v85
  %103 = vmatpush.bf16.msra.mxu0 %v94
  %104 = vmatpush.bf16.msra.mxu0 %v93
  %105 = vmatpush.bf16.msra.mxu0 %v92
  %106 = vmatpush.bf16.msra.mxu0 %v91
  %107 = vmatpush.bf16.msra.mxu0 %v90
  %108 = vmatpush.bf16.msra.mxu0 %v89
  %109 = vmatpush.bf16.msra.mxu0 %v88
  %110 = vmatpush.bf16.msra.mxu0 %v87
  %111 = vmatmul.bf16.gmra.mxu0 %v54
  %v112 = vpop.f32.mrf.mxu0
  %v113 = vadd.f32 0.0, %v112
  %v114 = vpop.f32.mrf.mxu0
  %115 = vdwg.mxu0
  %v116 = vlog2.pop %v113
  %v117 = vmul.f32 %v116, 0.6931472
  %v118 = vadd.f32 %v117, %v53
  %v120 = vperm.slane %v23, 0
  %v122 = vadd.f32 %v120, %v53
  %s123 = scalar_select %p40, 1, 0
  %v124 = vstv %s123
  %vm125 = vcmp.eq.s32.totalorder %v124, 1
  %v126 = vsel %vm125, %v122, %v118
  %127 = vmax.xlane.f32.xlu0 %v126
  %v128 = vpop.xlane.xlu0 %127
  %v129 = vsub.f32 %v126, %v128
  %v130 = vmul.f32 %v129, 1.442695
  %v131 = vpow.pop %v130
  %132 = vadd.xlane.f32.xlu0 %v131
  %v133 = vpop.xlane.xlu0 %132
  %v134 = vlog2.pop %v133
  %v135 = vmul.f32 %v134, 0.6931472
  %v136 = vadd.f32 %v128, %v135
  %v137 = vsub.f32 %v126, %v136
  %v138 = vmul.f32 %v137, 1.442695
  %v139 = vpow.pop %v138
  %v140 = vld [vmem:[%s4] sm:$0xff]
  %v141 = vmul.f32 %v136, %v140
  %v142 = vadd.f32 %v141, 0.0
  %s143 = scalar_lea.vmem %s3, 4
  %v144 = vld [vmem:[%s143] sm:$0xf]
  %v145 = vunpack.c.l.bf16 %v144
  %v146 = vsub.f32 %v145, %v51
  %v147 = vpack.c.bf16 %v139, %v139
  %148 = vmatpush.bf16.msra.mxu0 %v94
  %149 = vmatpush.bf16.msra.mxu0 %v93
  %150 = vmatpush.bf16.msra.mxu0 %v92
  %151 = vmatpush.bf16.msra.mxu0 %v91
  %152 = vmatpush.bf16.msra.mxu0 %v90
  %153 = vmatpush.bf16.msra.mxu0 %v89
  %154 = vmatpush.bf16.msra.mxu0 %v88
  %155 = vmatpush.bf16.msra.mxu0 %v87
  %156 = vmatmul.bf16.gmra.mxu0 %v147
  %v157 = vpop.f32.mrf.mxu0
  %v158 = vadd.f32 0.0, %v157
  %v159 = vpop.f32.mrf.mxu0
  %160 = vdwg.mxu0
  %v161 = vlog2.pop %v158
  %v162 = vmul.f32 %v161, 0.6931472
  %v163 = vadd.f32 %v162, %v146
  %164 = vmax.xlane.f32.xlu0 %v163
  %v165 = vpop.xlane.xlu0 %164
  %v166 = vsub.f32 %v163, %v165
  %v167 = vmul.f32 %v166, 1.442695
  %v168 = vpow.pop %v167
  %169 = vadd.xlane.f32.xlu0 %v168
  %v170 = vpop.xlane.xlu0 %169
  %v171 = vlog2.pop %v170
  %v172 = vmul.f32 %v171, 0.6931472
  %v173 = vadd.f32 %v165, %v172
  %v174 = vsub.f32 %v163, %v173
  %v175 = vmul.f32 %v174, 1.442695
  %v176 = vpow.pop %v175
  %s177 = scalar_lea.vmem %s4, 8
  %v178 = vld [vmem:[%s177] sm:$0xff]
  %v179 = vmul.f32 %v173, %v178
  %v180 = vadd.f32 %v142, %v179
  %s181 = scalar_lea.vmem %s3, 8
  %v182 = vld [vmem:[%s181] sm:$0xf]
  %v183 = vunpack.c.l.bf16 %v182
  %v184 = vsub.f32 %v183, %v51
  %v185 = vpack.c.bf16 %v176, %v176
  %186 = vmatpush.bf16.msra.mxu0 %v94
  %187 = vmatpush.bf16.msra.mxu0 %v93
  %188 = vmatpush.bf16.msra.mxu0 %v92
  %189 = vmatpush.bf16.msra.mxu0 %v91
  %190 = vmatpush.bf16.msra.mxu0 %v90
  %191 = vmatpush.bf16.msra.mxu0 %v89
  %192 = vmatpush.bf16.msra.mxu0 %v88
  %193 = vmatpush.bf16.msra.mxu0 %v87
  %194 = vmatmul.bf16.gmra.mxu0 %v185
  %v195 = vpop.f32.mrf.mxu0
  %v196 = vadd.f32 0.0, %v195
  %v197 = vpop.f32.mrf.mxu0
  %198 = vdwg.mxu0
  %v199 = vlog2.pop %v196
  %v200 = vmul.f32 %v199, 0.6931472
  %v201 = vadd.f32 %v200, %v184
  %202 = vmax.xlane.f32.xlu0 %v201
  %v203 = vpop.xlane.xlu0 %202
  %v204 = vsub.f32 %v201, %v203
  %v205 = vmul.f32 %v204, 1.442695
  %v206 = vpow.pop %v205
  %207 = vadd.xlane.f32.xlu0 %v206
  %v208 = vpop.xlane.xlu0 %207
  %v209 = vlog2.pop %v208
  %v210 = vmul.f32 %v209, 0.6931472
  %v211 = vadd.f32 %v203, %v210
  %v212 = vsub.f32 %v201, %v211
  %v213 = vmul.f32 %v212, 1.442695
  %v214 = vpow.pop %v213
  %s215 = scalar_lea.vmem %s4, 16
  %v216 = vld [vmem:[%s215] sm:$0xff]
  %v217 = vmul.f32 %v211, %v216
  %v218 = vadd.f32 %v180, %v217
  %s219 = scalar_lea.vmem %s3, 12
  %v220 = vld [vmem:[%s219] sm:$0xf]
  %v221 = vunpack.c.l.bf16 %v220
  %v222 = vsub.f32 %v221, %v51
  %v223 = vpack.c.bf16 %v214, %v214
  %224 = vmatpush.bf16.msra.mxu0 %v94
  %225 = vmatpush.bf16.msra.mxu0 %v93
  %226 = vmatpush.bf16.msra.mxu0 %v92
  %227 = vmatpush.bf16.msra.mxu0 %v91
  %228 = vmatpush.bf16.msra.mxu0 %v90
  %229 = vmatpush.bf16.msra.mxu0 %v89
  %230 = vmatpush.bf16.msra.mxu0 %v88
  %231 = vmatpush.bf16.msra.mxu0 %v87
  %232 = vmatmul.bf16.gmra.mxu0 %v223
  %v233 = vpop.f32.mrf.mxu0
  %v234 = vadd.f32 0.0, %v233
  %v235 = vpop.f32.mrf.mxu0
  %236 = vdwg.mxu0
  %v237 = vlog2.pop %v234
  %v238 = vmul.f32 %v237, 0.6931472
  %v239 = vadd.f32 %v238, %v222
  %240 = vmax.xlane.f32.xlu0 %v239
  %v241 = vpop.xlane.xlu0 %240
  %v242 = vsub.f32 %v239, %v241
  %v243 = vmul.f32 %v242, 1.442695
  %v244 = vpow.pop %v243
  %245 = vadd.xlane.f32.xlu0 %v244
  %v246 = vpop.xlane.xlu0 %245
  %v247 = vlog2.pop %v246
  %v248 = vmul.f32 %v247, 0.6931472
  %v249 = vadd.f32 %v241, %v248
  %v250 = vsub.f32 %v239, %v249
  %v251 = vmul.f32 %v250, 1.442695
  %v252 = vpow.pop %v251
  %s253 = scalar_lea.vmem %s4, 24
  %v254 = vld [vmem:[%s253] sm:$0xff]
  %v255 = vmul.f32 %v249, %v254
  %v256 = vadd.f32 %v218, %v255
  %s257 = scalar_lea.vmem %s3, 16
  %v258 = vld [vmem:[%s257] sm:$0xf]
  %v259 = vunpack.c.l.bf16 %v258
  %v260 = vsub.f32 %v259, %v51
  %v261 = vpack.c.bf16 %v252, %v252
  %262 = vmatpush.bf16.msra.mxu0 %v94
  %263 = vmatpush.bf16.msra.mxu0 %v93
  %264 = vmatpush.bf16.msra.mxu0 %v92
  %265 = vmatpush.bf16.msra.mxu0 %v91
  %266 = vmatpush.bf16.msra.mxu0 %v90
  %267 = vmatpush.bf16.msra.mxu0 %v89
  %268 = vmatpush.bf16.msra.mxu0 %v88
  %269 = vmatpush.bf16.msra.mxu0 %v87
  %270 = vmatmul.bf16.gmra.mxu0 %v261
  %v271 = vpop.f32.mrf.mxu0
  %v272 = vadd.f32 0.0, %v271
  %v273 = vpop.f32.mrf.mxu0
  %274 = vdwg.mxu0
  %v275 = vlog2.pop %v272
  %v276 = vmul.f32 %v275, 0.6931472
  %v277 = vadd.f32 %v276, %v260
  %278 = vmax.xlane.f32.xlu0 %v277
  %v279 = vpop.xlane.xlu0 %278
  %v280 = vsub.f32 %v277, %v279
  %v281 = vmul.f32 %v280, 1.442695
  %v282 = vpow.pop %v281
  %283 = vadd.xlane.f32.xlu0 %v282
  %v284 = vpop.xlane.xlu0 %283
  %v285 = vlog2.pop %v284
  %v286 = vmul.f32 %v285, 0.6931472
  %v287 = vadd.f32 %v279, %v286
  %v288 = vsub.f32 %v277, %v287
  %v289 = vmul.f32 %v288, 1.442695
  %v290 = vpow.pop %v289
  %s291 = scalar_lea.vmem %s4, 32
  %v292 = vld [vmem:[%s291] sm:$0xff]
  %v293 = vmul.f32 %v287, %v292
  %v294 = vadd.f32 %v256, %v293
  %s295 = scalar_lea.vmem %s3, 20
  %v296 = vld [vmem:[%s295] sm:$0xf]
  %v297 = vunpack.c.l.bf16 %v296
  %v298 = vsub.f32 %v297, %v51
  %v299 = vpack.c.bf16 %v290, %v290
  %300 = vmatpush.bf16.msra.mxu0 %v94
  %301 = vmatpush.bf16.msra.mxu0 %v93
  %302 = vmatpush.bf16.msra.mxu0 %v92
  %303 = vmatpush.bf16.msra.mxu0 %v91
  %304 = vmatpush.bf16.msra.mxu0 %v90
  %305 = vmatpush.bf16.msra.mxu0 %v89
  %306 = vmatpush.bf16.msra.mxu0 %v88
  %307 = vmatpush.bf16.msra.mxu0 %v87
  %308 = vmatmul.bf16.gmra.mxu0 %v299
  %v309 = vpop.f32.mrf.mxu0
  %v310 = vadd.f32 0.0, %v309
  %v311 = vpop.f32.mrf.mxu0
  %312 = vdwg.mxu0
  %v313 = vlog2.pop %v310
  %v314 = vmul.f32 %v313, 0.6931472
  %v315 = vadd.f32 %v314, %v298
  %316 = vmax.xlane.f32.xlu0 %v315
  %v317 = vpop.xlane.xlu0 %316
  %v318 = vsub.f32 %v315, %v317
  %v319 = vmul.f32 %v318, 1.442695
  %v320 = vpow.pop %v319
  %321 = vadd.xlane.f32.xlu0 %v320
  %v322 = vpop.xlane.xlu0 %321
  %v323 = vlog2.pop %v322
  %v324 = vmul.f32 %v323, 0.6931472
  %v325 = vadd.f32 %v317, %v324
  %v326 = vsub.f32 %v315, %v325
  %v327 = vmul.f32 %v326, 1.442695
  %v328 = vpow.pop %v327
  %s329 = scalar_lea.vmem %s4, 40
  %v330 = vld [vmem:[%s329] sm:$0xff]
  %v331 = vmul.f32 %v325, %v330
  %v332 = vadd.f32 %v294, %v331
  %s333 = scalar_lea.vmem %s3, 24
  %v334 = vld [vmem:[%s333] sm:$0xf]
  %v335 = vunpack.c.l.bf16 %v334
  %v336 = vsub.f32 %v335, %v51
  %v337 = vpack.c.bf16 %v328, %v328
  %338 = vmatpush.bf16.msra.mxu0 %v94
  %339 = vmatpush.bf16.msra.mxu0 %v93
  %340 = vmatpush.bf16.msra.mxu0 %v92
  %341 = vmatpush.bf16.msra.mxu0 %v91
  %342 = vmatpush.bf16.msra.mxu0 %v90
  %343 = vmatpush.bf16.msra.mxu0 %v89
  %344 = vmatpush.bf16.msra.mxu0 %v88
  %345 = vmatpush.bf16.msra.mxu0 %v87
  %346 = vmatmul.bf16.gmra.mxu0 %v337
  %v347 = vpop.f32.mrf.mxu0
  %v348 = vadd.f32 0.0, %v347
  %v349 = vpop.f32.mrf.mxu0
  %350 = vdwg.mxu0
  %v351 = vlog2.pop %v348
  %v352 = vmul.f32 %v351, 0.6931472
  %v353 = vadd.f32 %v352, %v336
  %354 = vmax.xlane.f32.xlu0 %v353
  %v355 = vpop.xlane.xlu0 %354
  %v356 = vsub.f32 %v353, %v355
  %v357 = vmul.f32 %v356, 1.442695
  %v358 = vpow.pop %v357
  %359 = vadd.xlane.f32.xlu0 %v358
  %v360 = vpop.xlane.xlu0 %359
  %v361 = vlog2.pop %v360
  %v362 = vmul.f32 %v361, 0.6931472
  %v363 = vadd.f32 %v355, %v362
  %v364 = vsub.f32 %v353, %v363
  %v365 = vmul.f32 %v364, 1.442695
  %v366 = vpow.pop %v365
  %s367 = scalar_lea.vmem %s4, 48
  %v368 = vld [vmem:[%s367] sm:$0xff]
  %v369 = vmul.f32 %v363, %v368
  %v370 = vadd.f32 %v332, %v369
  %s371 = scalar_lea.vmem %s3, 28
  %v372 = vld [vmem:[%s371] sm:$0xf]
  %v373 = vunpack.c.l.bf16 %v372
  %v374 = vsub.f32 %v373, %v51
  %v375 = vpack.c.bf16 %v366, %v366
  %376 = vmatpush.bf16.msra.mxu0 %v94
  %377 = vmatpush.bf16.msra.mxu0 %v93
  %378 = vmatpush.bf16.msra.mxu0 %v92
  %379 = vmatpush.bf16.msra.mxu0 %v91
  %380 = vmatpush.bf16.msra.mxu0 %v90
  %381 = vmatpush.bf16.msra.mxu0 %v89
  %382 = vmatpush.bf16.msra.mxu0 %v88
  %383 = vmatpush.bf16.msra.mxu0 %v87
  %384 = vmatmul.bf16.gmra.mxu0 %v375
  %v385 = vpop.f32.mrf.mxu0
  %v386 = vadd.f32 0.0, %v385
  %v387 = vpop.f32.mrf.mxu0
  %388 = vdwg.mxu0
  %v389 = vlog2.pop %v386
  %v390 = vmul.f32 %v389, 0.6931472
  %v391 = vadd.f32 %v390, %v374
  %392 = vmax.xlane.f32.xlu0 %v391
  %v393 = vpop.xlane.xlu0 %392
  %v394 = vsub.f32 %v391, %v393
  %v395 = vmul.f32 %v394, 1.442695
  %v396 = vpow.pop %v395
  %397 = vadd.xlane.f32.xlu0 %v396
  %v398 = vpop.xlane.xlu0 %397
  %v399 = vlog2.pop %v398
  %v400 = vmul.f32 %v399, 0.6931472
  %v401 = vadd.f32 %v393, %v400
  %v402 = vsub.f32 %v391, %v401
  %v403 = vmul.f32 %v402, 1.442695
  %v404 = vpow.pop %v403
  %s405 = scalar_lea.vmem %s4, 56
  %v406 = vld [vmem:[%s405] sm:$0xff]
  %v407 = vmul.f32 %v401, %v406
  %v408 = vadd.f32 %v370, %v407
  %409 = vst [vmem:[#allocation2] sm:$0xff] %v404
  %v410 = vld [vmem:[%s5] sm:$0xff]
  %v411 = vadd.f32 %v410, %v408
  %vm412 = vcmask 7168
  %413 = vst.msk [vmem:[%s5] sm:$0xff] %vm412, %v411
  %v414 = vlog2.pop %v404
  %v415 = vmul.f32 %v414, 0.6931472
  %416 = vst [vmem:[%s6] sm:$0xff] %v415
  // Predicated region
  $region26: #{score_sbl_hmm.3} parent=0 // pred_check
    _
  $region27: #{score_sbl_hmm.3} parent=0 // pred_check_branch
    %418 = sbr.rel (0) target = $region29
  $region28: #{score_sbl_hmm.3} parent=0 // pred_region
    _
  $region29: #{score_sbl_hmm.3} parent=0 // pred_fallthru
    _
  // Predicated region
  $region30: #{score_sbl_hmm.3} parent=0 // pred_check
    _
  $region31: #{score_sbl_hmm.3} parent=0 // pred_check_branch
    %420 = sbr.rel (0) target = $region33
  $region32: #{score_sbl_hmm.3} parent=0 // pred_region
    _
  $region33: #{score_sbl_hmm.3} parent=0 // pred_fallthru
    _
  // Predicated region
  $region34: #{score_sbl_hmm.3} parent=0 // pred_check
    _
  $region35: #{score_sbl_hmm.3} parent=0 // pred_check_branch
    %422 = sbr.rel (0) target = $region37
  $region36: #{score_sbl_hmm.3} parent=0 // pred_region
    _
  $region37: #{score_sbl_hmm.3} parent=0 // pred_fallthru
    _
  // Predicated region
  $region38: #{score_sbl_hmm.3} parent=0 // pred_check
    _
  $region39: #{score_sbl_hmm.3} parent=0 // pred_check_branch
    %424 = sbr.rel (0) target = $region41
  $region40: #{score_sbl_hmm.3} parent=0 // pred_region
    _
  $region41: #{score_sbl_hmm.3} parent=0 // pred_fallthru
    _

// kernel: score_sbl_hmm.2
$region0: #{score_sbl_hmm.2}
  #allocation0 [shape = 'u32[]', space=smem, size = 0x4, offset = 0x4, fixed_abs, tag = 'smem constant byte address 0x4 - core index']
  #allocation1 [shape = 'u32[72,128]{1,0:T(1,128)}', space=vmem, size = 0x9000, scoped, tag = 'internal scratch']
  #allocation2 [shape = 'bf16[128,128]{1,0:T(8,128)(2,1)}', space=vmem, size = 0x8000, scoped, tag = 'scratch operand']
  #allocation3 [shape = 'f32[1,128]{1,0:T(1,128)}', space=vmem, size = 0x200, scoped, tag = 'scratch operand']
  #allocation4 [shape = 'f32[1,128]{1,0:T(1,128)}', space=vmem, size = 0x200, scoped, tag = 'scratch operand']
  %s0 = inlined_call_operand.vmem [shape: bf16[128,128], index: 0, kind: input, shape index: {}]
  %s1 = inlined_call_operand.vmem [shape: bf16[128,128], index: 1, kind: input, shape index: {}]
  %s2 = inlined_call_operand.vmem [shape: s32[1,128], index: 2, kind: input, shape index: {}]
  %s3 = inlined_call_operand.vmem [shape: s32[256,1], index: 3, kind: input, shape index: {}]
  %s4 = inlined_call_operand.vmem [shape: bf16[128,128], index: 4, kind: input, shape index: {}]
  %s5 = inlined_call_operand.vmem [shape: bf16[256,128], index: 5, kind: input, shape index: {}]
  %s6 = inlined_call_operand.vmem [shape: bf16[128,128], index: 6, kind: input, shape index: {}]
  %s7 = inlined_call_operand.vmem [shape: f32[1,128], index: 7, kind: input, shape index: {}]
  %s8 = inlined_call_operand.vmem [shape: bf16[128,128], index: 8, kind: input, shape index: {}]
  %s9 = inlined_call_operand.vmem [shape: f32[1,128], index: 9, kind: input, shape index: {}]
  %s10 = inlined_call_operand.vmem [shape: bf16[128,128], index: 10, kind: input, shape index: {}]
  %s11 = inlined_call_operand.vmem [shape: f32[1,128], index: 11, kind: input, shape index: {}]
  %s12 = inlined_call_operand.vmem [shape: bf16[128,128], index: 12, kind: input, shape index: {}]
  %s13 = inlined_call_operand.vmem [shape: f32[1,128], index: 13, kind: input, shape index: {}]
  %s14 = inlined_call_operand.vmem [shape: bf16[128,128], index: 14, kind: output, shape index: {0}]
  %s15 = inlined_call_operand.vmem [shape: bf16[256,128], index: 15, kind: output, shape index: {1}]
  %s16 = inlined_call_operand.vmem [shape: f32[1,128], index: 16, kind: output, shape index: {2}]
  %17 = xla_tuple %s14, %s15, %s16
  %s18 = sld [smem:[#allocation0]]
  $region90: #{score_sbl_hmm.2} parent=0
    _
  %s20 = ssub.s32 1, %s18
  %s21 = scalar_select 0, %s20, %s18
  // Predicated region
  $region2: #{score_sbl_hmm.2} parent=0 // pred_check
    _
  $region3: #{score_sbl_hmm.2} parent=0 // pred_check_branch
    %23 = sbr.rel (0) target = $region5
  $region4: #{score_sbl_hmm.2} parent=0 // pred_region
    _
  $region5: #{score_sbl_hmm.2} parent=0 // pred_fallthru
    _
  // Predicated region
  $region6: #{score_sbl_hmm.2} parent=0 // pred_check
    _
  $region7: #{score_sbl_hmm.2} parent=0 // pred_check_branch
    %25 = sbr.rel (0) target = $region9
  $region8: #{score_sbl_hmm.2} parent=0 // pred_region
    _
  $region9: #{score_sbl_hmm.2} parent=0 // pred_fallthru
    _
  // Predicated region
  $region10: #{score_sbl_hmm.2} parent=0 // pred_check
    _
  $region11: #{score_sbl_hmm.2} parent=0 // pred_check_branch
    %27 = sbr.rel (0) target = $region13
  $region12: #{score_sbl_hmm.2} parent=0 // pred_region
    _
  $region13: #{score_sbl_hmm.2} parent=0 // pred_fallthru
    _
  // Predicated region
  $region14: #{score_sbl_hmm.2} parent=0 // pred_check
    _
  $region15: #{score_sbl_hmm.2} parent=0 // pred_check_branch
    %29 = sbr.rel (0) target = $region17
  $region16: #{score_sbl_hmm.2} parent=0 // pred_region
    _
  $region17: #{score_sbl_hmm.2} parent=0 // pred_fallthru
    _
  // Predicated region
  $region18: #{score_sbl_hmm.2} parent=0 // pred_check
    _
  $region19: #{score_sbl_hmm.2} parent=0 // pred_check_branch
    %31 = sbr.rel (0) target = $region21
  $region20: #{score_sbl_hmm.2} parent=0 // pred_region
    _
  $region21: #{score_sbl_hmm.2} parent=0 // pred_fallthru
    _
  // Predicated region
  $region22: #{score_sbl_hmm.2} parent=0 // pred_check
    _
  $region23: #{score_sbl_hmm.2} parent=0 // pred_check_branch
    %33 = sbr.rel (0) target = $region25
  $region24: #{score_sbl_hmm.2} parent=0 // pred_region
    _
  $region25: #{score_sbl_hmm.2} parent=0 // pred_fallthru
    _
  // Predicated region
  $region26: #{score_sbl_hmm.2} parent=0 // pred_check
    _
  $region27: #{score_sbl_hmm.2} parent=0 // pred_check_branch
    %35 = sbr.rel (0) target = $region29
  $region28: #{score_sbl_hmm.2} parent=0 // pred_region
    _
  $region29: #{score_sbl_hmm.2} parent=0 // pred_fallthru
    _
  // Predicated region
  $region30: #{score_sbl_hmm.2} parent=0 // pred_check
    _
  $region31: #{score_sbl_hmm.2} parent=0 // pred_check_branch
    %37 = sbr.rel (0) target = $region33
  $region32: #{score_sbl_hmm.2} parent=0 // pred_region
    _
  $region33: #{score_sbl_hmm.2} parent=0 // pred_fallthru
    _
  // Predicated region
  $region34: #{score_sbl_hmm.2} parent=0 // pred_check
    _
  $region35: #{score_sbl_hmm.2} parent=0 // pred_check_branch
    %39 = sbr.rel (0) target = $region37
  $region36: #{score_sbl_hmm.2} parent=0 // pred_region
    _
  $region37: #{score_sbl_hmm.2} parent=0 // pred_fallthru
    _
  // Predicated region
  $region38: #{score_sbl_hmm.2} parent=0 // pred_check
    _
  $region39: #{score_sbl_hmm.2} parent=0 // pred_check_branch
    %41 = sbr.rel (0) target = $region41
  $region40: #{score_sbl_hmm.2} parent=0 // pred_region
    _
  $region41: #{score_sbl_hmm.2} parent=0 // pred_fallthru
    _
  // Predicated region
  $region42: #{score_sbl_hmm.2} parent=0 // pred_check
    _
  $region43: #{score_sbl_hmm.2} parent=0 // pred_check_branch
    %43 = sbr.rel (0) target = $region45
  $region44: #{score_sbl_hmm.2} parent=0 // pred_region
    _
  $region45: #{score_sbl_hmm.2} parent=0 // pred_fallthru
    _
  // Predicated region
  $region46: #{score_sbl_hmm.2} parent=0 // pred_check
    _
  $region47: #{score_sbl_hmm.2} parent=0 // pred_check_branch
    %45 = sbr.rel (0) target = $region49
  $region48: #{score_sbl_hmm.2} parent=0 // pred_region
    _
  $region49: #{score_sbl_hmm.2} parent=0 // pred_fallthru
    _
  // Predicated region
  $region50: #{score_sbl_hmm.2} parent=0 // pred_check
    _
  $region51: #{score_sbl_hmm.2} parent=0 // pred_check_branch
    %47 = sbr.rel (0) target = $region53
  $region52: #{score_sbl_hmm.2} parent=0 // pred_region
    _
  $region53: #{score_sbl_hmm.2} parent=0 // pred_fallthru
    _
  // Predicated region
  $region54: #{score_sbl_hmm.2} parent=0 // pred_check
    _
  $region55: #{score_sbl_hmm.2} parent=0 // pred_check_branch
    %49 = sbr.rel (0) target = $region57
  $region56: #{score_sbl_hmm.2} parent=0 // pred_region
    _
  $region57: #{score_sbl_hmm.2} parent=0 // pred_fallthru
    _
  %p50 = scmp.eq.s32.totalorder 0, 0
  // Predicated region
  $region58: #{score_sbl_hmm.2} parent=0 // pred_check
    %p51 = pneg %p50
  $region59: #{score_sbl_hmm.2} parent=0 // pred_check_branch
    %53 = sbr.rel (%p51) target = $region61
  $region60: #{score_sbl_hmm.2} parent=0 // pred_region
    %v54 = vld [vmem:[%s0] sm:$0xf]
    %v55 = vld [vmem:[%s0 + $0x4] sm:$0xf]
    %v56 = vld [vmem:[%s0 + $0x8] sm:$0xf]
    %v57 = vld [vmem:[%s0 + $0xc] sm:$0xf]
    %v58 = vld [vmem:[%s0 + $0x10] sm:$0xf]
    %v59 = vld [vmem:[%s0 + $0x14] sm:$0xf]
    %v60 = vld [vmem:[%s0 + $0x18] sm:$0xf]
    %v61 = vld [vmem:[%s0 + $0x1c] sm:$0xf]
    %v62 = vld [vmem:[%s0 + $0x20] sm:$0xf]
    %v63 = vld [vmem:[%s0 + $0x24] sm:$0xf]
    %v64 = vld [vmem:[%s0 + $0x28] sm:$0xf]
    %v65 = vld [vmem:[%s0 + $0x2c] sm:$0xf]
    %v66 = vld [vmem:[%s0 + $0x30] sm:$0xf]
    %v67 = vld [vmem:[%s0 + $0x34] sm:$0xf]
    %v68 = vld [vmem:[%s0 + $0x38] sm:$0xf]
    %v69 = vld [vmem:[%s0 + $0x3c] sm:$0xf]
    %v70 = vld [vmem:[%s4] sm:$0xf]
    %v71 = vld [vmem:[%s4 + $0x4] sm:$0xf]
    %v72 = vld [vmem:[%s4 + $0x8] sm:$0xf]
    %v73 = vld [vmem:[%s4 + $0xc] sm:$0xf]
    %v74 = vld [vmem:[%s4 + $0x10] sm:$0xf]
    %v75 = vld [vmem:[%s4 + $0x14] sm:$0xf]
    %v76 = vld [vmem:[%s4 + $0x18] sm:$0xf]
    %v77 = vld [vmem:[%s4 + $0x1c] sm:$0xf]
    %v78 = vld [vmem:[%s4 + $0x20] sm:$0xf]
    %v79 = vld [vmem:[%s4 + $0x24] sm:$0xf]
    %v80 = vld [vmem:[%s4 + $0x28] sm:$0xf]
    %v81 = vld [vmem:[%s4 + $0x2c] sm:$0xf]
    %v82 = vld [vmem:[%s4 + $0x30] sm:$0xf]
    %v83 = vld [vmem:[%s4 + $0x34] sm:$0xf]
    %v84 = vld [vmem:[%s4 + $0x38] sm:$0xf]
    %v85 = vld [vmem:[%s4 + $0x3c] sm:$0xf]
    %v102 = vunpack.c.l.b16 %v54
    %v103 = vunpack.c.l.b16 %v55
    %v104 = vunpack.c.l.b16 %v56
    %v105 = vunpack.c.l.b16 %v57
    %v106 = vunpack.c.l.b16 %v58
    %v107 = vunpack.c.l.b16 %v59
    %v108 = vunpack.c.l.b16 %v60
    %v109 = vunpack.c.l.b16 %v61
    %v110 = vunpack.c.l.b16 %v62
    %v111 = vunpack.c.l.b16 %v63
    %v112 = vunpack.c.l.b16 %v64
    %v113 = vunpack.c.l.b16 %v65
    %v114 = vunpack.c.l.b16 %v66
    %v115 = vunpack.c.l.b16 %v67
    %v116 = vunpack.c.l.b16 %v68
    %v117 = vunpack.c.l.b16 %v69
    %v118 = vpack.c.b16 %v103, %v102
    %v119 = vpack.c.b16 %v105, %v104
    %v120 = vpack.c.b16 %v107, %v106
    %v121 = vpack.c.b16 %v109, %v108
    %v122 = vpack.c.b16 %v111, %v110
    %v123 = vpack.c.b16 %v113, %v112
    %v124 = vpack.c.b16 %v115, %v114
    %v125 = vpack.c.b16 %v117, %v116
    %v150 = vunpack.c.l.b16 %v70
    %v151 = vunpack.c.l.b16 %v71
    %v152 = vunpack.c.l.b16 %v72
    %v153 = vunpack.c.l.b16 %v73
    %v154 = vunpack.c.l.b16 %v74
    %v155 = vunpack.c.l.b16 %v75
    %v156 = vunpack.c.l.b16 %v76
    %v157 = vunpack.c.l.b16 %v77
    %v158 = vunpack.c.l.b16 %v78
    %v159 = vunpack.c.l.b16 %v79
    %v160 = vunpack.c.l.b16 %v80
    %v161 = vunpack.c.l.b16 %v81
    %v162 = vunpack.c.l.b16 %v82
    %v163 = vunpack.c.l.b16 %v83
    %v164 = vunpack.c.l.b16 %v84
    %v165 = vunpack.c.l.b16 %v85
    %v166 = vpack.c.b16 %v151, %v150
    %v167 = vpack.c.b16 %v153, %v152
    %v168 = vpack.c.b16 %v155, %v154
    %v169 = vpack.c.b16 %v157, %v156
    %v170 = vpack.c.b16 %v159, %v158
    %v171 = vpack.c.b16 %v161, %v160
    %v172 = vpack.c.b16 %v163, %v162
    %v173 = vpack.c.b16 %v165, %v164
    %182 = vmatpush.bf16.xpose.msra.mxu0 %v173
    %183 = vmatpush.bf16.xpose.msra.mxu0 %v172
    %184 = vmatpush.bf16.xpose.msra.mxu0 %v171
    %185 = vmatpush.bf16.xpose.msra.mxu0 %v170
    %186 = vmatpush.bf16.xpose.msra.mxu0 %v169
    %187 = vmatpush.bf16.xpose.msra.mxu0 %v168
    %188 = vmatpush.bf16.xpose.msra.mxu0 %v167
    %189 = vmatpush.bf16.xpose.msra.mxu0 %v166
    %190 = vmatmul.bf16.gmra.mxu0 %v118
    %v191 = vpop.f32.mrf.mxu0
    %v192 = vadd.f32 0.0, %v191
    %v193 = vpop.f32.mrf.mxu0
    %v194 = vadd.f32 0.0, %v193
    %195 = vmatmul.bf16.gmra.mxu0 %v119
    %v196 = vpop.f32.mrf.mxu0
    %v197 = vadd.f32 0.0, %v196
    %v198 = vpop.f32.mrf.mxu0
    %v199 = vadd.f32 0.0, %v198
    %200 = vmatmul.bf16.gmra.mxu0 %v120
    %v201 = vpop.f32.mrf.mxu0
    %v202 = vadd.f32 0.0, %v201
    %v203 = vpop.f32.mrf.mxu0
    %v204 = vadd.f32 0.0, %v203
    %205 = vmatmul.bf16.gmra.mxu0 %v121
    %v206 = vpop.f32.mrf.mxu0
    %v207 = vadd.f32 0.0, %v206
    %v208 = vpop.f32.mrf.mxu0
    %v209 = vadd.f32 0.0, %v208
    %210 = vmatmul.bf16.gmra.mxu0 %v122
    %v211 = vpop.f32.mrf.mxu0
    %v212 = vadd.f32 0.0, %v211
    %v213 = vpop.f32.mrf.mxu0
    %v214 = vadd.f32 0.0, %v213
    %215 = vmatmul.bf16.gmra.mxu0 %v123
    %v216 = vpop.f32.mrf.mxu0
    %v217 = vadd.f32 0.0, %v216
    %v218 = vpop.f32.mrf.mxu0
    %v219 = vadd.f32 0.0, %v218
    %220 = vmatmul.bf16.gmra.mxu0 %v124
    %v221 = vpop.f32.mrf.mxu0
    %v222 = vadd.f32 0.0, %v221
    %v223 = vpop.f32.mrf.mxu0
    %v224 = vadd.f32 0.0, %v223
    %225 = vmatmul.bf16.gmra.mxu0 %v125
    %v226 = vpop.f32.mrf.mxu0
    %v227 = vadd.f32 0.0, %v226
    %v228 = vpop.f32.mrf.mxu0
    %v229 = vadd.f32 0.0, %v228
    %230 = vdwg.mxu0
    %231 = vmax.xlane.f32.xlu0 %v192
    %v232 = vpop.xlane.xlu0 %231
    %233 = vmax.xlane.f32.xlu0 %v194
    %v234 = vpop.xlane.xlu0 %233
    %235 = vmax.xlane.f32.xlu0 %v197
    %v236 = vpop.xlane.xlu0 %235
    %237 = vmax.xlane.f32.xlu0 %v199
    %v238 = vpop.xlane.xlu0 %237
    %239 = vmax.xlane.f32.xlu0 %v202
    %v240 = vpop.xlane.xlu0 %239
    %241 = vmax.xlane.f32.xlu0 %v204
    %v242 = vpop.xlane.xlu0 %241
    %243 = vmax.xlane.f32.xlu0 %v207
    %v244 = vpop.xlane.xlu0 %243
    %245 = vmax.xlane.f32.xlu0 %v209
    %v246 = vpop.xlane.xlu0 %245
    %247 = vmax.xlane.f32.xlu0 %v212
    %v248 = vpop.xlane.xlu0 %247
    %249 = vmax.xlane.f32.xlu0 %v214
    %v250 = vpop.xlane.xlu0 %249
    %251 = vmax.xlane.f32.xlu0 %v217
    %v252 = vpop.xlane.xlu0 %251
    %253 = vmax.xlane.f32.xlu0 %v219
    %v254 = vpop.xlane.xlu0 %253
    %255 = vmax.xlane.f32.xlu0 %v222
    %v256 = vpop.xlane.xlu0 %255
    %257 = vmax.xlane.f32.xlu0 %v224
    %v258 = vpop.xlane.xlu0 %257
    %259 = vmax.xlane.f32.xlu0 %v227
    %v260 = vpop.xlane.xlu0 %259
    %261 = vmax.xlane.f32.xlu0 %v229
    %v262 = vpop.xlane.xlu0 %261
    %v263 = vsub.f32 %v192, %v232
    %v264 = vsub.f32 %v194, %v234
    %v265 = vsub.f32 %v197, %v236
    %v266 = vsub.f32 %v199, %v238
    %v267 = vsub.f32 %v202, %v240
    %v268 = vsub.f32 %v204, %v242
    %v269 = vsub.f32 %v207, %v244
    %v270 = vsub.f32 %v209, %v246
    %v271 = vsub.f32 %v212, %v248
    %v272 = vsub.f32 %v214, %v250
    %v273 = vsub.f32 %v217, %v252
    %v274 = vsub.f32 %v219, %v254
    %v275 = vsub.f32 %v222, %v256
    %v276 = vsub.f32 %v224, %v258
    %v277 = vsub.f32 %v227, %v260
    %v278 = vsub.f32 %v229, %v262
    %v279 = vmul.f32 %v263, 1.442695
    %v280 = vpow.pop %v279
    %v281 = vmul.f32 %v264, 1.442695
    %v282 = vpow.pop %v281
    %v283 = vmul.f32 %v265, 1.442695
    %v284 = vpow.pop %v283
    %v285 = vmul.f32 %v266, 1.442695
    %v286 = vpow.pop %v285
    %v287 = vmul.f32 %v267, 1.442695
    %v288 = vpow.pop %v287
    %v289 = vmul.f32 %v268, 1.442695
    %v290 = vpow.pop %v289
    %v291 = vmul.f32 %v269, 1.442695
    %v292 = vpow.pop %v291
    %v293 = vmul.f32 %v270, 1.442695
    %v294 = vpow.pop %v293
    %v295 = vmul.f32 %v271, 1.442695
    %v296 = vpow.pop %v295
    %v297 = vmul.f32 %v272, 1.442695
    %v298 = vpow.pop %v297
    %v299 = vmul.f32 %v273, 1.442695
    %v300 = vpow.pop %v299
    %v301 = vmul.f32 %v274, 1.442695
    %v302 = vpow.pop %v301
    %v303 = vmul.f32 %v275, 1.442695
    %v304 = vpow.pop %v303
    %v305 = vmul.f32 %v276, 1.442695
    %v306 = vpow.pop %v305
    %v307 = vmul.f32 %v277, 1.442695
    %v308 = vpow.pop %v307
    %v309 = vmul.f32 %v278, 1.442695
    %v310 = vpow.pop %v309
    %311 = vadd.xlane.f32.xlu0 %v280
    %v312 = vpop.xlane.xlu0 %311
    %313 = vadd.xlane.f32.xlu0 %v282
    %v314 = vpop.xlane.xlu0 %313
    %315 = vadd.xlane.f32.xlu0 %v284
    %v316 = vpop.xlane.xlu0 %315
    %317 = vadd.xlane.f32.xlu0 %v286
    %v318 = vpop.xlane.xlu0 %317
    %319 = vadd.xlane.f32.xlu0 %v288
    %v320 = vpop.xlane.xlu0 %319
    %321 = vadd.xlane.f32.xlu0 %v290
    %v322 = vpop.xlane.xlu0 %321
    %323 = vadd.xlane.f32.xlu0 %v292
    %v324 = vpop.xlane.xlu0 %323
    %325 = vadd.xlane.f32.xlu0 %v294
    %v326 = vpop.xlane.xlu0 %325
    %327 = vadd.xlane.f32.xlu0 %v296
    %v328 = vpop.xlane.xlu0 %327
    %329 = vadd.xlane.f32.xlu0 %v298
    %v330 = vpop.xlane.xlu0 %329
    %331 = vadd.xlane.f32.xlu0 %v300
    %v332 = vpop.xlane.xlu0 %331
    %333 = vadd.xlane.f32.xlu0 %v302
    %v334 = vpop.xlane.xlu0 %333
    %335 = vadd.xlane.f32.xlu0 %v304
    %v336 = vpop.xlane.xlu0 %335
    %337 = vadd.xlane.f32.xlu0 %v306
    %v338 = vpop.xlane.xlu0 %337
    %339 = vadd.xlane.f32.xlu0 %v308
    %v340 = vpop.xlane.xlu0 %339
    %341 = vadd.xlane.f32.xlu0 %v310
    %v342 = vpop.xlane.xlu0 %341
    %v343 = vlog2.pop %v312
    %v344 = vmul.f32 %v343, 0.6931472
    %v345 = vlog2.pop %v314
    %v346 = vmul.f32 %v345, 0.6931472
    %v347 = vlog2.pop %v316
    %v348 = vmul.f32 %v347, 0.6931472
    %v349 = vlog2.pop %v318
    %v350 = vmul.f32 %v349, 0.6931472
    %v351 = vlog2.pop %v320
    %v352 = vmul.f32 %v351, 0.6931472
    %v353 = vlog2.pop %v322
    %v354 = vmul.f32 %v353, 0.6931472
    %v355 = vlog2.pop %v324
    %v356 = vmul.f32 %v355, 0.6931472
    %v357 = vlog2.pop %v326
    %v358 = vmul.f32 %v357, 0.6931472
    %v359 = vlog2.pop %v328
    %v360 = vmul.f32 %v359, 0.6931472
    %v361 = vlog2.pop %v330
    %v362 = vmul.f32 %v361, 0.6931472
    %v363 = vlog2.pop %v332
    %v364 = vmul.f32 %v363, 0.6931472
    %v365 = vlog2.pop %v334
    %v366 = vmul.f32 %v365, 0.6931472
    %v367 = vlog2.pop %v336
    %v368 = vmul.f32 %v367, 0.6931472
    %v369 = vlog2.pop %v338
    %v370 = vmul.f32 %v369, 0.6931472
    %v371 = vlog2.pop %v340
    %v372 = vmul.f32 %v371, 0.6931472
    %v373 = vlog2.pop %v342
    %v374 = vmul.f32 %v373, 0.6931472
    %v375 = vadd.f32 %v232, %v344
    %v376 = vadd.f32 %v234, %v346
    %v377 = vadd.f32 %v236, %v348
    %v378 = vadd.f32 %v238, %v350
    %v379 = vadd.f32 %v240, %v352
    %v380 = vadd.f32 %v242, %v354
    %v381 = vadd.f32 %v244, %v356
    %v382 = vadd.f32 %v246, %v358
    %v383 = vadd.f32 %v248, %v360
    %v384 = vadd.f32 %v250, %v362
    %v385 = vadd.f32 %v252, %v364
    %v386 = vadd.f32 %v254, %v366
    %v387 = vadd.f32 %v256, %v368
    %v388 = vadd.f32 %v258, %v370
    %v389 = vadd.f32 %v260, %v372
    %v390 = vadd.f32 %v262, %v374
    %v391 = vsub.f32 %v192, %v375
    %v392 = vsub.f32 %v194, %v376
    %v393 = vsub.f32 %v197, %v377
    %v394 = vsub.f32 %v199, %v378
    %v395 = vsub.f32 %v202, %v379
    %v396 = vsub.f32 %v204, %v380
    %v397 = vsub.f32 %v207, %v381
    %v398 = vsub.f32 %v209, %v382
    %v399 = vsub.f32 %v212, %v383
    %v400 = vsub.f32 %v214, %v384
    %v401 = vsub.f32 %v217, %v385
    %v402 = vsub.f32 %v219, %v386
    %v403 = vsub.f32 %v222, %v387
    %v404 = vsub.f32 %v224, %v388
    %v405 = vsub.f32 %v227, %v389
    %v406 = vsub.f32 %v229, %v390
    %v407 = vmul.f32 %v391, 1.442695
    %v408 = vpow.pop %v407
    %v409 = vmul.f32 %v392, 1.442695
    %v410 = vpow.pop %v409
    %v411 = vmul.f32 %v393, 1.442695
    %v412 = vpow.pop %v411
    %v413 = vmul.f32 %v394, 1.442695
    %v414 = vpow.pop %v413
    %v415 = vmul.f32 %v395, 1.442695
    %v416 = vpow.pop %v415
    %v417 = vmul.f32 %v396, 1.442695
    %v418 = vpow.pop %v417
    %v419 = vmul.f32 %v397, 1.442695
    %v420 = vpow.pop %v419
    %v421 = vmul.f32 %v398, 1.442695
    %v422 = vpow.pop %v421
    %v423 = vmul.f32 %v399, 1.442695
    %v424 = vpow.pop %v423
    %v425 = vmul.f32 %v400, 1.442695
    %v426 = vpow.pop %v425
    %v427 = vmul.f32 %v401, 1.442695
    %v428 = vpow.pop %v427
    %v429 = vmul.f32 %v402, 1.442695
    %v430 = vpow.pop %v429
    %v431 = vmul.f32 %v403, 1.442695
    %v432 = vpow.pop %v431
    %v433 = vmul.f32 %v404, 1.442695
    %v434 = vpow.pop %v433
    %v435 = vmul.f32 %v405, 1.442695
    %v436 = vpow.pop %v435
    %v437 = vmul.f32 %v406, 1.442695
    %v438 = vpow.pop %v437
    %v439 = vpack.c.bf16 %v408, %v408
    %v440 = vpack.c.bf16 %v410, %v410
    %v441 = vpack.c.bf16 %v412, %v412
    %v442 = vpack.c.bf16 %v414, %v414
    %v443 = vpack.c.bf16 %v416, %v416
    %v444 = vpack.c.bf16 %v418, %v418
    %v445 = vpack.c.bf16 %v420, %v420
    %v446 = vpack.c.bf16 %v422, %v422
    %v447 = vpack.c.bf16 %v424, %v424
    %v448 = vpack.c.bf16 %v426, %v426
    %v449 = vpack.c.bf16 %v428, %v428
    %v450 = vpack.c.bf16 %v430, %v430
    %v451 = vpack.c.bf16 %v432, %v432
    %v452 = vpack.c.bf16 %v434, %v434
    %v453 = vpack.c.bf16 %v436, %v436
    %v454 = vpack.c.bf16 %v438, %v438
    %455 = vst [vmem:[%s14] sm:$0xf] %v439
    %456 = vst [vmem:[%s14 + $0x4] sm:$0xf] %v440
    %457 = vst [vmem:[%s14 + $0x8] sm:$0xf] %v441
    %458 = vst [vmem:[%s14 + $0xc] sm:$0xf] %v442
    %459 = vst [vmem:[%s14 + $0x10] sm:$0xf] %v443
    %460 = vst [vmem:[%s14 + $0x14] sm:$0xf] %v444
    %461 = vst [vmem:[%s14 + $0x18] sm:$0xf] %v445
    %462 = vst [vmem:[%s14 + $0x1c] sm:$0xf] %v446
    %463 = vst [vmem:[%s14 + $0x20] sm:$0xf] %v447
    %464 = vst [vmem:[%s14 + $0x24] sm:$0xf] %v448
    %465 = vst [vmem:[%s14 + $0x28] sm:$0xf] %v449
    %466 = vst [vmem:[%s14 + $0x2c] sm:$0xf] %v450
    %467 = vst [vmem:[%s14 + $0x30] sm:$0xf] %v451
    %468 = vst [vmem:[%s14 + $0x34] sm:$0xf] %v452
    %469 = vst [vmem:[%s14 + $0x38] sm:$0xf] %v453
    %470 = vst [vmem:[%s14 + $0x3c] sm:$0xf] %v454
    %v471 = vld [vmem:[%s1] sm:$0xf]
    %v472 = vld [vmem:[%s1 + $0x4] sm:$0xf]
    %v473 = vld [vmem:[%s1 + $0x8] sm:$0xf]
    %v474 = vld [vmem:[%s1 + $0xc] sm:$0xf]
    %v475 = vld [vmem:[%s1 + $0x10] sm:$0xf]
    %v476 = vld [vmem:[%s1 + $0x14] sm:$0xf]
    %v477 = vld [vmem:[%s1 + $0x18] sm:$0xf]
    %v478 = vld [vmem:[%s1 + $0x1c] sm:$0xf]
    %v479 = vld [vmem:[%s1 + $0x20] sm:$0xf]
    %v480 = vld [vmem:[%s1 + $0x24] sm:$0xf]
    %v481 = vld [vmem:[%s1 + $0x28] sm:$0xf]
    %v482 = vld [vmem:[%s1 + $0x2c] sm:$0xf]
    %v483 = vld [vmem:[%s1 + $0x30] sm:$0xf]
    %v484 = vld [vmem:[%s1 + $0x34] sm:$0xf]
    %v485 = vld [vmem:[%s1 + $0x38] sm:$0xf]
    %v486 = vld [vmem:[%s1 + $0x3c] sm:$0xf]
    %v487 = vld [vmem:[%s6] sm:$0xf]
    %v488 = vld [vmem:[%s6 + $0x4] sm:$0xf]
    %v489 = vld [vmem:[%s6 + $0x8] sm:$0xf]
    %v490 = vld [vmem:[%s6 + $0xc] sm:$0xf]
    %v491 = vld [vmem:[%s6 + $0x10] sm:$0xf]
    %v492 = vld [vmem:[%s6 + $0x14] sm:$0xf]
    %v493 = vld [vmem:[%s6 + $0x18] sm:$0xf]
    %v494 = vld [vmem:[%s6 + $0x1c] sm:$0xf]
    %v495 = vld [vmem:[%s6 + $0x20] sm:$0xf]
    %v496 = vld [vmem:[%s6 + $0x24] sm:$0xf]
    %v497 = vld [vmem:[%s6 + $0x28] sm:$0xf]
    %v498 = vld [vmem:[%s6 + $0x2c] sm:$0xf]
    %v499 = vld [vmem:[%s6 + $0x30] sm:$0xf]
    %v500 = vld [vmem:[%s6 + $0x34] sm:$0xf]
    %v501 = vld [vmem:[%s6 + $0x38] sm:$0xf]
    %v502 = vld [vmem:[%s6 + $0x3c] sm:$0xf]
    %v503 = vld [vmem:[%s7] sm:$0x1]
    %v504 = vld [vmem:[%s8] sm:$0xf]
    %v505 = vld [vmem:[%s8 + $0x4] sm:$0xf]
    %v506 = vld [vmem:[%s8 + $0x8] sm:$0xf]
    %v507 = vld [vmem:[%s8 + $0xc] sm:$0xf]
    %v508 = vld [vmem:[%s8 + $0x10] sm:$0xf]
    %v509 = vld [vmem:[%s8 + $0x14] sm:$0xf]
    %v510 = vld [vmem:[%s8 + $0x18] sm:$0xf]
    %v511 = vld [vmem:[%s8 + $0x1c] sm:$0xf]
    %v512 = vld [vmem:[%s8 + $0x20] sm:$0xf]
    %v513 = vld [vmem:[%s8 + $0x24] sm:$0xf]
    %v514 = vld [vmem:[%s8 + $0x28] sm:$0xf]
    %v515 = vld [vmem:[%s8 + $0x2c] sm:$0xf]
    %v516 = vld [vmem:[%s8 + $0x30] sm:$0xf]
    %v517 = vld [vmem:[%s8 + $0x34] sm:$0xf]
    %v518 = vld [vmem:[%s8 + $0x38] sm:$0xf]
    %v519 = vld [vmem:[%s8 + $0x3c] sm:$0xf]
    %v520 = vld [vmem:[%s9] sm:$0x1]
    %v522 = vperm.slane %v503, 0
    %v540 = vunpack.c.l.b16 %v471
    %v541 = vunpack.c.l.b16 %v472
    %v542 = vunpack.c.l.b16 %v473
    %v543 = vunpack.c.l.b16 %v474
    %v544 = vunpack.c.l.b16 %v475
    %v545 = vunpack.c.l.b16 %v476
    %v546 = vunpack.c.l.b16 %v477
    %v547 = vunpack.c.l.b16 %v478
    %v548 = vunpack.c.l.b16 %v479
    %v549 = vunpack.c.l.b16 %v480
    %v550 = vunpack.c.l.b16 %v481
    %v551 = vunpack.c.l.b16 %v482
    %v552 = vunpack.c.l.b16 %v483
    %v553 = vunpack.c.l.b16 %v484
    %v554 = vunpack.c.l.b16 %v485
    %v555 = vunpack.c.l.b16 %v486
    %v556 = vpack.c.b16 %v541, %v540
    %v557 = vpack.c.b16 %v543, %v542
    %v558 = vpack.c.b16 %v545, %v544
    %v559 = vpack.c.b16 %v547, %v546
    %v560 = vpack.c.b16 %v549, %v548
    %v561 = vpack.c.b16 %v551, %v550
    %v562 = vpack.c.b16 %v553, %v552
    %v563 = vpack.c.b16 %v555, %v554
    %v588 = vunpack.c.l.b16 %v487
    %v589 = vunpack.c.l.b16 %v488
    %v590 = vunpack.c.l.b16 %v489
    %v591 = vunpack.c.l.b16 %v490
    %v592 = vunpack.c.l.b16 %v491
    %v593 = vunpack.c.l.b16 %v492
    %v594 = vunpack.c.l.b16 %v493
    %v595 = vunpack.c.l.b16 %v494
    %v596 = vunpack.c.l.b16 %v495
    %v597 = vunpack.c.l.b16 %v496
    %v598 = vunpack.c.l.b16 %v497
    %v599 = vunpack.c.l.b16 %v498
    %v600 = vunpack.c.l.b16 %v499
    %v601 = vunpack.c.l.b16 %v500
    %v602 = vunpack.c.l.b16 %v501
    %v603 = vunpack.c.l.b16 %v502
    %v604 = vpack.c.b16 %v589, %v588
    %v605 = vpack.c.b16 %v591, %v590
    %v606 = vpack.c.b16 %v593, %v592
    %v607 = vpack.c.b16 %v595, %v594
    %v608 = vpack.c.b16 %v597, %v596
    %v609 = vpack.c.b16 %v599, %v598
    %v610 = vpack.c.b16 %v601, %v600
    %v611 = vpack.c.b16 %v603, %v602
    %620 = vmatpush.bf16.msra.mxu0 %v611
    %621 = vmatpush.bf16.msra.mxu0 %v610
    %622 = vmatpush.bf16.msra.mxu0 %v609
    %623 = vmatpush.bf16.msra.mxu0 %v608
    %624 = vmatpush.bf16.msra.mxu0 %v607
    %625 = vmatpush.bf16.msra.mxu0 %v606
    %626 = vmatpush.bf16.msra.mxu0 %v605
    %627 = vmatpush.bf16.msra.mxu0 %v604
    %628 = vmatmul.bf16.gmra.mxu0 %v556
    %v629 = vpop.f32.mrf.mxu0
    %v630 = vadd.f32 %v522, %v629
    %v631 = vpop.f32.mrf.mxu0
    %v632 = vadd.f32 %v522, %v631
    %633 = vmatmul.bf16.gmra.mxu0 %v557
    %v634 = vpop.f32.mrf.mxu0
    %v635 = vadd.f32 %v522, %v634
    %v636 = vpop.f32.mrf.mxu0
    %v637 = vadd.f32 %v522, %v636
    %638 = vmatmul.bf16.gmra.mxu0 %v558
    %v639 = vpop.f32.mrf.mxu0
    %v640 = vadd.f32 %v522, %v639
    %v641 = vpop.f32.mrf.mxu0
    %v642 = vadd.f32 %v522, %v641
    %643 = vmatmul.bf16.gmra.mxu0 %v559
    %v644 = vpop.f32.mrf.mxu0
    %v645 = vadd.f32 %v522, %v644
    %v646 = vpop.f32.mrf.mxu0
    %v647 = vadd.f32 %v522, %v646
    %648 = vmatmul.bf16.gmra.mxu0 %v560
    %v649 = vpop.f32.mrf.mxu0
    %v650 = vadd.f32 %v522, %v649
    %v651 = vpop.f32.mrf.mxu0
    %v652 = vadd.f32 %v522, %v651
    %653 = vmatmul.bf16.gmra.mxu0 %v561
    %v654 = vpop.f32.mrf.mxu0
    %v655 = vadd.f32 %v522, %v654
    %v656 = vpop.f32.mrf.mxu0
    %v657 = vadd.f32 %v522, %v656
    %658 = vmatmul.bf16.gmra.mxu0 %v562
    %v659 = vpop.f32.mrf.mxu0
    %v660 = vadd.f32 %v522, %v659
    %v661 = vpop.f32.mrf.mxu0
    %v662 = vadd.f32 %v522, %v661
    %663 = vmatmul.bf16.gmra.mxu0 %v563
    %v664 = vpop.f32.mrf.mxu0
    %v665 = vadd.f32 %v522, %v664
    %v666 = vpop.f32.mrf.mxu0
    %v667 = vadd.f32 %v522, %v666
    %668 = vdwg.mxu0
    %v669 = vmax.f32 %v630, 0.0
    %v670 = vmax.f32 %v632, 0.0
    %v671 = vmax.f32 %v635, 0.0
    %v672 = vmax.f32 %v637, 0.0
    %v673 = vmax.f32 %v640, 0.0
    %v674 = vmax.f32 %v642, 0.0
    %v675 = vmax.f32 %v645, 0.0
    %v676 = vmax.f32 %v647, 0.0
    %v677 = vmax.f32 %v650, 0.0
    %v678 = vmax.f32 %v652, 0.0
    %v679 = vmax.f32 %v655, 0.0
    %v680 = vmax.f32 %v657, 0.0
    %v681 = vmax.f32 %v660, 0.0
    %v682 = vmax.f32 %v662, 0.0
    %v683 = vmax.f32 %v665, 0.0
    %v684 = vmax.f32 %v667, 0.0
    %v685 = vpack.c.bf16 %v670, %v669
    %v686 = vpack.c.bf16 %v672, %v671
    %v687 = vpack.c.bf16 %v674, %v673
    %v688 = vpack.c.bf16 %v676, %v675
    %v689 = vpack.c.bf16 %v678, %v677
    %v690 = vpack.c.bf16 %v680, %v679
    %v691 = vpack.c.bf16 %v682, %v681
    %v692 = vpack.c.bf16 %v684, %v683
    %v694 = vperm.slane %v520, 0
    %v712 = vunpack.c.l.b16 %v504
    %v713 = vunpack.c.l.b16 %v505
    %v714 = vunpack.c.l.b16 %v506
    %v715 = vunpack.c.l.b16 %v507
    %v716 = vunpack.c.l.b16 %v508
    %v717 = vunpack.c.l.b16 %v509
    %v718 = vunpack.c.l.b16 %v510
    %v719 = vunpack.c.l.b16 %v511
    %v720 = vunpack.c.l.b16 %v512
    %v721 = vunpack.c.l.b16 %v513
    %v722 = vunpack.c.l.b16 %v514
    %v723 = vunpack.c.l.b16 %v515
    %v724 = vunpack.c.l.b16 %v516
    %v725 = vunpack.c.l.b16 %v517
    %v726 = vunpack.c.l.b16 %v518
    %v727 = vunpack.c.l.b16 %v519
    %v728 = vpack.c.b16 %v713, %v712
    %v729 = vpack.c.b16 %v715, %v714
    %v730 = vpack.c.b16 %v717, %v716
    %v731 = vpack.c.b16 %v719, %v718
    %v732 = vpack.c.b16 %v721, %v720
    %v733 = vpack.c.b16 %v723, %v722
    %v734 = vpack.c.b16 %v725, %v724
    %v735 = vpack.c.b16 %v727, %v726
    %744 = vmatpush.bf16.msra.mxu0 %v735
    %745 = vmatpush.bf16.msra.mxu0 %v734
    %746 = vmatpush.bf16.msra.mxu0 %v733
    %747 = vmatpush.bf16.msra.mxu0 %v732
    %748 = vmatpush.bf16.msra.mxu0 %v731
    %749 = vmatpush.bf16.msra.mxu0 %v730
    %750 = vmatpush.bf16.msra.mxu0 %v729
    %751 = vmatpush.bf16.msra.mxu0 %v728
    %752 = vmatmul.bf16.gmra.mxu0 %v685
    %v753 = vpop.f32.mrf.mxu0
    %v754 = vadd.f32 %v694, %v753
    %v755 = vpop.f32.mrf.mxu0
    %v756 = vadd.f32 %v694, %v755
    %757 = vmatmul.bf16.gmra.mxu0 %v686
    %v758 = vpop.f32.mrf.mxu0
    %v759 = vadd.f32 %v694, %v758
    %v760 = vpop.f32.mrf.mxu0
    %v761 = vadd.f32 %v694, %v760
    %762 = vmatmul.bf16.gmra.mxu0 %v687
    %v763 = vpop.f32.mrf.mxu0
    %v764 = vadd.f32 %v694, %v763
    %v765 = vpop.f32.mrf.mxu0
    %v766 = vadd.f32 %v694, %v765
    %767 = vmatmul.bf16.gmra.mxu0 %v688
    %v768 = vpop.f32.mrf.mxu0
    %v769 = vadd.f32 %v694, %v768
    %v770 = vpop.f32.mrf.mxu0
    %v771 = vadd.f32 %v694, %v770
    %772 = vmatmul.bf16.gmra.mxu0 %v689
    %v773 = vpop.f32.mrf.mxu0
    %v774 = vadd.f32 %v694, %v773
    %v775 = vpop.f32.mrf.mxu0
    %v776 = vadd.f32 %v694, %v775
    %777 = vmatmul.bf16.gmra.mxu0 %v690
    %v778 = vpop.f32.mrf.mxu0
    %v779 = vadd.f32 %v694, %v778
    %v780 = vpop.f32.mrf.mxu0
    %v781 = vadd.f32 %v694, %v780
    %782 = vmatmul.bf16.gmra.mxu0 %v691
    %v783 = vpop.f32.mrf.mxu0
    %v784 = vadd.f32 %v694, %v783
    %v785 = vpop.f32.mrf.mxu0
    %v786 = vadd.f32 %v694, %v785
    %787 = vmatmul.bf16.gmra.mxu0 %v692
    %v788 = vpop.f32.mrf.mxu0
    %v789 = vadd.f32 %v694, %v788
    %v790 = vpop.f32.mrf.mxu0
    %v791 = vadd.f32 %v694, %v790
    %792 = vdwg.mxu0
    %v793 = vmax.f32 %v754, 0.0
    %v794 = vmax.f32 %v756, 0.0
    %v795 = vmax.f32 %v759, 0.0
    %v796 = vmax.f32 %v761, 0.0
    %v797 = vmax.f32 %v764, 0.0
    %v798 = vmax.f32 %v766, 0.0
    %v799 = vmax.f32 %v769, 0.0
    %v800 = vmax.f32 %v771, 0.0
    %v801 = vmax.f32 %v774, 0.0
    %v802 = vmax.f32 %v776, 0.0
    %v803 = vmax.f32 %v779, 0.0
    %v804 = vmax.f32 %v781, 0.0
    %v805 = vmax.f32 %v784, 0.0
    %v806 = vmax.f32 %v786, 0.0
    %v807 = vmax.f32 %v789, 0.0
    %v808 = vmax.f32 %v791, 0.0
    %v809 = vunpack.c.l.bf16 %v471
    %v810 = vunpack.c.l.bf16 %v472
    %v811 = vunpack.c.l.bf16 %v473
    %v812 = vunpack.c.l.bf16 %v474
    %v813 = vunpack.c.l.bf16 %v475
    %v814 = vunpack.c.l.bf16 %v476
    %v815 = vunpack.c.l.bf16 %v477
    %v816 = vunpack.c.l.bf16 %v478
    %v817 = vunpack.c.l.bf16 %v479
    %v818 = vunpack.c.l.bf16 %v480
    %v819 = vunpack.c.l.bf16 %v481
    %v820 = vunpack.c.l.bf16 %v482
    %v821 = vunpack.c.l.bf16 %v483
    %v822 = vunpack.c.l.bf16 %v484
    %v823 = vunpack.c.l.bf16 %v485
    %v824 = vunpack.c.l.bf16 %v486
    %v825 = vadd.f32 %v809, %v793
    %v826 = vadd.f32 %v810, %v794
    %v827 = vadd.f32 %v811, %v795
    %v828 = vadd.f32 %v812, %v796
    %v829 = vadd.f32 %v813, %v797
    %v830 = vadd.f32 %v814, %v798
    %v831 = vadd.f32 %v815, %v799
    %v832 = vadd.f32 %v816, %v800
    %v833 = vadd.f32 %v817, %v801
    %v834 = vadd.f32 %v818, %v802
    %v835 = vadd.f32 %v819, %v803
    %v836 = vadd.f32 %v820, %v804
    %v837 = vadd.f32 %v821, %v805
    %v838 = vadd.f32 %v822, %v806
    %v839 = vadd.f32 %v823, %v807
    %v840 = vadd.f32 %v824, %v808
    %v841 = vld [vmem:[%s10] sm:$0xf]
    %v842 = vld [vmem:[%s10 + $0x4] sm:$0xf]
    %v843 = vld [vmem:[%s10 + $0x8] sm:$0xf]
    %v844 = vld [vmem:[%s10 + $0xc] sm:$0xf]
    %v845 = vld [vmem:[%s10 + $0x10] sm:$0xf]
    %v846 = vld [vmem:[%s10 + $0x14] sm:$0xf]
    %v847 = vld [vmem:[%s10 + $0x18] sm:$0xf]
    %v848 = vld [vmem:[%s10 + $0x1c] sm:$0xf]
    %v849 = vld [vmem:[%s10 + $0x20] sm:$0xf]
    %v850 = vld [vmem:[%s10 + $0x24] sm:$0xf]
    %v851 = vld [vmem:[%s10 + $0x28] sm:$0xf]
    %v852 = vld [vmem:[%s10 + $0x2c] sm:$0xf]
    %v853 = vld [vmem:[%s10 + $0x30] sm:$0xf]
    %v854 = vld [vmem:[%s10 + $0x34] sm:$0xf]
    %v855 = vld [vmem:[%s10 + $0x38] sm:$0xf]
    %v856 = vld [vmem:[%s10 + $0x3c] sm:$0xf]
    %v857 = vld [vmem:[%s11] sm:$0x1]
    %v858 = vld [vmem:[%s12] sm:$0xf]
    %v859 = vld [vmem:[%s12 + $0x4] sm:$0xf]
    %v860 = vld [vmem:[%s12 + $0x8] sm:$0xf]
    %v861 = vld [vmem:[%s12 + $0xc] sm:$0xf]
    %v862 = vld [vmem:[%s12 + $0x10] sm:$0xf]
    %v863 = vld [vmem:[%s12 + $0x14] sm:$0xf]
    %v864 = vld [vmem:[%s12 + $0x18] sm:$0xf]
    %v865 = vld [vmem:[%s12 + $0x1c] sm:$0xf]
    %v866 = vld [vmem:[%s12 + $0x20] sm:$0xf]
    %v867 = vld [vmem:[%s12 + $0x24] sm:$0xf]
    %v868 = vld [vmem:[%s12 + $0x28] sm:$0xf]
    %v869 = vld [vmem:[%s12 + $0x2c] sm:$0xf]
    %v870 = vld [vmem:[%s12 + $0x30] sm:$0xf]
    %v871 = vld [vmem:[%s12 + $0x34] sm:$0xf]
    %v872 = vld [vmem:[%s12 + $0x38] sm:$0xf]
    %v873 = vld [vmem:[%s12 + $0x3c] sm:$0xf]
    %v874 = vld [vmem:[%s13] sm:$0x1]
    %v875 = vpack.c.bf16 %v826, %v825
    %v876 = vpack.c.bf16 %v828, %v827
    %v877 = vpack.c.bf16 %v830, %v829
    %v878 = vpack.c.bf16 %v832, %v831
    %v879 = vpack.c.bf16 %v834, %v833
    %v880 = vpack.c.bf16 %v836, %v835
    %v881 = vpack.c.bf16 %v838, %v837
    %v882 = vpack.c.bf16 %v840, %v839
    %v884 = vperm.slane %v857, 0
    %v902 = vunpack.c.l.b16 %v841
    %v903 = vunpack.c.l.b16 %v842
    %v904 = vunpack.c.l.b16 %v843
    %v905 = vunpack.c.l.b16 %v844
    %v906 = vunpack.c.l.b16 %v845
    %v907 = vunpack.c.l.b16 %v846
    %v908 = vunpack.c.l.b16 %v847
    %v909 = vunpack.c.l.b16 %v848
    %v910 = vunpack.c.l.b16 %v849
    %v911 = vunpack.c.l.b16 %v850
    %v912 = vunpack.c.l.b16 %v851
    %v913 = vunpack.c.l.b16 %v852
    %v914 = vunpack.c.l.b16 %v853
    %v915 = vunpack.c.l.b16 %v854
    %v916 = vunpack.c.l.b16 %v855
    %v917 = vunpack.c.l.b16 %v856
    %v918 = vpack.c.b16 %v903, %v902
    %v919 = vpack.c.b16 %v905, %v904
    %v920 = vpack.c.b16 %v907, %v906
    %v921 = vpack.c.b16 %v909, %v908
    %v922 = vpack.c.b16 %v911, %v910
    %v923 = vpack.c.b16 %v913, %v912
    %v924 = vpack.c.b16 %v915, %v914
    %v925 = vpack.c.b16 %v917, %v916
    %934 = vmatpush.bf16.msra.mxu0 %v925
    %935 = vmatpush.bf16.msra.mxu0 %v924
    %936 = vmatpush.bf16.msra.mxu0 %v923
    %937 = vmatpush.bf16.msra.mxu0 %v922
    %938 = vmatpush.bf16.msra.mxu0 %v921
    %939 = vmatpush.bf16.msra.mxu0 %v920
    %940 = vmatpush.bf16.msra.mxu0 %v919
    %941 = vmatpush.bf16.msra.mxu0 %v918
    %942 = vmatmul.bf16.gmra.mxu0 %v875
    %v943 = vpop.f32.mrf.mxu0
    %v944 = vadd.f32 %v884, %v943
    %v945 = vpop.f32.mrf.mxu0
    %v946 = vadd.f32 %v884, %v945
    %947 = vmatmul.bf16.gmra.mxu0 %v876
    %v948 = vpop.f32.mrf.mxu0
    %v949 = vadd.f32 %v884, %v948
    %v950 = vpop.f32.mrf.mxu0
    %v951 = vadd.f32 %v884, %v950
    %952 = vmatmul.bf16.gmra.mxu0 %v877
    %v953 = vpop.f32.mrf.mxu0
    %v954 = vadd.f32 %v884, %v953
    %v955 = vpop.f32.mrf.mxu0
    %v956 = vadd.f32 %v884, %v955
    %957 = vmatmul.bf16.gmra.mxu0 %v878
    %v958 = vpop.f32.mrf.mxu0
    %v959 = vadd.f32 %v884, %v958
    %v960 = vpop.f32.mrf.mxu0
    %v961 = vadd.f32 %v884, %v960
    %962 = vmatmul.bf16.gmra.mxu0 %v879
    %v963 = vpop.f32.mrf.mxu0
    %v964 = vadd.f32 %v884, %v963
    %v965 = vpop.f32.mrf.mxu0
    %v966 = vadd.f32 %v884, %v965
    %967 = vmatmul.bf16.gmra.mxu0 %v880
    %v968 = vpop.f32.mrf.mxu0
    %v969 = vadd.f32 %v884, %v968
    %v970 = vpop.f32.mrf.mxu0
    %v971 = vadd.f32 %v884, %v970
    %972 = vmatmul.bf16.gmra.mxu0 %v881
    %v973 = vpop.f32.mrf.mxu0
    %v974 = vadd.f32 %v884, %v973
    %v975 = vpop.f32.mrf.mxu0
    %v976 = vadd.f32 %v884, %v975
    %977 = vmatmul.bf16.gmra.mxu0 %v882
    %v978 = vpop.f32.mrf.mxu0
    %v979 = vadd.f32 %v884, %v978
    %v980 = vpop.f32.mrf.mxu0
    %v981 = vadd.f32 %v884, %v980
    %982 = vdwg.mxu0
    %v983 = vmax.f32 %v944, 0.0
    %v984 = vmax.f32 %v946, 0.0
    %v985 = vmax.f32 %v949, 0.0
    %v986 = vmax.f32 %v951, 0.0
    %v987 = vmax.f32 %v954, 0.0
    %v988 = vmax.f32 %v956, 0.0
    %v989 = vmax.f32 %v959, 0.0
    %v990 = vmax.f32 %v961, 0.0
    %v991 = vmax.f32 %v964, 0.0
    %v992 = vmax.f32 %v966, 0.0
    %v993 = vmax.f32 %v969, 0.0
    %v994 = vmax.f32 %v971, 0.0
    %v995 = vmax.f32 %v974, 0.0
    %v996 = vmax.f32 %v976, 0.0
    %v997 = vmax.f32 %v979, 0.0
    %v998 = vmax.f32 %v981, 0.0
    %v999 = vpack.c.bf16 %v984, %v983
    %v1000 = vpack.c.bf16 %v986, %v985
    %v1001 = vpack.c.bf16 %v988, %v987
    %v1002 = vpack.c.bf16 %v990, %v989
    %v1003 = vpack.c.bf16 %v992, %v991
    %v1004 = vpack.c.bf16 %v994, %v993
    %v1005 = vpack.c.bf16 %v996, %v995
    %v1006 = vpack.c.bf16 %v998, %v997
    %v1008 = vperm.slane %v874, 0
    %v1026 = vunpack.c.l.b16 %v858
    %v1027 = vunpack.c.l.b16 %v859
    %v1028 = vunpack.c.l.b16 %v860
    %v1029 = vunpack.c.l.b16 %v861
    %v1030 = vunpack.c.l.b16 %v862
    %v1031 = vunpack.c.l.b16 %v863
    %v1032 = vunpack.c.l.b16 %v864
    %v1033 = vunpack.c.l.b16 %v865
    %v1034 = vunpack.c.l.b16 %v866
    %v1035 = vunpack.c.l.b16 %v867
    %v1036 = vunpack.c.l.b16 %v868
    %v1037 = vunpack.c.l.b16 %v869
    %v1038 = vunpack.c.l.b16 %v870
    %v1039 = vunpack.c.l.b16 %v871
    %v1040 = vunpack.c.l.b16 %v872
    %v1041 = vunpack.c.l.b16 %v873
    %v1042 = vpack.c.b16 %v1027, %v1026
    %v1043 = vpack.c.b16 %v1029, %v1028
    %v1044 = vpack.c.b16 %v1031, %v1030
    %v1045 = vpack.c.b16 %v1033, %v1032
    %v1046 = vpack.c.b16 %v1035, %v1034
    %v1047 = vpack.c.b16 %v1037, %v1036
    %v1048 = vpack.c.b16 %v1039, %v1038
    %v1049 = vpack.c.b16 %v1041, %v1040
    %1058 = vmatpush.bf16.msra.mxu0 %v1049
    %1059 = vmatpush.bf16.msra.mxu0 %v1048
    %1060 = vmatpush.bf16.msra.mxu0 %v1047
    %1061 = vmatpush.bf16.msra.mxu0 %v1046
    %1062 = vmatpush.bf16.msra.mxu0 %v1045
    %1063 = vmatpush.bf16.msra.mxu0 %v1044
    %1064 = vmatpush.bf16.msra.mxu0 %v1043
    %1065 = vmatpush.bf16.msra.mxu0 %v1042
    %1066 = vmatmul.bf16.gmra.mxu0 %v999
    %v1067 = vpop.f32.mrf.mxu0
    %v1068 = vadd.f32 %v1008, %v1067
    %v1069 = vpop.f32.mrf.mxu0
    %v1070 = vadd.f32 %v1008, %v1069
    %1071 = vmatmul.bf16.gmra.mxu0 %v1000
    %v1072 = vpop.f32.mrf.mxu0
    %v1073 = vadd.f32 %v1008, %v1072
    %v1074 = vpop.f32.mrf.mxu0
    %v1075 = vadd.f32 %v1008, %v1074
    %1076 = vmatmul.bf16.gmra.mxu0 %v1001
    %v1077 = vpop.f32.mrf.mxu0
    %v1078 = vadd.f32 %v1008, %v1077
    %v1079 = vpop.f32.mrf.mxu0
    %v1080 = vadd.f32 %v1008, %v1079
    %1081 = vmatmul.bf16.gmra.mxu0 %v1002
    %v1082 = vpop.f32.mrf.mxu0
    %v1083 = vadd.f32 %v1008, %v1082
    %v1084 = vpop.f32.mrf.mxu0
    %v1085 = vadd.f32 %v1008, %v1084
    %1086 = vmatmul.bf16.gmra.mxu0 %v1003
    %v1087 = vpop.f32.mrf.mxu0
    %v1088 = vadd.f32 %v1008, %v1087
    %v1089 = vpop.f32.mrf.mxu0
    %v1090 = vadd.f32 %v1008, %v1089
    %1091 = vmatmul.bf16.gmra.mxu0 %v1004
    %v1092 = vpop.f32.mrf.mxu0
    %v1093 = vadd.f32 %v1008, %v1092
    %v1094 = vpop.f32.mrf.mxu0
    %v1095 = vadd.f32 %v1008, %v1094
    %1096 = vmatmul.bf16.gmra.mxu0 %v1005
    %v1097 = vpop.f32.mrf.mxu0
    %v1098 = vadd.f32 %v1008, %v1097
    %v1099 = vpop.f32.mrf.mxu0
    %v1100 = vadd.f32 %v1008, %v1099
    %1101 = vmatmul.bf16.gmra.mxu0 %v1006
    %v1102 = vpop.f32.mrf.mxu0
    %v1103 = vadd.f32 %v1008, %v1102
    %v1104 = vpop.f32.mrf.mxu0
    %v1105 = vadd.f32 %v1008, %v1104
    %1106 = vdwg.mxu0
    %v1107 = vmax.f32 %v1068, 0.0
    %v1108 = vmax.f32 %v1070, 0.0
    %v1109 = vmax.f32 %v1073, 0.0
    %v1110 = vmax.f32 %v1075, 0.0
    %v1111 = vmax.f32 %v1078, 0.0
    %v1112 = vmax.f32 %v1080, 0.0
    %v1113 = vmax.f32 %v1083, 0.0
    %v1114 = vmax.f32 %v1085, 0.0
    %v1115 = vmax.f32 %v1088, 0.0
    %v1116 = vmax.f32 %v1090, 0.0
    %v1117 = vmax.f32 %v1093, 0.0
    %v1118 = vmax.f32 %v1095, 0.0
    %v1119 = vmax.f32 %v1098, 0.0
    %v1120 = vmax.f32 %v1100, 0.0
    %v1121 = vmax.f32 %v1103, 0.0
    %v1122 = vmax.f32 %v1105, 0.0
    %v1123 = vadd.f32 %v825, %v1107
    %v1124 = vadd.f32 %v826, %v1108
    %v1125 = vadd.f32 %v827, %v1109
    %v1126 = vadd.f32 %v828, %v1110
    %v1127 = vadd.f32 %v829, %v1111
    %v1128 = vadd.f32 %v830, %v1112
    %v1129 = vadd.f32 %v831, %v1113
    %v1130 = vadd.f32 %v832, %v1114
    %v1131 = vadd.f32 %v833, %v1115
    %v1132 = vadd.f32 %v834, %v1116
    %v1133 = vadd.f32 %v835, %v1117
    %v1134 = vadd.f32 %v836, %v1118
    %v1135 = vadd.f32 %v837, %v1119
    %v1136 = vadd.f32 %v838, %v1120
    %v1137 = vadd.f32 %v839, %v1121
    %v1138 = vadd.f32 %v840, %v1122
    %v1139 = vpack.c.bf16 %v1123, %v1123
    %v1140 = vpack.c.bf16 %v1124, %v1124
    %v1141 = vpack.c.bf16 %v1125, %v1125
    %v1142 = vpack.c.bf16 %v1126, %v1126
    %v1143 = vpack.c.bf16 %v1127, %v1127
    %v1144 = vpack.c.bf16 %v1128, %v1128
    %v1145 = vpack.c.bf16 %v1129, %v1129
    %v1146 = vpack.c.bf16 %v1130, %v1130
    %v1147 = vpack.c.bf16 %v1131, %v1131
    %v1148 = vpack.c.bf16 %v1132, %v1132
    %v1149 = vpack.c.bf16 %v1133, %v1133
    %v1150 = vpack.c.bf16 %v1134, %v1134
    %v1151 = vpack.c.bf16 %v1135, %v1135
    %v1152 = vpack.c.bf16 %v1136, %v1136
    %v1153 = vpack.c.bf16 %v1137, %v1137
    %v1154 = vpack.c.bf16 %v1138, %v1138
    %1155 = vst [vmem:[#allocation2] sm:$0xf] %v1139
    %1156 = vst [vmem:[#allocation2 + $0x4] sm:$0xf] %v1140
    %1157 = vst [vmem:[#allocation2 + $0x8] sm:$0xf] %v1141
    %1158 = vst [vmem:[#allocation2 + $0xc] sm:$0xf] %v1142
    %1159 = vst [vmem:[#allocation2 + $0x10] sm:$0xf] %v1143
    %1160 = vst [vmem:[#allocation2 + $0x14] sm:$0xf] %v1144
    %1161 = vst [vmem:[#allocation2 + $0x18] sm:$0xf] %v1145
    %1162 = vst [vmem:[#allocation2 + $0x1c] sm:$0xf] %v1146
    %1163 = vst [vmem:[#allocation2 + $0x20] sm:$0xf] %v1147
    %1164 = vst [vmem:[#allocation2 + $0x24] sm:$0xf] %v1148
    %1165 = vst [vmem:[#allocation2 + $0x28] sm:$0xf] %v1149
    %1166 = vst [vmem:[#allocation2 + $0x2c] sm:$0xf] %v1150
    %1167 = vst [vmem:[#allocation2 + $0x30] sm:$0xf] %v1151
    %1168 = vst [vmem:[#allocation2 + $0x34] sm:$0xf] %v1152
    %1169 = vst [vmem:[#allocation2 + $0x38] sm:$0xf] %v1153
    %1170 = vst [vmem:[#allocation2 + $0x3c] sm:$0xf] %v1154
    %1171 = vst [vmem:[#allocation3] sm:$0x1] -1e+30
    %1172 = vst [vmem:[#allocation4] sm:$0x1] 0.0
  $region61: #{score_sbl_hmm.2} parent=0 // pred_fallthru
    _
  %v1173 = vld [vmem:[%s5] sm:$0xf]
  %v1174 = vld [vmem:[%s5 + $0x4] sm:$0xf]
  %v1175 = vld [vmem:[%s5 + $0x8] sm:$0xf]
  %v1176 = vld [vmem:[%s5 + $0xc] sm:$0xf]
  %v1177 = vld [vmem:[%s5 + $0x10] sm:$0xf]
  %v1178 = vld [vmem:[%s5 + $0x14] sm:$0xf]
  %v1179 = vld [vmem:[%s5 + $0x18] sm:$0xf]
  %v1180 = vld [vmem:[%s5 + $0x1c] sm:$0xf]
  %v1181 = vld [vmem:[%s5 + $0x20] sm:$0xf]
  %v1182 = vld [vmem:[%s5 + $0x24] sm:$0xf]
  %v1183 = vld [vmem:[%s5 + $0x28] sm:$0xf]
  %v1184 = vld [vmem:[%s5 + $0x2c] sm:$0xf]
  %v1185 = vld [vmem:[%s5 + $0x30] sm:$0xf]
  %v1186 = vld [vmem:[%s5 + $0x34] sm:$0xf]
  %v1187 = vld [vmem:[%s5 + $0x38] sm:$0xf]
  %v1188 = vld [vmem:[%s5 + $0x3c] sm:$0xf]
  %v1189 = vld [vmem:[%s5 + $0x40] sm:$0xf]
  %v1190 = vld [vmem:[%s5 + $0x44] sm:$0xf]
  %v1191 = vld [vmem:[%s5 + $0x48] sm:$0xf]
  %v1192 = vld [vmem:[%s5 + $0x4c] sm:$0xf]
  %v1193 = vld [vmem:[%s5 + $0x50] sm:$0xf]
  %v1194 = vld [vmem:[%s5 + $0x54] sm:$0xf]
  %v1195 = vld [vmem:[%s5 + $0x58] sm:$0xf]
  %v1196 = vld [vmem:[%s5 + $0x5c] sm:$0xf]
  %v1197 = vld [vmem:[%s5 + $0x60] sm:$0xf]
  %v1198 = vld [vmem:[%s5 + $0x64] sm:$0xf]
  %v1199 = vld [vmem:[%s5 + $0x68] sm:$0xf]
  %v1200 = vld [vmem:[%s5 + $0x6c] sm:$0xf]
  %v1201 = vld [vmem:[%s5 + $0x70] sm:$0xf]
  %v1202 = vld [vmem:[%s5 + $0x74] sm:$0xf]
  %v1203 = vld [vmem:[%s5 + $0x78] sm:$0xf]
  %v1204 = vld [vmem:[%s5 + $0x7c] sm:$0xf]
  %v1205 = vld [vmem:[#allocation2] sm:$0xf]
  %v1206 = vld [vmem:[#allocation2 + $0x4] sm:$0xf]
  %v1207 = vld [vmem:[#allocation2 + $0x8] sm:$0xf]
  %v1208 = vld [vmem:[#allocation2 + $0xc] sm:$0xf]
  %v1209 = vld [vmem:[#allocation2 + $0x10] sm:$0xf]
  %v1210 = vld [vmem:[#allocation2 + $0x14] sm:$0xf]
  %v1211 = vld [vmem:[#allocation2 + $0x18] sm:$0xf]
  %v1212 = vld [vmem:[#allocation2 + $0x1c] sm:$0xf]
  %v1213 = vld [vmem:[#allocation2 + $0x20] sm:$0xf]
  %v1214 = vld [vmem:[#allocation2 + $0x24] sm:$0xf]
  %v1215 = vld [vmem:[#allocation2 + $0x28] sm:$0xf]
  %v1216 = vld [vmem:[#allocation2 + $0x2c] sm:$0xf]
  %v1217 = vld [vmem:[#allocation2 + $0x30] sm:$0xf]
  %v1218 = vld [vmem:[#allocation2 + $0x34] sm:$0xf]
  %v1219 = vld [vmem:[#allocation2 + $0x38] sm:$0xf]
  %v1220 = vld [vmem:[#allocation2 + $0x3c] sm:$0xf]
  %v1253 = vunpack.c.l.b16 %v1173
  %v1254 = vunpack.c.l.b16 %v1174
  %v1255 = vunpack.c.l.b16 %v1175
  %v1256 = vunpack.c.l.b16 %v1176
  %v1257 = vunpack.c.l.b16 %v1177
  %v1258 = vunpack.c.l.b16 %v1178
  %v1259 = vunpack.c.l.b16 %v1179
  %v1260 = vunpack.c.l.b16 %v1180
  %v1261 = vunpack.c.l.b16 %v1181
  %v1262 = vunpack.c.l.b16 %v1182
  %v1263 = vunpack.c.l.b16 %v1183
  %v1264 = vunpack.c.l.b16 %v1184
  %v1265 = vunpack.c.l.b16 %v1185
  %v1266 = vunpack.c.l.b16 %v1186
  %v1267 = vunpack.c.l.b16 %v1187
  %v1268 = vunpack.c.l.b16 %v1188
  %v1269 = vunpack.c.l.b16 %v1189
  %v1270 = vunpack.c.l.b16 %v1190
  %v1271 = vunpack.c.l.b16 %v1191
  %v1272 = vunpack.c.l.b16 %v1192
  %v1273 = vunpack.c.l.b16 %v1193
  %v1274 = vunpack.c.l.b16 %v1194
  %v1275 = vunpack.c.l.b16 %v1195
  %v1276 = vunpack.c.l.b16 %v1196
  %v1277 = vunpack.c.l.b16 %v1197
  %v1278 = vunpack.c.l.b16 %v1198
  %v1279 = vunpack.c.l.b16 %v1199
  %v1280 = vunpack.c.l.b16 %v1200
  %v1281 = vunpack.c.l.b16 %v1201
  %v1282 = vunpack.c.l.b16 %v1202
  %v1283 = vunpack.c.l.b16 %v1203
  %v1284 = vunpack.c.l.b16 %v1204
  %v1285 = vpack.c.b16 %v1254, %v1253
  %v1286 = vpack.c.b16 %v1256, %v1255
  %v1287 = vpack.c.b16 %v1258, %v1257
  %v1288 = vpack.c.b16 %v1260, %v1259
  %v1289 = vpack.c.b16 %v1262, %v1261
  %v1290 = vpack.c.b16 %v1264, %v1263
  %v1291 = vpack.c.b16 %v1266, %v1265
  %v1292 = vpack.c.b16 %v1268, %v1267
  %v1293 = vpack.c.b16 %v1270, %v1269
  %v1294 = vpack.c.b16 %v1272, %v1271
  %v1295 = vpack.c.b16 %v1274, %v1273
  %v1296 = vpack.c.b16 %v1276, %v1275
  %v1297 = vpack.c.b16 %v1278, %v1277
  %v1298 = vpack.c.b16 %v1280, %v1279
  %v1299 = vpack.c.b16 %v1282, %v1281
  %v1300 = vpack.c.b16 %v1284, %v1283
  %v1333 = vunpack.c.l.b16 %v1205
  %v1334 = vunpack.c.l.b16 %v1206
  %v1335 = vunpack.c.l.b16 %v1207
  %v1336 = vunpack.c.l.b16 %v1208
  %v1337 = vunpack.c.l.b16 %v1209
  %v1338 = vunpack.c.l.b16 %v1210
  %v1339 = vunpack.c.l.b16 %v1211
  %v1340 = vunpack.c.l.b16 %v1212
  %v1341 = vunpack.c.l.b16 %v1213
  %v1342 = vunpack.c.l.b16 %v1214
  %v1343 = vunpack.c.l.b16 %v1215
  %v1344 = vunpack.c.l.b16 %v1216
  %v1345 = vunpack.c.l.b16 %v1217
  %v1346 = vunpack.c.l.b16 %v1218
  %v1347 = vunpack.c.l.b16 %v1219
  %v1348 = vunpack.c.l.b16 %v1220
  %v1349 = vpack.c.b16 %v1334, %v1333
  %v1350 = vpack.c.b16 %v1336, %v1335
  %v1351 = vpack.c.b16 %v1338, %v1337
  %v1352 = vpack.c.b16 %v1340, %v1339
  %v1353 = vpack.c.b16 %v1342, %v1341
  %v1354 = vpack.c.b16 %v1344, %v1343
  %v1355 = vpack.c.b16 %v1346, %v1345
  %v1356 = vpack.c.b16 %v1348, %v1347
  %1365 = vmatpush.bf16.xpose.msra.mxu0 %v1356
  %1366 = vmatpush.bf16.xpose.msra.mxu0 %v1355
  %1367 = vmatpush.bf16.xpose.msra.mxu0 %v1354
  %1368 = vmatpush.bf16.xpose.msra.mxu0 %v1353
  %1369 = vmatpush.bf16.xpose.msra.mxu0 %v1352
  %1370 = vmatpush.bf16.xpose.msra.mxu0 %v1351
  %1371 = vmatpush.bf16.xpose.msra.mxu0 %v1350
  %1372 = vmatpush.bf16.xpose.msra.mxu0 %v1349
  %1373 = vmatmul.bf16.gmra.mxu0 %v1285
  %v1374 = vpop.f32.mrf.mxu0
  %v1375 = vadd.f32 0.0, %v1374
  %v1376 = vpop.f32.mrf.mxu0
  %v1377 = vadd.f32 0.0, %v1376
  %1378 = vmatmul.bf16.gmra.mxu0 %v1286
  %v1379 = vpop.f32.mrf.mxu0
  %v1380 = vadd.f32 0.0, %v1379
  %v1381 = vpop.f32.mrf.mxu0
  %v1382 = vadd.f32 0.0, %v1381
  %1383 = vmatmul.bf16.gmra.mxu0 %v1287
  %v1384 = vpop.f32.mrf.mxu0
  %v1385 = vadd.f32 0.0, %v1384
  %v1386 = vpop.f32.mrf.mxu0
  %v1387 = vadd.f32 0.0, %v1386
  %1388 = vmatmul.bf16.gmra.mxu0 %v1288
  %v1389 = vpop.f32.mrf.mxu0
  %v1390 = vadd.f32 0.0, %v1389
  %v1391 = vpop.f32.mrf.mxu0
  %v1392 = vadd.f32 0.0, %v1391
  %1393 = vmatmul.bf16.gmra.mxu0 %v1289
  %v1394 = vpop.f32.mrf.mxu0
  %v1395 = vadd.f32 0.0, %v1394
  %v1396 = vpop.f32.mrf.mxu0
  %v1397 = vadd.f32 0.0, %v1396
  %1398 = vmatmul.bf16.gmra.mxu0 %v1290
  %v1399 = vpop.f32.mrf.mxu0
  %v1400 = vadd.f32 0.0, %v1399
  %v1401 = vpop.f32.mrf.mxu0
  %v1402 = vadd.f32 0.0, %v1401
  %1403 = vmatmul.bf16.gmra.mxu0 %v1291
  %v1404 = vpop.f32.mrf.mxu0
  %v1405 = vadd.f32 0.0, %v1404
  %v1406 = vpop.f32.mrf.mxu0
  %v1407 = vadd.f32 0.0, %v1406
  %1408 = vmatmul.bf16.gmra.mxu0 %v1292
  %v1409 = vpop.f32.mrf.mxu0
  %v1410 = vadd.f32 0.0, %v1409
  %v1411 = vpop.f32.mrf.mxu0
  %v1412 = vadd.f32 0.0, %v1411
  %1413 = vmatmul.bf16.gmra.mxu0 %v1293
  %v1414 = vpop.f32.mrf.mxu0
  %v1415 = vadd.f32 0.0, %v1414
  %v1416 = vpop.f32.mrf.mxu0
  %v1417 = vadd.f32 0.0, %v1416
  %1418 = vmatmul.bf16.gmra.mxu0 %v1294
  %v1419 = vpop.f32.mrf.mxu0
  %v1420 = vadd.f32 0.0, %v1419
  %v1421 = vpop.f32.mrf.mxu0
  %v1422 = vadd.f32 0.0, %v1421
  %1423 = vmatmul.bf16.gmra.mxu0 %v1295
  %v1424 = vpop.f32.mrf.mxu0
  %v1425 = vadd.f32 0.0, %v1424
  %v1426 = vpop.f32.mrf.mxu0
  %v1427 = vadd.f32 0.0, %v1426
  %1428 = vmatmul.bf16.gmra.mxu0 %v1296
  %v1429 = vpop.f32.mrf.mxu0
  %v1430 = vadd.f32 0.0, %v1429
  %v1431 = vpop.f32.mrf.mxu0
  %v1432 = vadd.f32 0.0, %v1431
  %1433 = vmatmul.bf16.gmra.mxu0 %v1297
  %v1434 = vpop.f32.mrf.mxu0
  %v1435 = vadd.f32 0.0, %v1434
  %v1436 = vpop.f32.mrf.mxu0
  %v1437 = vadd.f32 0.0, %v1436
  %1438 = vmatmul.bf16.gmra.mxu0 %v1298
  %v1439 = vpop.f32.mrf.mxu0
  %v1440 = vadd.f32 0.0, %v1439
  %v1441 = vpop.f32.mrf.mxu0
  %v1442 = vadd.f32 0.0, %v1441
  %1443 = vmatmul.bf16.gmra.mxu0 %v1299
  %v1444 = vpop.f32.mrf.mxu0
  %v1445 = vadd.f32 0.0, %v1444
  %v1446 = vpop.f32.mrf.mxu0
  %v1447 = vadd.f32 0.0, %v1446
  %1448 = vmatmul.bf16.gmra.mxu0 %v1300
  %v1449 = vpop.f32.mrf.mxu0
  %v1450 = vadd.f32 0.0, %v1449
  %v1451 = vpop.f32.mrf.mxu0
  %v1452 = vadd.f32 0.0, %v1451
  %1453 = vdwg.mxu0
  %v1454 = vld [vmem:[%s3] sm:$0xff]
  %v1455 = vld [vmem:[%s3 + $0x8] sm:$0xff]
  %v1456 = vld [vmem:[%s3 + $0x10] sm:$0xff]
  %v1457 = vld [vmem:[%s3 + $0x18] sm:$0xff]
  %v1458 = vld [vmem:[%s3 + $0x20] sm:$0xff]
  %v1459 = vld [vmem:[%s3 + $0x28] sm:$0xff]
  %v1460 = vld [vmem:[%s3 + $0x30] sm:$0xff]
  %v1461 = vld [vmem:[%s3 + $0x38] sm:$0xff]
  %v1462 = vld [vmem:[%s3 + $0x40] sm:$0xff]
  %v1463 = vld [vmem:[%s3 + $0x48] sm:$0xff]
  %v1464 = vld [vmem:[%s3 + $0x50] sm:$0xff]
  %v1465 = vld [vmem:[%s3 + $0x58] sm:$0xff]
  %v1466 = vld [vmem:[%s3 + $0x60] sm:$0xff]
  %v1467 = vld [vmem:[%s3 + $0x68] sm:$0xff]
  %v1468 = vld [vmem:[%s3 + $0x70] sm:$0xff]
  %v1469 = vld [vmem:[%s3 + $0x78] sm:$0xff]
  %v1470 = vld [vmem:[%s3 + $0x80] sm:$0xff]
  %v1471 = vld [vmem:[%s3 + $0x88] sm:$0xff]
  %v1472 = vld [vmem:[%s3 + $0x90] sm:$0xff]
  %v1473 = vld [vmem:[%s3 + $0x98] sm:$0xff]
  %v1474 = vld [vmem:[%s3 + $0xa0] sm:$0xff]
  %v1475 = vld [vmem:[%s3 + $0xa8] sm:$0xff]
  %v1476 = vld [vmem:[%s3 + $0xb0] sm:$0xff]
  %v1477 = vld [vmem:[%s3 + $0xb8] sm:$0xff]
  %v1478 = vld [vmem:[%s3 + $0xc0] sm:$0xff]
  %v1479 = vld [vmem:[%s3 + $0xc8] sm:$0xff]
  %v1480 = vld [vmem:[%s3 + $0xd0] sm:$0xff]
  %v1481 = vld [vmem:[%s3 + $0xd8] sm:$0xff]
  %v1482 = vld [vmem:[%s3 + $0xe0] sm:$0xff]
  %v1483 = vld [vmem:[%s3 + $0xe8] sm:$0xff]
  %v1484 = vld [vmem:[%s3 + $0xf0] sm:$0xff]
  %v1485 = vld [vmem:[%s3 + $0xf8] sm:$0xff]
  %v1486 = vld [vmem:[%s2] sm:$0x1]
  %1487 = vset.pattern.permute.xlu0 0
  %1488 = vperm.xlu0 %1487, %v1454
  %v1489 = vpop.permute.xlu0 %1488
  %1490 = vset.pattern.permute.xlu0 0
  %1491 = vperm.xlu0 %1490, %v1455
  %v1492 = vpop.permute.xlu0 %1491
  %1493 = vset.pattern.permute.xlu0 0
  %1494 = vperm.xlu0 %1493, %v1456
  %v1495 = vpop.permute.xlu0 %1494
  %1496 = vset.pattern.permute.xlu0 0
  %1497 = vperm.xlu0 %1496, %v1457
  %v1498 = vpop.permute.xlu0 %1497
  %1499 = vset.pattern.permute.xlu0 0
  %1500 = vperm.xlu0 %1499, %v1458
  %v1501 = vpop.permute.xlu0 %1500
  %1502 = vset.pattern.permute.xlu0 0
  %1503 = vperm.xlu0 %1502, %v1459
  %v1504 = vpop.permute.xlu0 %1503
  %1505 = vset.pattern.permute.xlu0 0
  %1506 = vperm.xlu0 %1505, %v1460
  %v1507 = vpop.permute.xlu0 %1506
  %1508 = vset.pattern.permute.xlu0 0
  %1509 = vperm.xlu0 %1508, %v1461
  %v1510 = vpop.permute.xlu0 %1509
  %1511 = vset.pattern.permute.xlu0 0
  %1512 = vperm.xlu0 %1511, %v1462
  %v1513 = vpop.permute.xlu0 %1512
  %1514 = vset.pattern.permute.xlu0 0
  %1515 = vperm.xlu0 %1514, %v1463
  %v1516 = vpop.permute.xlu0 %1515
  %1517 = vset.pattern.permute.xlu0 0
  %1518 = vperm.xlu0 %1517, %v1464
  %v1519 = vpop.permute.xlu0 %1518
  %1520 = vset.pattern.permute.xlu0 0
  %1521 = vperm.xlu0 %1520, %v1465
  %v1522 = vpop.permute.xlu0 %1521
  %1523 = vset.pattern.permute.xlu0 0
  %1524 = vperm.xlu0 %1523, %v1466
  %v1525 = vpop.permute.xlu0 %1524
  %1526 = vset.pattern.permute.xlu0 0
  %1527 = vperm.xlu0 %1526, %v1467
  %v1528 = vpop.permute.xlu0 %1527
  %1529 = vset.pattern.permute.xlu0 0
  %1530 = vperm.xlu0 %1529, %v1468
  %v1531 = vpop.permute.xlu0 %1530
  %1532 = vset.pattern.permute.xlu0 0
  %1533 = vperm.xlu0 %1532, %v1469
  %v1534 = vpop.permute.xlu0 %1533
  %1535 = vset.pattern.permute.xlu0 0
  %1536 = vperm.xlu0 %1535, %v1470
  %v1537 = vpop.permute.xlu0 %1536
  %1538 = vset.pattern.permute.xlu0 0
  %1539 = vperm.xlu0 %1538, %v1471
  %v1540 = vpop.permute.xlu0 %1539
  %1541 = vset.pattern.permute.xlu0 0
  %1542 = vperm.xlu0 %1541, %v1472
  %v1543 = vpop.permute.xlu0 %1542
  %1544 = vset.pattern.permute.xlu0 0
  %1545 = vperm.xlu0 %1544, %v1473
  %v1546 = vpop.permute.xlu0 %1545
  %1547 = vset.pattern.permute.xlu0 0
  %1548 = vperm.xlu0 %1547, %v1474
  %v1549 = vpop.permute.xlu0 %1548
  %1550 = vset.pattern.permute.xlu0 0
  %1551 = vperm.xlu0 %1550, %v1475
  %v1552 = vpop.permute.xlu0 %1551
  %1553 = vset.pattern.permute.xlu0 0
  %1554 = vperm.xlu0 %1553, %v1476
  %v1555 = vpop.permute.xlu0 %1554
  %1556 = vset.pattern.permute.xlu0 0
  %1557 = vperm.xlu0 %1556, %v1477
  %v1558 = vpop.permute.xlu0 %1557
  %1559 = vset.pattern.permute.xlu0 0
  %1560 = vperm.xlu0 %1559, %v1478
  %v1561 = vpop.permute.xlu0 %1560
  %1562 = vset.pattern.permute.xlu0 0
  %1563 = vperm.xlu0 %1562, %v1479
  %v1564 = vpop.permute.xlu0 %1563
  %1565 = vset.pattern.permute.xlu0 0
  %1566 = vperm.xlu0 %1565, %v1480
  %v1567 = vpop.permute.xlu0 %1566
  %1568 = vset.pattern.permute.xlu0 0
  %1569 = vperm.xlu0 %1568, %v1481
  %v1570 = vpop.permute.xlu0 %1569
  %1571 = vset.pattern.permute.xlu0 0
  %1572 = vperm.xlu0 %1571, %v1482
  %v1573 = vpop.permute.xlu0 %1572
  %1574 = vset.pattern.permute.xlu0 0
  %1575 = vperm.xlu0 %1574, %v1483
  %v1576 = vpop.permute.xlu0 %1575
  %1577 = vset.pattern.permute.xlu0 0
  %1578 = vperm.xlu0 %1577, %v1484
  %v1579 = vpop.permute.xlu0 %1578
  %1580 = vset.pattern.permute.xlu0 0
  %1581 = vperm.xlu0 %1580, %v1485
  %v1582 = vpop.permute.xlu0 %1581
  %v1583 = vperm.slane %v1486, 0
  %vm1584 = vcmp.eq.s32.totalorder %v1489, %v1583
  %vm1585 = vcmp.eq.s32.totalorder %v1492, %v1583
  %vm1586 = vcmp.eq.s32.totalorder %v1495, %v1583
  %vm1587 = vcmp.eq.s32.totalorder %v1498, %v1583
  %vm1588 = vcmp.eq.s32.totalorder %v1501, %v1583
  %vm1589 = vcmp.eq.s32.totalorder %v1504, %v1583
  %vm1590 = vcmp.eq.s32.totalorder %v1507, %v1583
  %vm1591 = vcmp.eq.s32.totalorder %v1510, %v1583
  %vm1592 = vcmp.eq.s32.totalorder %v1513, %v1583
  %vm1593 = vcmp.eq.s32.totalorder %v1516, %v1583
  %vm1594 = vcmp.eq.s32.totalorder %v1519, %v1583
  %vm1595 = vcmp.eq.s32.totalorder %v1522, %v1583
  %vm1596 = vcmp.eq.s32.totalorder %v1525, %v1583
  %vm1597 = vcmp.eq.s32.totalorder %v1528, %v1583
  %vm1598 = vcmp.eq.s32.totalorder %v1531, %v1583
  %vm1599 = vcmp.eq.s32.totalorder %v1534, %v1583
  %vm1600 = vcmp.eq.s32.totalorder %v1537, %v1583
  %vm1601 = vcmp.eq.s32.totalorder %v1540, %v1583
  %vm1602 = vcmp.eq.s32.totalorder %v1543, %v1583
  %vm1603 = vcmp.eq.s32.totalorder %v1546, %v1583
  %vm1604 = vcmp.eq.s32.totalorder %v1549, %v1583
  %vm1605 = vcmp.eq.s32.totalorder %v1552, %v1583
  %vm1606 = vcmp.eq.s32.totalorder %v1555, %v1583
  %vm1607 = vcmp.eq.s32.totalorder %v1558, %v1583
  %vm1608 = vcmp.eq.s32.totalorder %v1561, %v1583
  %vm1609 = vcmp.eq.s32.totalorder %v1564, %v1583
  %vm1610 = vcmp.eq.s32.totalorder %v1567, %v1583
  %vm1611 = vcmp.eq.s32.totalorder %v1570, %v1583
  %vm1612 = vcmp.eq.s32.totalorder %v1573, %v1583
  %vm1613 = vcmp.eq.s32.totalorder %v1576, %v1583
  %vm1614 = vcmp.eq.s32.totalorder %v1579, %v1583
  %vm1615 = vcmp.eq.s32.totalorder %v1582, %v1583
  %v1616 = vsel %vm1584, %v1375, -inf
  %v1617 = vsel %vm1585, %v1377, -inf
  %v1618 = vsel %vm1586, %v1380, -inf
  %v1619 = vsel %vm1587, %v1382, -inf
  %v1620 = vsel %vm1588, %v1385, -inf
  %v1621 = vsel %vm1589, %v1387, -inf
  %v1622 = vsel %vm1590, %v1390, -inf
  %v1623 = vsel %vm1591, %v1392, -inf
  %v1624 = vsel %vm1592, %v1395, -inf
  %v1625 = vsel %vm1593, %v1397, -inf
  %v1626 = vsel %vm1594, %v1400, -inf
  %v1627 = vsel %vm1595, %v1402, -inf
  %v1628 = vsel %vm1596, %v1405, -inf
  %v1629 = vsel %vm1597, %v1407, -inf
  %v1630 = vsel %vm1598, %v1410, -inf
  %v1631 = vsel %vm1599, %v1412, -inf
  %v1632 = vsel %vm1600, %v1415, -inf
  %v1633 = vsel %vm1601, %v1417, -inf
  %v1634 = vsel %vm1602, %v1420, -inf
  %v1635 = vsel %vm1603, %v1422, -inf
  %v1636 = vsel %vm1604, %v1425, -inf
  %v1637 = vsel %vm1605, %v1427, -inf
  %v1638 = vsel %vm1606, %v1430, -inf
  %v1639 = vsel %vm1607, %v1432, -inf
  %v1640 = vsel %vm1608, %v1435, -inf
  %v1641 = vsel %vm1609, %v1437, -inf
  %v1642 = vsel %vm1610, %v1440, -inf
  %v1643 = vsel %vm1611, %v1442, -inf
  %v1644 = vsel %vm1612, %v1445, -inf
  %v1645 = vsel %vm1613, %v1447, -inf
  %v1646 = vsel %vm1614, %v1450, -inf
  %v1647 = vsel %vm1615, %v1452, -inf
  %v1648 = vpack.c.bf16 %v1616, %v1616
  %v1649 = vpack.c.bf16 %v1617, %v1617
  %v1650 = vpack.c.bf16 %v1618, %v1618
  %v1651 = vpack.c.bf16 %v1619, %v1619
  %v1652 = vpack.c.bf16 %v1620, %v1620
  %v1653 = vpack.c.bf16 %v1621, %v1621
  %v1654 = vpack.c.bf16 %v1622, %v1622
  %v1655 = vpack.c.bf16 %v1623, %v1623
  %v1656 = vpack.c.bf16 %v1624, %v1624
  %v1657 = vpack.c.bf16 %v1625, %v1625
  %v1658 = vpack.c.bf16 %v1626, %v1626
  %v1659 = vpack.c.bf16 %v1627, %v1627
  %v1660 = vpack.c.bf16 %v1628, %v1628
  %v1661 = vpack.c.bf16 %v1629, %v1629
  %v1662 = vpack.c.bf16 %v1630, %v1630
  %v1663 = vpack.c.bf16 %v1631, %v1631
  %v1664 = vpack.c.bf16 %v1632, %v1632
  %v1665 = vpack.c.bf16 %v1633, %v1633
  %v1666 = vpack.c.bf16 %v1634, %v1634
  %v1667 = vpack.c.bf16 %v1635, %v1635
  %v1668 = vpack.c.bf16 %v1636, %v1636
  %v1669 = vpack.c.bf16 %v1637, %v1637
  %v1670 = vpack.c.bf16 %v1638, %v1638
  %v1671 = vpack.c.bf16 %v1639, %v1639
  %v1672 = vpack.c.bf16 %v1640, %v1640
  %v1673 = vpack.c.bf16 %v1641, %v1641
  %v1674 = vpack.c.bf16 %v1642, %v1642
  %v1675 = vpack.c.bf16 %v1643, %v1643
  %v1676 = vpack.c.bf16 %v1644, %v1644
  %v1677 = vpack.c.bf16 %v1645, %v1645
  %v1678 = vpack.c.bf16 %v1646, %v1646
  %v1679 = vpack.c.bf16 %v1647, %v1647
  %1680 = vst [vmem:[%s15] sm:$0xf] %v1648
  %1681 = vst [vmem:[%s15 + $0x4] sm:$0xf] %v1649
  %1682 = vst [vmem:[%s15 + $0x8] sm:$0xf] %v1650
  %1683 = vst [vmem:[%s15 + $0xc] sm:$0xf] %v1651
  %1684 = vst [vmem:[%s15 + $0x10] sm:$0xf] %v1652
  %1685 = vst [vmem:[%s15 + $0x14] sm:$0xf] %v1653
  %1686 = vst [vmem:[%s15 + $0x18] sm:$0xf] %v1654
  %1687 = vst [vmem:[%s15 + $0x1c] sm:$0xf] %v1655
  %1688 = vst [vmem:[%s15 + $0x20] sm:$0xf] %v1656
  %1689 = vst [vmem:[%s15 + $0x24] sm:$0xf] %v1657
  %1690 = vst [vmem:[%s15 + $0x28] sm:$0xf] %v1658
  %1691 = vst [vmem:[%s15 + $0x2c] sm:$0xf] %v1659
  %1692 = vst [vmem:[%s15 + $0x30] sm:$0xf] %v1660
  %1693 = vst [vmem:[%s15 + $0x34] sm:$0xf] %v1661
  %1694 = vst [vmem:[%s15 + $0x38] sm:$0xf] %v1662
  %1695 = vst [vmem:[%s15 + $0x3c] sm:$0xf] %v1663
  %1696 = vst [vmem:[%s15 + $0x40] sm:$0xf] %v1664
  %1697 = vst [vmem:[%s15 + $0x44] sm:$0xf] %v1665
  %1698 = vst [vmem:[%s15 + $0x48] sm:$0xf] %v1666
  %1699 = vst [vmem:[%s15 + $0x4c] sm:$0xf] %v1667
  %1700 = vst [vmem:[%s15 + $0x50] sm:$0xf] %v1668
  %1701 = vst [vmem:[%s15 + $0x54] sm:$0xf] %v1669
  %1702 = vst [vmem:[%s15 + $0x58] sm:$0xf] %v1670
  %1703 = vst [vmem:[%s15 + $0x5c] sm:$0xf] %v1671
  %1704 = vst [vmem:[%s15 + $0x60] sm:$0xf] %v1672
  %1705 = vst [vmem:[%s15 + $0x64] sm:$0xf] %v1673
  %1706 = vst [vmem:[%s15 + $0x68] sm:$0xf] %v1674
  %1707 = vst [vmem:[%s15 + $0x6c] sm:$0xf] %v1675
  %1708 = vst [vmem:[%s15 + $0x70] sm:$0xf] %v1676
  %1709 = vst [vmem:[%s15 + $0x74] sm:$0xf] %v1677
  %1710 = vst [vmem:[%s15 + $0x78] sm:$0xf] %v1678
  %1711 = vst [vmem:[%s15 + $0x7c] sm:$0xf] %v1679
  %v1712 = vmax.f32 %v1616, %v1620
  %v1713 = vmax.f32 %v1617, %v1621
  %v1714 = vmax.f32 %v1618, %v1622
  %v1715 = vmax.f32 %v1619, %v1623
  %v1716 = vmax.f32 %v1712, %v1624
  %v1717 = vmax.f32 %v1713, %v1625
  %v1718 = vmax.f32 %v1714, %v1626
  %v1719 = vmax.f32 %v1715, %v1627
  %v1720 = vmax.f32 %v1716, %v1628
  %v1721 = vmax.f32 %v1717, %v1629
  %v1722 = vmax.f32 %v1718, %v1630
  %v1723 = vmax.f32 %v1719, %v1631
  %v1724 = vmax.f32 %v1720, %v1632
  %v1725 = vmax.f32 %v1721, %v1633
  %v1726 = vmax.f32 %v1722, %v1634
  %v1727 = vmax.f32 %v1723, %v1635
  %v1728 = vmax.f32 %v1724, %v1636
  %v1729 = vmax.f32 %v1725, %v1637
  %v1730 = vmax.f32 %v1726, %v1638
  %v1731 = vmax.f32 %v1727, %v1639
  %v1732 = vmax.f32 %v1728, %v1640
  %v1733 = vmax.f32 %v1729, %v1641
  %v1734 = vmax.f32 %v1730, %v1642
  %v1735 = vmax.f32 %v1731, %v1643
  %v1736 = vmax.f32 %v1732, %v1644
  %v1737 = vmax.f32 %v1733, %v1645
  %v1738 = vmax.f32 %v1734, %v1646
  %v1739 = vmax.f32 %v1735, %v1647
  %v1740 = vmax.f32 %v1736, %v1737
  %v1741 = vmax.f32 %v1738, %v1739
  %v1742 = vmax.f32 %v1740, %v1741
  %v1743 = vrot.slane %v1742, 4
  %v1744 = vmax.f32 %v1742, %v1743
  %v1745 = vrot.slane %v1744, 2
  %v1746 = vmax.f32 %v1744, %v1745
  %v1747 = vrot.slane %v1746, 1
  %v1748 = vmax.f32 %v1746, %v1747
  %v1749 = vld [vmem:[#allocation3] sm:$0x1]
  %v1750 = vmax.f32 %v1749, %v1748
  %v1751 = vld [vmem:[#allocation4] sm:$0x1]
  %v1752 = vsub.f32 %v1749, %v1750
  %v1753 = vmul.f32 %v1752, 1.442695
  %v1754 = vpow.pop %v1753
  %v1755 = vmul.f32 %v1751, %v1754
  %v1757 = vperm.slane %v1750, 0
  %v1759 = vsub.f32 %v1616, %v1757
  %v1760 = vsub.f32 %v1617, %v1757
  %v1761 = vsub.f32 %v1618, %v1757
  %v1762 = vsub.f32 %v1619, %v1757
  %v1763 = vsub.f32 %v1620, %v1757
  %v1764 = vsub.f32 %v1621, %v1757
  %v1765 = vsub.f32 %v1622, %v1757
  %v1766 = vsub.f32 %v1623, %v1757
  %v1767 = vsub.f32 %v1624, %v1757
  %v1768 = vsub.f32 %v1625, %v1757
  %v1769 = vsub.f32 %v1626, %v1757
  %v1770 = vsub.f32 %v1627, %v1757
  %v1771 = vsub.f32 %v1628, %v1757
  %v1772 = vsub.f32 %v1629, %v1757
  %v1773 = vsub.f32 %v1630, %v1757
  %v1774 = vsub.f32 %v1631, %v1757
  %v1775 = vsub.f32 %v1632, %v1757
  %v1776 = vsub.f32 %v1633, %v1757
  %v1777 = vsub.f32 %v1634, %v1757
  %v1778 = vsub.f32 %v1635, %v1757
  %v1779 = vsub.f32 %v1636, %v1757
  %v1780 = vsub.f32 %v1637, %v1757
  %v1781 = vsub.f32 %v1638, %v1757
  %v1782 = vsub.f32 %v1639, %v1757
  %v1783 = vsub.f32 %v1640, %v1757
  %v1784 = vsub.f32 %v1641, %v1757
  %v1785 = vsub.f32 %v1642, %v1757
  %v1786 = vsub.f32 %v1643, %v1757
  %v1787 = vsub.f32 %v1644, %v1757
  %v1788 = vsub.f32 %v1645, %v1757
  %v1789 = vsub.f32 %v1646, %v1757
  %v1790 = vsub.f32 %v1647, %v1757
  %v1791 = vmul.f32 %v1759, 1.442695
  %v1792 = vpow.pop %v1791
  %v1793 = vmul.f32 %v1760, 1.442695
  %v1794 = vpow.pop %v1793
  %v1795 = vmul.f32 %v1761, 1.442695
  %v1796 = vpow.pop %v1795
  %v1797 = vmul.f32 %v1762, 1.442695
  %v1798 = vpow.pop %v1797
  %v1799 = vmul.f32 %v1763, 1.442695
  %v1800 = vpow.pop %v1799
  %v1801 = vmul.f32 %v1764, 1.442695
  %v1802 = vpow.pop %v1801
  %v1803 = vmul.f32 %v1765, 1.442695
  %v1804 = vpow.pop %v1803
  %v1805 = vmul.f32 %v1766, 1.442695
  %v1806 = vpow.pop %v1805
  %v1807 = vmul.f32 %v1767, 1.442695
  %v1808 = vpow.pop %v1807
  %v1809 = vmul.f32 %v1768, 1.442695
  %v1810 = vpow.pop %v1809
  %v1811 = vmul.f32 %v1769, 1.442695
  %v1812 = vpow.pop %v1811
  %v1813 = vmul.f32 %v1770, 1.442695
  %v1814 = vpow.pop %v1813
  %v1815 = vmul.f32 %v1771, 1.442695
  %v1816 = vpow.pop %v1815
  %v1817 = vmul.f32 %v1772, 1.442695
  %v1818 = vpow.pop %v1817
  %v1819 = vmul.f32 %v1773, 1.442695
  %v1820 = vpow.pop %v1819
  %v1821 = vmul.f32 %v1774, 1.442695
  %v1822 = vpow.pop %v1821
  %v1823 = vmul.f32 %v1775, 1.442695
  %v1824 = vpow.pop %v1823
  %v1825 = vmul.f32 %v1776, 1.442695
  %v1826 = vpow.pop %v1825
  %v1827 = vmul.f32 %v1777, 1.442695
  %v1828 = vpow.pop %v1827
  %v1829 = vmul.f32 %v1778, 1.442695
  %v1830 = vpow.pop %v1829
  %v1831 = vmul.f32 %v1779, 1.442695
  %v1832 = vpow.pop %v1831
  %v1833 = vmul.f32 %v1780, 1.442695
  %v1834 = vpow.pop %v1833
  %v1835 = vmul.f32 %v1781, 1.442695
  %v1836 = vpow.pop %v1835
  %v1837 = vmul.f32 %v1782, 1.442695
  %v1838 = vpow.pop %v1837
  %v1839 = vmul.f32 %v1783, 1.442695
  %v1840 = vpow.pop %v1839
  %v1841 = vmul.f32 %v1784, 1.442695
  %v1842 = vpow.pop %v1841
  %v1843 = vmul.f32 %v1785, 1.442695
  %v1844 = vpow.pop %v1843
  %v1845 = vmul.f32 %v1786, 1.442695
  %v1846 = vpow.pop %v1845
  %v1847 = vmul.f32 %v1787, 1.442695
  %v1848 = vpow.pop %v1847
  %v1849 = vmul.f32 %v1788, 1.442695
  %v1850 = vpow.pop %v1849
  %v1851 = vmul.f32 %v1789, 1.442695
  %v1852 = vpow.pop %v1851
  %v1853 = vmul.f32 %v1790, 1.442695
  %v1854 = vpow.pop %v1853
  %v1855 = vadd.f32 %v1792, %v1794
  %v1856 = vadd.f32 %v1855, %v1796
  %v1857 = vadd.f32 %v1856, %v1798
  %v1858 = vadd.f32 %v1857, %v1800
  %v1859 = vadd.f32 %v1858, %v1802
  %v1860 = vadd.f32 %v1859, %v1804
  %v1861 = vadd.f32 %v1860, %v1806
  %v1862 = vadd.f32 %v1861, %v1808
  %v1863 = vadd.f32 %v1862, %v1810
  %v1864 = vadd.f32 %v1863, %v1812
  %v1865 = vadd.f32 %v1864, %v1814
  %v1866 = vadd.f32 %v1865, %v1816
  %v1867 = vadd.f32 %v1866, %v1818
  %v1868 = vadd.f32 %v1867, %v1820
  %v1869 = vadd.f32 %v1868, %v1822
  %v1870 = vadd.f32 %v1869, %v1824
  %v1871 = vadd.f32 %v1870, %v1826
  %v1872 = vadd.f32 %v1871, %v1828
  %v1873 = vadd.f32 %v1872, %v1830
  %v1874 = vadd.f32 %v1873, %v1832
  %v1875 = vadd.f32 %v1874, %v1834
  %v1876 = vadd.f32 %v1875, %v1836
  %v1877 = vadd.f32 %v1876, %v1838
  %v1878 = vadd.f32 %v1877, %v1840
  %v1879 = vadd.f32 %v1878, %v1842
  %v1880 = vadd.f32 %v1879, %v1844
  %v1881 = vadd.f32 %v1880, %v1846
  %v1882 = vadd.f32 %v1881, %v1848
  %v1883 = vadd.f32 %v1882, %v1850
  %v1884 = vadd.f32 %v1883, %v1852
  %v1885 = vadd.f32 %v1884, %v1854
  %v1886 = vrot.slane %v1885, 4
  %v1887 = vadd.f32 %v1885, %v1886
  %v1888 = vrot.slane %v1887, 2
  %v1889 = vadd.f32 %v1887, %v1888
  %v1890 = vrot.slane %v1889, 1
  %v1891 = vadd.f32 %v1889, %v1890
  %v1892 = vadd.f32 %v1755, %v1891
  %1893 = vst [vmem:[#allocation4] sm:$0x1] %v1892
  %1894 = vst [vmem:[#allocation3] sm:$0x1] %v1750
  // Predicated region
  $region62: #{score_sbl_hmm.2} parent=0 // pred_check
    %p1895 = pneg %p50
  $region63: #{score_sbl_hmm.2} parent=0 // pred_check_branch
    %1897 = sbr.rel (%p1895) target = $region65
  $region64: #{score_sbl_hmm.2} parent=0 // pred_region
    %v1898 = vld [vmem:[#allocation3] sm:$0x1]
    %v1899 = vld [vmem:[#allocation4] sm:$0x1]
    %v1900 = vlog2.pop %v1899
    %v1901 = vmul.f32 %v1900, 0.6931472
    %v1902 = vadd.f32 %v1898, %v1901
    %v1903 = vmax.f32 %v1902, -1e+30
    %1904 = vst [vmem:[%s16] sm:$0x1] %v1903
  $region65: #{score_sbl_hmm.2} parent=0 // pred_fallthru
    _
  // Predicated region
  $region66: #{score_sbl_hmm.2} parent=0 // pred_check
    _
  $region67: #{score_sbl_hmm.2} parent=0 // pred_check_branch
    %1906 = sbr.rel (0) target = $region69
  $region68: #{score_sbl_hmm.2} parent=0 // pred_region
    _
  $region69: #{score_sbl_hmm.2} parent=0 // pred_fallthru
    _
  // Predicated region
  $region70: #{score_sbl_hmm.2} parent=0 // pred_check
    _
  $region71: #{score_sbl_hmm.2} parent=0 // pred_check_branch
    %1908 = sbr.rel (0) target = $region73
  $region72: #{score_sbl_hmm.2} parent=0 // pred_region
    _
  $region73: #{score_sbl_hmm.2} parent=0 // pred_fallthru
    _
  // Predicated region
  $region74: #{score_sbl_hmm.2} parent=0 // pred_check
    _
  $region75: #{score_sbl_hmm.2} parent=0 // pred_check_branch
    %1910 = sbr.rel (0) target = $region77
  $region76: #{score_sbl_hmm.2} parent=0 // pred_region
    _
  $region77: #{score_sbl_hmm.2} parent=0 // pred_fallthru
    _
  // Predicated region
  $region78: #{score_sbl_hmm.2} parent=0 // pred_check
    _
  $region79: #{score_sbl_hmm.2} parent=0 // pred_check_branch
    %1912 = sbr.rel (0) target = $region81
  $region80: #{score_sbl_hmm.2} parent=0 // pred_region
    _
  $region81: #{score_sbl_hmm.2} parent=0 // pred_fallthru
    _
  // Predicated region
  $region82: #{score_sbl_hmm.2} parent=0 // pred_check
    _
  $region83: #{score_sbl_hmm.2} parent=0 // pred_check_branch
    %1914 = sbr.rel (0) target = $region85
  $region84: #{score_sbl_hmm.2} parent=0 // pred_region
    _
  $region85: #{score_sbl_hmm.2} parent=0 // pred_fallthru
    _
  // Predicated region
  $region86: #{score_sbl_hmm.2} parent=0 // pred_check
    _
  $region87: #{score_sbl_hmm.2} parent=0 // pred_check_branch
    %1916 = sbr.rel (0) target = $region89
  $region88: #{score_sbl_hmm.2} parent=0 // pred_region
    _
  $region89: #{score_sbl_hmm.2} parent=0 // pred_fallthru
    _

</llo_original>
